<compile_context>
chip_gen: v7x
topology: tpu7x:2x2x1
jax: 0.10.0
libtpu: 0.0.40
codegen_flags: <defaults>
</compile_context>

<pallas_src>
import jax
import jax.numpy as jnp
from jax.experimental import pallas as pl
from jax.experimental.pallas import tpu as pltpu

H4P = 128  # layer-4 width 64 padded to 128 (full MXU lanes; padding is exact)


def _round_up(x, m):
    return ((x + m - 1) // m) * m


def _vmem_limit_bytes():
    """Generation-aware VMEM limit: ~3/4 of physical, capped at 96 MiB."""
    try:
        cap = int(pltpu.get_tpu_info().vmem_capacity_bytes)
    except Exception:
        cap = 64 * 1024 * 1024  # conservative fallback (v7x physical)
    return min(cap * 3 // 4, 96 * 1024 * 1024)


def mlp_kernel(x_ref,
               w1_ref, b1_ref,
               w2_ref, b2_ref,
               w3_ref, b3_ref,
               w4_ref, b4_ref,
               w5_ref, b5_ref,
               o_ref, acc_ref):
    """Fused 5-layer MLP with a K-tiled first layer.

    Grid is (batch_tiles, k_tiles); the K axis is innermost / 'arbitrary'.
    Matmul operands are bf16 (MXU-native); accumulation and bias/activation
    math are f32.  Dropout is identity at inference and omitted.
    """
    k = pl.program_id(1)

    @pl.when(k == 0)
    def _():
        acc_ref[...] = jnp.zeros_like(acc_ref)

    # Layer-1 partial product for this K tile.
    acc_ref[...] += jnp.dot(x_ref[...], w1_ref[...],
                            preferred_element_type=jnp.float32)

    @pl.when(k == pl.num_programs(1) - 1)
    def _():
        h = jnp.maximum(acc_ref[...] + b1_ref[...], 0.0).astype(jnp.bfloat16)

        h = jnp.dot(h, w2_ref[...], preferred_element_type=jnp.float32) + b2_ref[...]
        h = jnp.maximum(h, 0.0).astype(jnp.bfloat16)

        h = jnp.dot(h, w3_ref[...], preferred_element_type=jnp.float32) + b3_ref[...]
        h = jnp.maximum(h, 0.0).astype(jnp.bfloat16)

        h = jnp.dot(h, w4_ref[...], preferred_element_type=jnp.float32) + b4_ref[...]
        h = jnp.maximum(h, 0.0).astype(jnp.bfloat16)

        # Final 128 -> 1 layer: w5 stored as a (1, 128) row; lane reduce keeps
        # the output a single real column (no padded-lane writeback).
        prod = h.astype(jnp.float32) * w5_ref[...].astype(jnp.float32)
        logits = jnp.sum(prod, axis=-1, keepdims=True) + b5_ref[...]
        o_ref[...] = jax.nn.sigmoid(logits).astype(o_ref.dtype)


def prepare_params(params, *, tk=2048):
    """One-time weight prep: pad to TPU-friendly shapes and cast to bf16.

    Reuse the returned dict across forward calls so the pad/cast HBM pass is
    paid once, not per inference batch.  `tk` is the layer-1 K tile (multiple
    of 128; multiples of 512 recommended on v5e).
    """
    assert tk % 128 == 0
    input_dim = params["w1"].shape[0]
    Kp = _round_up(input_dim, 128)
    if Kp > tk:
        Kp = _round_up(Kp, tk)
        tk_eff = tk
    else:
        tk_eff = Kp  # single K step

    bf16 = lambda a: a.astype(jnp.bfloat16)
    f32 = lambda a: a.astype(jnp.float32)
    return {
        "input_dim": input_dim,
        "tk": tk_eff,
        "w1": bf16(jnp.pad(params["w1"], ((0, Kp - input_dim), (0, 0)))),
        "b1": f32(params["b1"]),
        "w2": bf16(params["w2"]), "b2": f32(params["b2"]),
        "w3": bf16(params["w3"]), "b3": f32(params["b3"]),
        "w4": bf16(jnp.pad(params["w4"], ((0, 0), (0, H4P - 64)))),
        "b4": f32(jnp.pad(params["b4"], ((0, 0), (0, H4P - 64)))),
        # (64, 1) -> padded (128, 1) -> stored transposed as a (1, 128) row.
        "w5": bf16(jnp.pad(params["w5"], ((0, H4P - 64), (0, 0))).reshape(1, H4P)),
        "b5": f32(params["b5"]),
    }


def email_classifier_forward(x, prep, *, tb=512):
    """x: (B, input_dim) float32; prep: output of prepare_params.

    Returns (B, 1) float32 probabilities.
    """
    B, input_dim = x.shape
    assert input_dim == prep["input_dim"]
    Kp = prep["w1"].shape[0]
    tk = prep["tk"]
    assert Kp % tk == 0

    tb = _round_up(max(8, min(tb, _round_up(B, 8))), 8)  # shrink for tiny batches
    Bp = _round_up(B, tb)

    # TODO(synk): ideally the feature producer emits bf16 already padded to Kp
    # so this extra HBM pass over x (cast + pad) disappears entirely.
    xp = jnp.pad(x.astype(jnp.bfloat16), ((0, Bp - B), (0, Kp - input_dim)))

    # Grid-invariant small weights/biases: whole-array, VMEM-resident.
    resident = pl.BlockSpec(memory_space=pltpu.MemorySpace.VMEM)

    grid = (Bp // tb, Kp // tk)  # K (reduction) axis innermost

    out = pl.pallas_call(
        mlp_kernel,
        out_shape=jax.ShapeDtypeStruct((Bp, 1), jnp.float32),
        grid_spec=pltpu.PrefetchScalarGridSpec(
            num_scalar_prefetch=0,
            grid=grid,
            in_specs=[
                pl.BlockSpec((tb, tk), lambda i, k: (i, k)),    # x: batch x K tiled
                pl.BlockSpec((tk, 512), lambda i, k: (k, 0)),   # w1: K-streamed
                resident,               # b1
                resident, resident,     # w2, b2
                resident, resident,     # w3, b3
                resident, resident,     # w4, b4
                resident, resident,     # w5 (1,128), b5 (1,1)
            ],
            out_specs=pl.BlockSpec((tb, 1), lambda i, k: (i, 0)),
            scratch_shapes=[pltpu.VMEM((tb, 512), jnp.float32)],  # layer-1 acc
        ),
        compiler_params=pltpu.CompilerParams(
            dimension_semantics=("parallel", "arbitrary"),
            vmem_limit_bytes=_vmem_limit_bytes(),
        ),
    )(xp, prep["w1"], prep["b1"], prep["w2"], prep["b2"],
      prep["w3"], prep["b3"], prep["w4"], prep["b4"],
      prep["w5"], prep["b5"])

    return out[:B]


def init_params(key, input_dim):
    """Deterministic init matching PyTorch Linear shapes (stored (in, out), f32)."""
    dims = [input_dim, 512, 256, 128, 64, 1]
    params = {}
    for li in range(5):
        fan_in, fan_out = dims[li], dims[li + 1]
        key, kw, kb = jax.random.split(key, 3)
        bound = 1.0 / jnp.sqrt(fan_in)
        params[f"w{li + 1}"] = jax.random.uniform(
            kw, (fan_in, fan_out), jnp.float32, -bound, bound)
        # biases kept 2-D (1, out) for TPU-friendly layout / broadcasting
        params[f"b{li + 1}"] = jax.random.uniform(
            kb, (1, fan_out), jnp.float32, -bound, bound)
    return params


def reference_forward(x, params):
    """Pure-JAX reference mimicking the kernel's bf16-operand / f32-accum math."""
    # TODO(synk): dropout (training mode) not modeled; inference-path only.
    h = x
    for li in range(1, 6):
        w = params[f"w{li}"].astype(jnp.bfloat16)
        h = jnp.dot(h.astype(jnp.bfloat16), w,
                    preferred_element_type=jnp.float32) + params[f"b{li}"]
        if li < 5:
            h = jnp.maximum(h, 0.0)
    return jax.nn.sigmoid(h)


if __name__ == "__main__":
    input_dim = 250   # Kp = 256
    batch = 500       # pads to 512

    key = jax.random.PRNGKey(0)
    key, kx = jax.random.split(key)
    x = jax.random.normal(kx, (batch, input_dim), dtype=jnp.float32)
    params = init_params(key, input_dim)

    # tk=128 exercises the K-tiled layer-1 reduction (2 K steps);
    # tb=256 gives 2 batch steps (both TensorCores on v7x).
    prep = prepare_params(params, tk=128)
    out = email_classifier_forward(x, prep, tb=256)
    out = jax.block_until_ready(out)

    ref = reference_forward(x, params)
    assert out.shape == (batch, 1)
    err = float(jnp.max(jnp.abs(out - ref)))
    assert jnp.allclose(out, ref, atol=1e-3, rtol=1e-3), err

    print("KERNEL_OK")
</pallas_src>

<mosaic_0001>
module attributes {stable_mosaic.version = 11 : i64} {
  func.func @mlp_kernel(%arg0: i32, %arg1: i32, %arg2: memref<256x128xbf16, #tpu.memory_space<vmem>>, %arg3: memref<128x512xbf16, #tpu.memory_space<vmem>>, %arg4: memref<1x512xf32, #tpu.memory_space<vmem>>, %arg5: memref<512x256xbf16, #tpu.memory_space<vmem>>, %arg6: memref<1x256xf32, #tpu.memory_space<vmem>>, %arg7: memref<256x128xbf16, #tpu.memory_space<vmem>>, %arg8: memref<1x128xf32, #tpu.memory_space<vmem>>, %arg9: memref<128x128xbf16, #tpu.memory_space<vmem>>, %arg10: memref<1x128xf32, #tpu.memory_space<vmem>>, %arg11: memref<1x128xbf16, #tpu.memory_space<vmem>>, %arg12: memref<1x1xf32, #tpu.memory_space<vmem>>, %arg13: memref<256x1xf32, #tpu.memory_space<vmem>>, %arg14: memref<256x512xf32, #tpu.memory_space<vmem>>) attributes {dimension_semantics = [#tpu.dimension_semantics<parallel>, #tpu.dimension_semantics<arbitrary>], iteration_bounds = array<i64: 2, 2>, scalar_prefetch = 0 : i64, scratch_operands = 1 : i64, tpu.core_type = #tpu.core_type<tc>, window_params = [{transform_indices = @transform_0, window_bounds = array<i64: 256, 128>}, {transform_indices = @transform_1, window_bounds = array<i64: 128, 512>}, {pipeline_mode = #tpu.pipeline_mode<synchronous>, transform_indices = @transform_2, window_bounds = array<i64: 1, 512>}, {pipeline_mode = #tpu.pipeline_mode<synchronous>, transform_indices = @transform_3, window_bounds = array<i64: 512, 256>}, {pipeline_mode = #tpu.pipeline_mode<synchronous>, transform_indices = @transform_4, window_bounds = array<i64: 1, 256>}, {pipeline_mode = #tpu.pipeline_mode<synchronous>, transform_indices = @transform_5, window_bounds = array<i64: 256, 128>}, {pipeline_mode = #tpu.pipeline_mode<synchronous>, transform_indices = @transform_6, window_bounds = array<i64: 1, 128>}, {pipeline_mode = #tpu.pipeline_mode<synchronous>, transform_indices = @transform_7, window_bounds = array<i64: 128, 128>}, {pipeline_mode = #tpu.pipeline_mode<synchronous>, transform_indices = @transform_8, window_bounds = array<i64: 1, 128>}, {pipeline_mode = #tpu.pipeline_mode<synchronous>, transform_indices = @transform_9, window_bounds = array<i64: 1, 128>}, {pipeline_mode = #tpu.pipeline_mode<synchronous>, transform_indices = @transform_10, window_bounds = array<i64: 1, 1>}, {transform_indices = @transform_11, window_bounds = array<i64: 256, 1>}]} {
    %c0_i32 = arith.constant 0 : i32
    %0 = arith.cmpi eq, %arg1, %c0_i32 : i32
    %1 = arith.extui %0 : i1 to i32
    %c0_i32_0 = arith.constant 0 : i32
    %2 = arith.cmpi ne, %1, %c0_i32_0 : i32
    scf.if %2 {
      %cst_9 = arith.constant 0.000000e+00 : f32
      %12 = vector.broadcast %cst_9 : f32 to vector<256x512xf32>
      %c0_10 = arith.constant 0 : index
      %c0_11 = arith.constant 0 : index
      %13 = vector.load %arg14[%c0_10, %c0_11] : memref<256x512xf32, #tpu.memory_space<vmem>>, vector<256x512xf32>
      tpu.vector_store %arg14[%c0_10, %c0_11], %12 {strides = array<i32>} : memref<256x512xf32, #tpu.memory_space<vmem>>, vector<256x512xf32>,
    } else {
    }
    %c0 = arith.constant 0 : index
    %c0_1 = arith.constant 0 : index
    %3 = vector.load %arg14[%c0, %c0_1] : memref<256x512xf32, #tpu.memory_space<vmem>>, vector<256x512xf32>
    %c0_2 = arith.constant 0 : index
    %c0_3 = arith.constant 0 : index
    %4 = vector.load %arg2[%c0_2, %c0_3] : memref<256x128xbf16, #tpu.memory_space<vmem>>, vector<256x128xbf16>
    %c0_4 = arith.constant 0 : index
    %c0_5 = arith.constant 0 : index
    %5 = vector.load %arg3[%c0_4, %c0_5] : memref<128x512xbf16, #tpu.memory_space<vmem>>, vector<128x512xbf16>
    %cst = arith.constant dense<0.000000e+00> : vector<256x512xf32>
    %6 = tpu.matmul %4, %5, %cst {dimension_numbers = #tpu.dot_dimension_numbers<[1], [0], [0], [1], [0, 0, 1, 1], [], []>} : vector<256x128xbf16>, vector<128x512xbf16>, vector<256x512xf32> -> vector<256x512xf32>
    %7 = arith.addf %3, %6 : vector<256x512xf32>
    %c0_6 = arith.constant 0 : index
    %c0_7 = arith.constant 0 : index
    %8 = vector.load %arg14[%c0_6, %c0_7] : memref<256x512xf32, #tpu.memory_space<vmem>>, vector<256x512xf32>
    tpu.vector_store %arg14[%c0_6, %c0_7], %7 {strides = array<i32>} : memref<256x512xf32, #tpu.memory_space<vmem>>, vector<256x512xf32>,
    %c1_i32 = arith.constant 1 : i32
    %9 = arith.cmpi eq, %arg1, %c1_i32 : i32
    %10 = arith.extui %9 : i1 to i32
    %c0_i32_8 = arith.constant 0 : i32
    %11 = arith.cmpi ne, %10, %c0_i32_8 : i32
    scf.if %11 {
      %c0_9 = arith.constant 0 : index
      %c0_10 = arith.constant 0 : index
      %12 = vector.load %arg14[%c0_9, %c0_10] : memref<256x512xf32, #tpu.memory_space<vmem>>, vector<256x512xf32>
      %c0_11 = arith.constant 0 : index
      %c0_12 = arith.constant 0 : index
      %13 = vector.load %arg4[%c0_11, %c0_12] : memref<1x512xf32, #tpu.memory_space<vmem>>, vector<1x512xf32>
      %14 = vector.broadcast %13 : vector<1x512xf32> to vector<256x512xf32>
      %15 = arith.addf %12, %14 : vector<256x512xf32>
      %cst_13 = arith.constant 0.000000e+00 : f32
      %16 = vector.broadcast %cst_13 : f32 to vector<256x512xf32>
      %17 = arith.maximumf %15, %16 : vector<256x512xf32>
      %18 = arith.truncf %17 : vector<256x512xf32> to vector<256x512xbf16>
      %c0_14 = arith.constant 0 : index
      %c0_15 = arith.constant 0 : index
      %19 = vector.load %arg5[%c0_14, %c0_15] : memref<512x256xbf16, #tpu.memory_space<vmem>>, vector<512x256xbf16>
      %cst_16 = arith.constant dense<0.000000e+00> : vector<256x256xf32>
      %20 = tpu.matmul %18, %19, %cst_16 {dimension_numbers = #tpu.dot_dimension_numbers<[1], [0], [0], [1], [0, 0, 1, 1], [], []>} : vector<256x512xbf16>, vector<512x256xbf16>, vector<256x256xf32> -> vector<256x256xf32>
      %c0_17 = arith.constant 0 : index
      %c0_18 = arith.constant 0 : index
      %21 = vector.load %arg6[%c0_17, %c0_18] : memref<1x256xf32, #tpu.memory_space<vmem>>, vector<1x256xf32>
      %22 = vector.broadcast %21 : vector<1x256xf32> to vector<256x256xf32>
      %23 = arith.addf %20, %22 : vector<256x256xf32>
      %cst_19 = arith.constant 0.000000e+00 : f32
      %24 = vector.broadcast %cst_19 : f32 to vector<256x256xf32>
      %25 = arith.maximumf %23, %24 : vector<256x256xf32>
      %26 = arith.truncf %25 : vector<256x256xf32> to vector<256x256xbf16>
      %c0_20 = arith.constant 0 : index
      %c0_21 = arith.constant 0 : index
      %27 = vector.load %arg7[%c0_20, %c0_21] : memref<256x128xbf16, #tpu.memory_space<vmem>>, vector<256x128xbf16>
      %cst_22 = arith.constant dense<0.000000e+00> : vector<256x128xf32>
      %28 = tpu.matmul %26, %27, %cst_22 {dimension_numbers = #tpu.dot_dimension_numbers<[1], [0], [0], [1], [0, 0, 1, 1], [], []>} : vector<256x256xbf16>, vector<256x128xbf16>, vector<256x128xf32> -> vector<256x128xf32>
      %c0_23 = arith.constant 0 : index
      %c0_24 = arith.constant 0 : index
      %29 = vector.load %arg8[%c0_23, %c0_24] : memref<1x128xf32, #tpu.memory_space<vmem>>, vector<1x128xf32>
      %30 = vector.broadcast %29 : vector<1x128xf32> to vector<256x128xf32>
      %31 = arith.addf %28, %30 : vector<256x128xf32>
      %cst_25 = arith.constant 0.000000e+00 : f32
      %32 = vector.broadcast %cst_25 : f32 to vector<256x128xf32>
      %33 = arith.maximumf %31, %32 : vector<256x128xf32>
      %34 = arith.truncf %33 : vector<256x128xf32> to vector<256x128xbf16>
      %c0_26 = arith.constant 0 : index
      %c0_27 = arith.constant 0 : index
      %35 = vector.load %arg9[%c0_26, %c0_27] : memref<128x128xbf16, #tpu.memory_space<vmem>>, vector<128x128xbf16>
      %cst_28 = arith.constant dense<0.000000e+00> : vector<256x128xf32>
      %36 = tpu.matmul %34, %35, %cst_28 {dimension_numbers = #tpu.dot_dimension_numbers<[1], [0], [0], [1], [0, 0, 1, 1], [], []>} : vector<256x128xbf16>, vector<128x128xbf16>, vector<256x128xf32> -> vector<256x128xf32>
      %c0_29 = arith.constant 0 : index
      %c0_30 = arith.constant 0 : index
      %37 = vector.load %arg10[%c0_29, %c0_30] : memref<1x128xf32, #tpu.memory_space<vmem>>, vector<1x128xf32>
      %38 = vector.broadcast %37 : vector<1x128xf32> to vector<256x128xf32>
      %39 = arith.addf %36, %38 : vector<256x128xf32>
      %cst_31 = arith.constant 0.000000e+00 : f32
      %40 = vector.broadcast %cst_31 : f32 to vector<256x128xf32>
      %41 = arith.maximumf %39, %40 : vector<256x128xf32>
      %42 = arith.truncf %41 : vector<256x128xf32> to vector<256x128xbf16>
      %43 = arith.extf %42 : vector<256x128xbf16> to vector<256x128xf32>
      %c0_32 = arith.constant 0 : index
      %c0_33 = arith.constant 0 : index
      %44 = vector.load %arg11[%c0_32, %c0_33] : memref<1x128xbf16, #tpu.memory_space<vmem>>, vector<1x128xbf16>
      %45 = arith.extf %44 : vector<1x128xbf16> to vector<1x128xf32>
      %46 = vector.broadcast %45 : vector<1x128xf32> to vector<256x128xf32>
      %47 = arith.mulf %43, %46 : vector<256x128xf32>
      %cst_34 = arith.constant dense<0.000000e+00> : vector<256xf32>
      %48 = vector.multi_reduction <add>, %47, %cst_34 [1] : vector<256x128xf32> to vector<256xf32>
      %49 = vector.shape_cast %48 : vector<256xf32> to vector<256x1xf32>
      %c0_35 = arith.constant 0 : index
      %c0_36 = arith.constant 0 : index
      %50 = vector.load %arg12[%c0_35, %c0_36] : memref<1x1xf32, #tpu.memory_space<vmem>>, vector<1x1xf32>
      %51 = vector.broadcast %50 : vector<1x1xf32> to vector<256x1xf32>
      %52 = arith.addf %49, %51 : vector<256x1xf32>
      %53 = arith.negf %52 : vector<256x1xf32>
      %54 = math.exp %53 : vector<256x1xf32>
      %cst_37 = arith.constant 1.000000e+00 : f32
      %55 = vector.broadcast %cst_37 : f32 to vector<256x1xf32>
      %56 = arith.addf %55, %54 : vector<256x1xf32>
      %57 = arith.divf %55, %56 : vector<256x1xf32>
      %c0_38 = arith.constant 0 : index
      %c0_39 = arith.constant 0 : index
      %58 = vector.load %arg13[%c0_38, %c0_39] : memref<256x1xf32, #tpu.memory_space<vmem>>, vector<256x1xf32>
      tpu.vector_store %arg13[%c0_38, %c0_39], %57 {strides = array<i32>} : memref<256x1xf32, #tpu.memory_space<vmem>>, vector<256x1xf32>,
    } else {
    }
    return
  }
  func.func @transform_0(%arg0: i32, %arg1: i32) -> (i32, i32) {
    %c0_i32 = arith.constant 0 : i32
    return %arg0, %arg1 : i32, i32
  }
  func.func @transform_1(%arg0: i32, %arg1: i32) -> (i32, i32) {
    %c0_i32 = arith.constant 0 : i32
    %c0_i32_0 = arith.constant 0 : i32
    return %arg1, %c0_i32 : i32, i32
  }
  func.func @transform_2(%arg0: i32, %arg1: i32) -> (i32, i32) {
    %c0_i32 = arith.constant 0 : i32
    %c0_i32_0 = arith.constant 0 : i32
    %c0_i32_1 = arith.constant 0 : i32
    return %c0_i32, %c0_i32_0 : i32, i32
  }
  func.func @transform_3(%arg0: i32, %arg1: i32) -> (i32, i32) {
    %c0_i32 = arith.constant 0 : i32
    %c0_i32_0 = arith.constant 0 : i32
    %c0_i32_1 = arith.constant 0 : i32
    return %c0_i32, %c0_i32_0 : i32, i32
  }
  func.func @transform_4(%arg0: i32, %arg1: i32) -> (i32, i32) {
    %c0_i32 = arith.constant 0 : i32
    %c0_i32_0 = arith.constant 0 : i32
    %c0_i32_1 = arith.constant 0 : i32
    return %c0_i32, %c0_i32_0 : i32, i32
  }
  func.func @transform_5(%arg0: i32, %arg1: i32) -> (i32, i32) {
    %c0_i32 = arith.constant 0 : i32
    %c0_i32_0 = arith.constant 0 : i32
    %c0_i32_1 = arith.constant 0 : i32
    return %c0_i32, %c0_i32_0 : i32, i32
  }
  func.func @transform_6(%arg0: i32, %arg1: i32) -> (i32, i32) {
    %c0_i32 = arith.constant 0 : i32
    %c0_i32_0 = arith.constant 0 : i32
    %c0_i32_1 = arith.constant 0 : i32
    return %c0_i32, %c0_i32_0 : i32, i32
  }
  func.func @transform_7(%arg0: i32, %arg1: i32) -> (i32, i32) {
    %c0_i32 = arith.constant 0 : i32
    %c0_i32_0 = arith.constant 0 : i32
    %c0_i32_1 = arith.constant 0 : i32
    return %c0_i32, %c0_i32_0 : i32, i32
  }
  func.func @transform_8(%arg0: i32, %arg1: i32) -> (i32, i32) {
    %c0_i32 = arith.constant 0 : i32
    %c0_i32_0 = arith.constant 0 : i32
    %c0_i32_1 = arith.constant 0 : i32
    return %c0_i32, %c0_i32_0 : i32, i32
  }
  func.func @transform_9(%arg0: i32, %arg1: i32) -> (i32, i32) {
    %c0_i32 = arith.constant 0 : i32
    %c0_i32_0 = arith.constant 0 : i32
    %c0_i32_1 = arith.constant 0 : i32
    return %c0_i32, %c0_i32_0 : i32, i32
  }
  func.func @transform_10(%arg0: i32, %arg1: i32) -> (i32, i32) {
    %c0_i32 = arith.constant 0 : i32
    %c0_i32_0 = arith.constant 0 : i32
    %c0_i32_1 = arith.constant 0 : i32
    return %c0_i32, %c0_i32_0 : i32, i32
  }
  func.func @transform_11(%arg0: i32, %arg1: i32) -> (i32, i32) {
    %c0_i32 = arith.constant 0 : i32
    %c0_i32_0 = arith.constant 0 : i32
    return %arg0, %c0_i32 : i32, i32
  }
}

</mosaic_0001>

<llo_original>
// kernel: tpu_custom_call.1
$region0: #{tpu_custom_call.1}
  #allocation0 [shape = 'u32[]', space=smem, size = 0x4, offset = 0x4, fixed_abs, tag = 'smem constant byte address 0x4 - core index']
  #allocation1 [shape = 'u32[144,128]{1,0:T(1,128)}', space=vmem, size = 0x12000, scoped, tag = 'internal scratch']
  #allocation2 [shape = 'f32[256,512]{1,0:T(8,128)}', space=vmem, size = 0x80000, scoped, tag = 'scratch operand']
  #allocation3 [shape = 'f32[1,1]{1,0:T(1,128)S(1)}', space=vmem, size = 0x200, scoped, tag = 'scoped memory for tpu_custom_call.1']
  %s0 = inlined_call_operand.hbm [shape: bf16[512,256], index: 0, kind: input, shape index: {}]
  %s1 = inlined_call_operand.hbm [shape: bf16[256,512], index: 1, kind: input, shape index: {}]
  %s2 = inlined_call_operand.vmem [shape: f32[1,512], index: 2, kind: input, shape index: {}]
  %s3 = inlined_call_operand.hbm [shape: bf16[512,256], index: 3, kind: input, shape index: {}]
  %s4 = inlined_call_operand.vmem [shape: f32[1,256], index: 4, kind: input, shape index: {}]
  %s5 = inlined_call_operand.hbm [shape: bf16[256,128], index: 5, kind: input, shape index: {}]
  %s6 = inlined_call_operand.vmem [shape: f32[1,128], index: 6, kind: input, shape index: {}]
  %s7 = inlined_call_operand.hbm [shape: bf16[128,128], index: 7, kind: input, shape index: {}]
  %s8 = inlined_call_operand.vmem [shape: f32[1,128], index: 8, kind: input, shape index: {}]
  %s9 = inlined_call_operand.vmem [shape: bf16[1,128], index: 9, kind: input, shape index: {}]
  %s10 = inlined_call_operand.<no memory space> [shape: f32[1,1], index: 10, kind: input, shape index: {}]
  %s11 = inlined_call_operand.vmem [shape: f32[512,1], index: 11, kind: output, shape index: {}]
  %s12 = sld [smem:[#allocation0]]
  $region105: #{tpu_custom_call.1} parent=0
    _
  %s14 = ssub.s32 1, %s12
  %s15 = scalar_select 0, %s14, %s12
  %v16 = vstv %s10
  %17 = vst [vmem:[#allocation3] sm:$0x1] %v16
  $region1: #{tpu_custom_call.1} parent=0
    #allocation4 [shape = 'u8[131072]{0}', space=vmem, size = 0x20000, scoped, tag = 'input window, operand 0']
    #allocation5 [shape = 's32[2]{0}', space=sflag, size = 0x8, scoped, tag = 'scoped memory for tpu_custom_call.1']
    #allocation6 [shape = 'u8[262144]{0}', space=vmem, size = 0x40000, scoped, tag = 'input window, operand 1']
    #allocation7 [shape = 's32[2]{0}', space=sflag, size = 0x8, scoped, tag = 'scoped memory for tpu_custom_call.1']
    #allocation8 [shape = 'u8[262144]{0}', space=vmem, size = 0x40000, scoped, tag = 'input window, operand 3, single buffered']
    #allocation9 [shape = 'u8[65536]{0}', space=vmem, size = 0x10000, scoped, tag = 'input window, operand 5, single buffered']
    #allocation10 [shape = 's32[1]{0}', space=sflag, size = 0x4, scoped, tag = 'scoped memory for tpu_custom_call.1']
    #allocation11 [shape = 'u8[32768]{0}', space=vmem, size = 0x8000, scoped, tag = 'input window, operand 7, single buffered']
    %18 = vsyncpa [#allocation5], 0
    %s19 = scalar_lea.sflag [#allocation5], 1
    %20 = vsyncpa %s19, 0
    %21 = vsyncpa [#allocation7], 0
    %s22 = scalar_lea.sflag [#allocation7], 1
    %23 = vsyncpa %s22, 0
    %24 = vsyncpa [#allocation10], 0
    loop: start=0, step=1, limit=6
    $region2: #{tpu_custom_call.1} parent=1 // loop_pre_header
      _
    $region3: #{tpu_custom_call.1} parent=1 // loop_header
      %s26 = sphi 0, %s30
      %p27 = scmp.ge.s32.totalorder %s26, 6
      %s33 = sphi 0, %s45
      %s34 = sphi 0, %s41
      %s35 = sphi 0, %s33
      %s36 = sphi 0, %s34
      %s37 = sphi 0, %s35
      %s38 = sphi 0, %s36
      %s50 = sphi 0, %s52
      %s53 = sphi 0, %s50
      %s54 = sphi 0, %s53
      %s70 = sphi 0, %s54
      %s76 = sphi 0, %s78
      %s79 = sphi 0, %s76
      %s80 = sphi 0, %s79
      %s96 = sphi 0, %s80
      %s100 = sphi 0, %s100
      %s102 = sphi 0, %s100
      %s103 = sphi 0, %s102
      %s117 = sphi 0, %s103
      %s121 = sphi 0, %s121
      %s123 = sphi 0, %s121
      %s124 = sphi 0, %s123
      %s138 = sphi 0, %s124
      %s142 = sphi 0, %s142
      %s144 = sphi 0, %s142
      %s145 = sphi 0, %s144
      %s159 = sphi 0, %s145
      %s163 = sphi 0, %s163
      %s165 = sphi 0, %s163
      %s166 = sphi 0, %s165
      %s180 = sphi 0, %s166
      %s184 = sphi 0, %s184
      %s186 = sphi 0, %s184
      %s187 = sphi 0, %s186
      %s201 = sphi 0, %s187
      %s205 = sphi 0, %s205
      %s207 = sphi 0, %s205
      %s208 = sphi 0, %s207
      %s222 = sphi 0, %s208
      %s226 = sphi 0, %s226
      %s228 = sphi 0, %s226
      %s229 = sphi 0, %s228
      %s243 = sphi 0, %s229
      %s247 = sphi 0, %s247
      %s249 = sphi 0, %s247
      %s250 = sphi 0, %s249
      %s264 = sphi 0, %s250
      %s268 = sphi 0, %s268
      %s270 = sphi 0, %s268
      %s271 = sphi 0, %s270
      %s285 = sphi 0, %s271
      %s291 = sphi 0, %s293
      %s294 = sphi 0, %s291
      %s295 = sphi 0, %s294
      %s311 = sphi 0, %s295
    $region4: #{tpu_custom_call.1} parent=1 // loop_header_branch
      %29 = sbr.rel (%p27) target = $region8
    $region5: #{tpu_custom_call.1} parent=1 // loop_body
      %s31 = ssub.s32 %s26, 1
      %s32 = ssub.s32 %s26, 2
      %s39 = sadd.s32 1, %s34
      %p40 = scmp.ge.s32.totalorder %s39, 2
      %s41 = scalar_select %p40, 0, %s39
      %s42 = sadd.s32 1, %s33
      %s43 = scalar_select %p40, %s42, %s33
      %p44 = scmp.ge.s32.totalorder %s43, 2
      %s45 = scalar_select %p44, 0, %s43
      %s46 = ssub.s32 %s33, %s45
      %s47 = ssub.s32 %s34, %s41
      %s48 = sor.u32 %s46, %s47
      %p49 = scmp.eq.s32.totalorder %s48, 0
      %s51 = sadd.s32 %s50, 1
      %s52 = scalar_select %p49, %s50, %s51
      %p55 = pneg %p49
      %p56 = scmp.eq.s32.totalorder %s26, 3
      %p57 = por %p55, %p56
      %p58 = scmp.ne.s32.totalorder %s50, %s53
      %p59 = scmp.eq.s32.totalorder %s26, 0
      %p60 = por %p58, %p59
      %p61 = scmp.ne.s32.totalorder %s50, %s53
      %p62 = scmp.eq.s32.totalorder %s31, 3
      %p63 = por %p61, %p62
      %p64 = scmp.ne.s32.totalorder %s53, %s54
      %p65 = scmp.eq.s32.totalorder %s31, 0
      %p66 = por %p64, %p65
      %p67 = scmp.ne.s32.totalorder %s53, %s54
      %p68 = scmp.eq.s32.totalorder %s32, 3
      %p69 = por %p67, %p68
      %p71 = scmp.ne.s32.totalorder %s54, %s70
      %p72 = scmp.eq.s32.totalorder %s32, 0
      %p73 = por %p71, %p72
      %s74 = ssub.s32 %s34, %s41
      %p75 = scmp.eq.s32.totalorder %s74, 0
      %s77 = sadd.s32 %s76, 1
      %s78 = scalar_select %p75, %s76, %s77
      %p81 = pneg %p75
      %p82 = scmp.eq.s32.totalorder %s26, 3
      %p83 = por %p81, %p82
      %p84 = scmp.ne.s32.totalorder %s76, %s79
      %p85 = scmp.eq.s32.totalorder %s26, 0
      %p86 = por %p84, %p85
      %p87 = scmp.ne.s32.totalorder %s76, %s79
      %p88 = scmp.eq.s32.totalorder %s31, 3
      %p89 = por %p87, %p88
      %p90 = scmp.ne.s32.totalorder %s79, %s80
      %p91 = scmp.eq.s32.totalorder %s31, 0
      %p92 = por %p90, %p91
      %p93 = scmp.ne.s32.totalorder %s79, %s80
      %p94 = scmp.eq.s32.totalorder %s32, 3
      %p95 = por %p93, %p94
      %p97 = scmp.ne.s32.totalorder %s80, %s96
      %p98 = scmp.eq.s32.totalorder %s32, 0
      %p99 = por %p97, %p98
      %s101 = sadd.s32 %s100, 1
      %p104 = scmp.eq.s32.totalorder %s26, 3
      %p105 = scmp.ne.s32.totalorder %s100, %s102
      %p106 = scmp.eq.s32.totalorder %s26, 0
      %p107 = por %p105, %p106
      %p108 = scmp.ne.s32.totalorder %s100, %s102
      %p109 = scmp.eq.s32.totalorder %s31, 3
      %p110 = por %p108, %p109
      %p111 = scmp.ne.s32.totalorder %s102, %s103
      %p112 = scmp.eq.s32.totalorder %s31, 0
      %p113 = por %p111, %p112
      %p114 = scmp.ne.s32.totalorder %s102, %s103
      %p115 = scmp.eq.s32.totalorder %s32, 3
      %p116 = por %p114, %p115
      %p118 = scmp.ne.s32.totalorder %s103, %s117
      %p119 = scmp.eq.s32.totalorder %s32, 0
      %p120 = por %p118, %p119
      %s122 = sadd.s32 %s121, 1
      %p125 = scmp.eq.s32.totalorder %s26, 3
      %p126 = scmp.ne.s32.totalorder %s121, %s123
      %p127 = scmp.eq.s32.totalorder %s26, 0
      %p128 = por %p126, %p127
      %p129 = scmp.ne.s32.totalorder %s121, %s123
      %p130 = scmp.eq.s32.totalorder %s31, 3
      %p131 = por %p129, %p130
      %p132 = scmp.ne.s32.totalorder %s123, %s124
      %p133 = scmp.eq.s32.totalorder %s31, 0
      %p134 = por %p132, %p133
      %p135 = scmp.ne.s32.totalorder %s123, %s124
      %p136 = scmp.eq.s32.totalorder %s32, 3
      %p137 = por %p135, %p136
      %p139 = scmp.ne.s32.totalorder %s124, %s138
      %p140 = scmp.eq.s32.totalorder %s32, 0
      %p141 = por %p139, %p140
      %s143 = sadd.s32 %s142, 1
      %p146 = scmp.eq.s32.totalorder %s26, 3
      %p147 = scmp.ne.s32.totalorder %s142, %s144
      %p148 = scmp.eq.s32.totalorder %s26, 0
      %p149 = por %p147, %p148
      %p150 = scmp.ne.s32.totalorder %s142, %s144
      %p151 = scmp.eq.s32.totalorder %s31, 3
      %p152 = por %p150, %p151
      %p153 = scmp.ne.s32.totalorder %s144, %s145
      %p154 = scmp.eq.s32.totalorder %s31, 0
      %p155 = por %p153, %p154
      %p156 = scmp.ne.s32.totalorder %s144, %s145
      %p157 = scmp.eq.s32.totalorder %s32, 3
      %p158 = por %p156, %p157
      %p160 = scmp.ne.s32.totalorder %s145, %s159
      %p161 = scmp.eq.s32.totalorder %s32, 0
      %p162 = por %p160, %p161
      %s164 = sadd.s32 %s163, 1
      %p167 = scmp.eq.s32.totalorder %s26, 3
      %p168 = scmp.ne.s32.totalorder %s163, %s165
      %p169 = scmp.eq.s32.totalorder %s26, 0
      %p170 = por %p168, %p169
      %p171 = scmp.ne.s32.totalorder %s163, %s165
      %p172 = scmp.eq.s32.totalorder %s31, 3
      %p173 = por %p171, %p172
      %p174 = scmp.ne.s32.totalorder %s165, %s166
      %p175 = scmp.eq.s32.totalorder %s31, 0
      %p176 = por %p174, %p175
      %p177 = scmp.ne.s32.totalorder %s165, %s166
      %p178 = scmp.eq.s32.totalorder %s32, 3
      %p179 = por %p177, %p178
      %p181 = scmp.ne.s32.totalorder %s166, %s180
      %p182 = scmp.eq.s32.totalorder %s32, 0
      %p183 = por %p181, %p182
      %s185 = sadd.s32 %s184, 1
      %p188 = scmp.eq.s32.totalorder %s26, 3
      %p189 = scmp.ne.s32.totalorder %s184, %s186
      %p190 = scmp.eq.s32.totalorder %s26, 0
      %p191 = por %p189, %p190
      %p192 = scmp.ne.s32.totalorder %s184, %s186
      %p193 = scmp.eq.s32.totalorder %s31, 3
      %p194 = por %p192, %p193
      %p195 = scmp.ne.s32.totalorder %s186, %s187
      %p196 = scmp.eq.s32.totalorder %s31, 0
      %p197 = por %p195, %p196
      %p198 = scmp.ne.s32.totalorder %s186, %s187
      %p199 = scmp.eq.s32.totalorder %s32, 3
      %p200 = por %p198, %p199
      %p202 = scmp.ne.s32.totalorder %s187, %s201
      %p203 = scmp.eq.s32.totalorder %s32, 0
      %p204 = por %p202, %p203
      %s206 = sadd.s32 %s205, 1
      %p209 = scmp.eq.s32.totalorder %s26, 3
      %p210 = scmp.ne.s32.totalorder %s205, %s207
      %p211 = scmp.eq.s32.totalorder %s26, 0
      %p212 = por %p210, %p211
      %p213 = scmp.ne.s32.totalorder %s205, %s207
      %p214 = scmp.eq.s32.totalorder %s31, 3
      %p215 = por %p213, %p214
      %p216 = scmp.ne.s32.totalorder %s207, %s208
      %p217 = scmp.eq.s32.totalorder %s31, 0
      %p218 = por %p216, %p217
      %p219 = scmp.ne.s32.totalorder %s207, %s208
      %p220 = scmp.eq.s32.totalorder %s32, 3
      %p221 = por %p219, %p220
      %p223 = scmp.ne.s32.totalorder %s208, %s222
      %p224 = scmp.eq.s32.totalorder %s32, 0
      %p225 = por %p223, %p224
      %s227 = sadd.s32 %s226, 1
      %p230 = scmp.eq.s32.totalorder %s26, 3
      %p231 = scmp.ne.s32.totalorder %s226, %s228
      %p232 = scmp.eq.s32.totalorder %s26, 0
      %p233 = por %p231, %p232
      %p234 = scmp.ne.s32.totalorder %s226, %s228
      %p235 = scmp.eq.s32.totalorder %s31, 3
      %p236 = por %p234, %p235
      %p237 = scmp.ne.s32.totalorder %s228, %s229
      %p238 = scmp.eq.s32.totalorder %s31, 0
      %p239 = por %p237, %p238
      %p240 = scmp.ne.s32.totalorder %s228, %s229
      %p241 = scmp.eq.s32.totalorder %s32, 3
      %p242 = por %p240, %p241
      %p244 = scmp.ne.s32.totalorder %s229, %s243
      %p245 = scmp.eq.s32.totalorder %s32, 0
      %p246 = por %p244, %p245
      %s248 = sadd.s32 %s247, 1
      %p251 = scmp.eq.s32.totalorder %s26, 3
      %p252 = scmp.ne.s32.totalorder %s247, %s249
      %p253 = scmp.eq.s32.totalorder %s26, 0
      %p254 = por %p252, %p253
      %p255 = scmp.ne.s32.totalorder %s247, %s249
      %p256 = scmp.eq.s32.totalorder %s31, 3
      %p257 = por %p255, %p256
      %p258 = scmp.ne.s32.totalorder %s249, %s250
      %p259 = scmp.eq.s32.totalorder %s31, 0
      %p260 = por %p258, %p259
      %p261 = scmp.ne.s32.totalorder %s249, %s250
      %p262 = scmp.eq.s32.totalorder %s32, 3
      %p263 = por %p261, %p262
      %p265 = scmp.ne.s32.totalorder %s250, %s264
      %p266 = scmp.eq.s32.totalorder %s32, 0
      %p267 = por %p265, %p266
      %s269 = sadd.s32 %s268, 1
      %p272 = scmp.eq.s32.totalorder %s26, 3
      %p273 = scmp.ne.s32.totalorder %s268, %s270
      %p274 = scmp.eq.s32.totalorder %s26, 0
      %p275 = por %p273, %p274
      %p276 = scmp.ne.s32.totalorder %s268, %s270
      %p277 = scmp.eq.s32.totalorder %s31, 3
      %p278 = por %p276, %p277
      %p279 = scmp.ne.s32.totalorder %s270, %s271
      %p280 = scmp.eq.s32.totalorder %s31, 0
      %p281 = por %p279, %p280
      %p282 = scmp.ne.s32.totalorder %s270, %s271
      %p283 = scmp.eq.s32.totalorder %s32, 3
      %p284 = por %p282, %p283
      %p286 = scmp.ne.s32.totalorder %s271, %s285
      %p287 = scmp.eq.s32.totalorder %s32, 0
      %p288 = por %p286, %p287
      %s289 = ssub.s32 %s33, %s45
      %p290 = scmp.eq.s32.totalorder %s289, 0
      %s292 = sadd.s32 %s291, 1
      %s293 = scalar_select %p290, %s291, %s292
      %p296 = pneg %p290
      %p297 = scmp.eq.s32.totalorder %s26, 3
      %p298 = por %p296, %p297
      %p299 = scmp.ne.s32.totalorder %s291, %s294
      %p300 = scmp.eq.s32.totalorder %s26, 0
      %p301 = por %p299, %p300
      %p302 = scmp.ne.s32.totalorder %s291, %s294
      %p303 = scmp.eq.s32.totalorder %s31, 3
      %p304 = por %p302, %p303
      %p305 = scmp.ne.s32.totalorder %s294, %s295
      %p306 = scmp.eq.s32.totalorder %s31, 0
      %p307 = por %p305, %p306
      %p308 = scmp.ne.s32.totalorder %s294, %s295
      %p309 = scmp.eq.s32.totalorder %s32, 3
      %p310 = por %p308, %p309
      %p312 = scmp.ne.s32.totalorder %s295, %s311
      %p313 = scmp.eq.s32.totalorder %s32, 0
      %p314 = por %p312, %p313
      %p315 = scmp.le.s32.totalorder 1, %s26
      %p316 = scmp.lt.s32.totalorder %s26, 5
      %p317 = pnand %p315, %p316
      %p318 = pneg %p317
      // Predicated region
      $region9: #{tpu_custom_call.1} parent=5 // pred_check
        _
      $region10: #{tpu_custom_call.1} parent=5 // pred_check_branch
        %320 = sbr.rel (%p317) target = $region12
      $region11: #{tpu_custom_call.1} parent=5 // pred_region
        %s321 = ssub.s32 %s26, 1
        // Predicated region
        $region13: #{tpu_custom_call.1} parent=11 // pred_check
          %p322 = pneg %p113
        $region14: #{tpu_custom_call.1} parent=11 // pred_check_branch
          %324 = sbr.rel (%p322) target = $region16
        $region15: #{tpu_custom_call.1} parent=11 // pred_region
          _
        $region16: #{tpu_custom_call.1} parent=11 // pred_fallthru
          _
        // Predicated region
        $region17: #{tpu_custom_call.1} parent=11 // pred_check
          %p325 = pneg %p134
        $region18: #{tpu_custom_call.1} parent=11 // pred_check_branch
          %327 = sbr.rel (%p325) target = $region20
        $region19: #{tpu_custom_call.1} parent=11 // pred_region
          %s329 = ssub.s32 8192, 8192
          %330 = vsyncadd [#allocation7], %s329
          %s331 = sshll.u32 [#allocation8], 4
          %s332 = int_to_ptr.vmem [resolvable:$true] %s331
          %337 = dma.hbm_to_vmem [thread:$0]  %s3, 8192, %s332, [#allocation7], 128, 128, 8
        $region20: #{tpu_custom_call.1} parent=11 // pred_fallthru
          _
        // Predicated region
        $region21: #{tpu_custom_call.1} parent=11 // pred_check
          %p338 = pneg %p155
        $region22: #{tpu_custom_call.1} parent=11 // pred_check_branch
          %340 = sbr.rel (%p338) target = $region24
        $region23: #{tpu_custom_call.1} parent=11 // pred_region
          _
        $region24: #{tpu_custom_call.1} parent=11 // pred_fallthru
          _
        // Predicated region
        $region25: #{tpu_custom_call.1} parent=11 // pred_check
          %p341 = pneg %p176
        $region26: #{tpu_custom_call.1} parent=11 // pred_check_branch
          %343 = sbr.rel (%p341) target = $region28
        $region27: #{tpu_custom_call.1} parent=11 // pred_region
          %s345 = ssub.s32 2048, 2048
          %346 = vsyncadd [#allocation10], %s345
          %s347 = sshll.u32 [#allocation9], 4
          %s348 = int_to_ptr.vmem [resolvable:$true] %s347
          %353 = dma.hbm_to_vmem [thread:$0]  %s5, 2048, %s348, [#allocation10], 64, 64, 4
        $region28: #{tpu_custom_call.1} parent=11 // pred_fallthru
          _
        // Predicated region
        $region29: #{tpu_custom_call.1} parent=11 // pred_check
          %p354 = pneg %p197
        $region30: #{tpu_custom_call.1} parent=11 // pred_check_branch
          %356 = sbr.rel (%p354) target = $region32
        $region31: #{tpu_custom_call.1} parent=11 // pred_region
          _
        $region32: #{tpu_custom_call.1} parent=11 // pred_fallthru
          _
        // Predicated region
        $region33: #{tpu_custom_call.1} parent=11 // pred_check
          %p357 = pneg %p218
        $region34: #{tpu_custom_call.1} parent=11 // pred_check_branch
          %359 = sbr.rel (%p357) target = $region36
        $region35: #{tpu_custom_call.1} parent=11 // pred_region
          %s361 = ssub.s32 1024, 1024
          %362 = vsyncadd [#allocation10], %s361
          %s363 = sshll.u32 [#allocation11], 4
          %s364 = int_to_ptr.vmem [resolvable:$true] %s363
          %369 = dma.hbm_to_vmem [thread:$0]  %s7, 1024, %s364, [#allocation10], 64, 64, 4
        $region36: #{tpu_custom_call.1} parent=11 // pred_fallthru
          _
        // Predicated region
        $region37: #{tpu_custom_call.1} parent=11 // pred_check
          %p370 = pneg %p239
        $region38: #{tpu_custom_call.1} parent=11 // pred_check_branch
          %372 = sbr.rel (%p370) target = $region40
        $region39: #{tpu_custom_call.1} parent=11 // pred_region
          _
        $region40: #{tpu_custom_call.1} parent=11 // pred_fallthru
          _
        // Predicated region
        $region41: #{tpu_custom_call.1} parent=11 // pred_check
          %p373 = pneg %p260
        $region42: #{tpu_custom_call.1} parent=11 // pred_check_branch
          %375 = sbr.rel (%p373) target = $region44
        $region43: #{tpu_custom_call.1} parent=11 // pred_region
          _
        $region44: #{tpu_custom_call.1} parent=11 // pred_fallthru
          _
        // Predicated region
        $region45: #{tpu_custom_call.1} parent=11 // pred_check
          %p376 = pneg %p281
        $region46: #{tpu_custom_call.1} parent=11 // pred_check_branch
          %378 = sbr.rel (%p376) target = $region48
        $region47: #{tpu_custom_call.1} parent=11 // pred_region
          _
        $region48: #{tpu_custom_call.1} parent=11 // pred_fallthru
          _
      $region12: #{tpu_custom_call.1} parent=5 // pred_fallthru
        _
      %p379 = scmp.lt.s32.totalorder %s26, 4
      // Predicated region
      $region49: #{tpu_custom_call.1} parent=5 // pred_check
        %p380 = pneg %p379
      $region50: #{tpu_custom_call.1} parent=5 // pred_check_branch
        %382 = sbr.rel (%p380) target = $region52
      $region51: #{tpu_custom_call.1} parent=5 // pred_region
        // Predicated region
        $region53: #{tpu_custom_call.1} parent=51 // pred_check
          %p383 = pneg %p60
        $region54: #{tpu_custom_call.1} parent=51 // pred_check_branch
          %385 = sbr.rel (%p383) target = $region56
        $region55: #{tpu_custom_call.1} parent=51 // pred_region
          %s386 = sand.u32 %s50, 1
          %s387 = scalar_lea.sflag [#allocation5], %s386
          %s388 = sand.u32 %s50, 1
          %s389 = smul.addr %s388, 128
          %s390 = scalar_lea.vmem [#allocation4], %s389
          %s391 = smul.u32 32, %s33
          %s393 = ssub.s32 2048, 2048
          %394 = vsyncadd %s387, %s393
          %s395 = smul.addr %s391, 2
          %s396 = sadd.s32 %s34, %s395
          %s397 = smul.addr %s396, 64
          %s398 = scalar_lea.hbm %s0, %s397
          %s399 = sshll.u32 %s390, 4
          %s400 = int_to_ptr.vmem [resolvable:$true] %s399
          %405 = dma.hbm_to_vmem [thread:$0]  %s398, 2048, %s400, %s387, 128, 64, 4
        $region56: #{tpu_custom_call.1} parent=51 // pred_fallthru
          _
        // Predicated region
        $region57: #{tpu_custom_call.1} parent=51 // pred_check
          %p406 = pneg %p86
        $region58: #{tpu_custom_call.1} parent=51 // pred_check_branch
          %408 = sbr.rel (%p406) target = $region60
        $region59: #{tpu_custom_call.1} parent=51 // pred_region
          %s409 = sand.u32 %s26, 1
          %s410 = scalar_lea.sflag [#allocation7], %s409
          %s411 = sand.u32 %s76, 1
          %s412 = smul.addr %s411, 256
          %s413 = scalar_lea.vmem [#allocation6], %s412
          %s414 = smul.u32 16, %s34
          %s416 = ssub.s32 4096, 4096
          %417 = vsyncadd %s410, %s416
          %s418 = smul.addr %s414, 4
          %s419 = smul.addr %s418, 64
          %s420 = scalar_lea.hbm %s1, %s419
          %s421 = sshll.u32 %s413, 4
          %s422 = int_to_ptr.vmem [resolvable:$true] %s421
          %427 = dma.hbm_to_vmem [thread:$0]  %s420, 4096, %s422, %s410, 256, 256, 16
        $region60: #{tpu_custom_call.1} parent=51 // pred_fallthru
          _
      $region52: #{tpu_custom_call.1} parent=5 // pred_fallthru
        _
      %p428 = scmp.le.s32.totalorder 1, %s26
      %p429 = scmp.lt.s32.totalorder %s26, 5
      %p430 = pnand %p428, %p429
      %p431 = pneg %p430
      // Predicated region
      $region61: #{tpu_custom_call.1} parent=5 // pred_check
        _
      $region62: #{tpu_custom_call.1} parent=5 // pred_check_branch
        %433 = sbr.rel (%p430) target = $region64
      $region63: #{tpu_custom_call.1} parent=5 // pred_region
        %s434 = ssub.s32 %s26, 1
        %s435 = sand.u32 %s53, 1
        %s436 = scalar_lea.sflag [#allocation5], %s435
        %s437 = sand.u32 %s53, 1
        %s438 = smul.addr %s437, 128
        %s439 = scalar_lea.vmem [#allocation4], %s438
        // Predicated region
        $region65: #{tpu_custom_call.1} parent=63 // pred_check
          %p440 = pneg %p66
        $region66: #{tpu_custom_call.1} parent=63 // pred_check_branch
          %442 = sbr.rel (%p440) target = $region68
        $region67: #{tpu_custom_call.1} parent=63 // pred_region
          %443 = dma.done %s436, 2048
        $region68: #{tpu_custom_call.1} parent=63 // pred_fallthru
          _
        %s444 = sand.u32 %s31, 1
        %s445 = scalar_lea.sflag [#allocation7], %s444
        %s446 = sand.u32 %s79, 1
        %s447 = smul.addr %s446, 256
        %s448 = scalar_lea.vmem [#allocation6], %s447
        // Predicated region
        $region69: #{tpu_custom_call.1} parent=63 // pred_check
          %p449 = pneg %p92
        $region70: #{tpu_custom_call.1} parent=63 // pred_check_branch
          %451 = sbr.rel (%p449) target = $region72
        $region71: #{tpu_custom_call.1} parent=63 // pred_region
          %452 = dma.done %s445, 4096
        $region72: #{tpu_custom_call.1} parent=63 // pred_fallthru
          _
        // Predicated region
        $region73: #{tpu_custom_call.1} parent=63 // pred_check
          %p453 = pneg %p134
        $region74: #{tpu_custom_call.1} parent=63 // pred_check_branch
          %455 = sbr.rel (%p453) target = $region76
        $region75: #{tpu_custom_call.1} parent=63 // pred_region
          %456 = dma.done [#allocation7], 8192
        $region76: #{tpu_custom_call.1} parent=63 // pred_fallthru
          _
        // Predicated region
        $region77: #{tpu_custom_call.1} parent=63 // pred_check
          %p457 = pneg %p176
        $region78: #{tpu_custom_call.1} parent=63 // pred_check_branch
          %459 = sbr.rel (%p457) target = $region80
        $region79: #{tpu_custom_call.1} parent=63 // pred_region
          %460 = dma.done [#allocation10], 2048
        $region80: #{tpu_custom_call.1} parent=63 // pred_fallthru
          _
        // Predicated region
        $region81: #{tpu_custom_call.1} parent=63 // pred_check
          %p461 = pneg %p218
        $region82: #{tpu_custom_call.1} parent=63 // pred_check_branch
          %463 = sbr.rel (%p461) target = $region84
        $region83: #{tpu_custom_call.1} parent=63 // pred_region
          %464 = dma.done [#allocation10], 1024
        $region84: #{tpu_custom_call.1} parent=63 // pred_fallthru
          _
        %s465 = sand.u32 %s53, 1
        %s466 = scalar_lea.sflag [#allocation5], %s465
        %s467 = sand.u32 %s53, 1
        %s468 = smul.addr %s467, 128
        %s469 = scalar_lea.vmem [#allocation4], %s468
        %p470 = pneg %p66
        %p471 = pneg %p63
        %s472 = sand.u32 %s31, 1
        %s473 = scalar_lea.sflag [#allocation7], %s472
        %s474 = sand.u32 %s79, 1
        %s475 = smul.addr %s474, 256
        %s476 = scalar_lea.vmem [#allocation6], %s475
        %p477 = pneg %p92
        %p478 = pneg %p89
        %p479 = pneg %p113
        %p480 = pneg %p110
        %p481 = pneg %p134
        %p482 = pneg %p131
        %p483 = pneg %p155
        %p484 = pneg %p152
        %p485 = pneg %p176
        %p486 = pneg %p173
        %p487 = pneg %p197
        %p488 = pneg %p194
        %p489 = pneg %p218
        %p490 = pneg %p215
        %p491 = pneg %p239
        %p492 = pneg %p236
        %p493 = pneg %p260
        %p494 = pneg %p257
        %p495 = pneg %p281
        %p496 = pneg %p278
        %p497 = pneg %p307
        %p498 = pneg %p304
        %s499 = smul.u32 32, %s35
        %p500 = scmp.lt.s32.totalorder %s499, 63
        %s501 = scalar_select %p500, %s499, 63
        %s502 = smul.addr %s501, 8
        %s503 = scalar_lea.vmem %s11, %s502
        %s504 = smul.u32 32, %s35
        %s505 = smul.u32 16, %s36
        %s506 = smul.u32 32, %s35
        %p507 = scmp.lt.s32.totalorder %s506, 63
        %s508 = scalar_select %p507, %s506, 63
        %s509 = smul.addr %s508, 8
        %s510 = scalar_lea.vmem %s11, %s509
        %s511 = smul.u32 32, %s35
        %p513 = scmp.eq.s32.totalorder %s36, 0
        // Predicated region
        $region85: #{tpu_custom_call.1} parent=63 // pred_check
          %p514 = pneg %p513
        $region86: #{tpu_custom_call.1} parent=63 // pred_check_branch
          %516 = sbr.rel (%p514) target = $region88
        $region87: #{tpu_custom_call.1} parent=63 // pred_region
          %517 = vst [vmem:[#allocation2] sm:$0xff] 0.0
          %518 = vst [vmem:[#allocation2 + $0x8] sm:$0xff] 0.0
          %519 = vst [vmem:[#allocation2 + $0x10] sm:$0xff] 0.0
          %520 = vst [vmem:[#allocation2 + $0x18] sm:$0xff] 0.0
          %521 = vst [vmem:[#allocation2 + $0x20] sm:$0xff] 0.0
          %522 = vst [vmem:[#allocation2 + $0x28] sm:$0xff] 0.0
          %523 = vst [vmem:[#allocation2 + $0x30] sm:$0xff] 0.0
          %524 = vst [vmem:[#allocation2 + $0x38] sm:$0xff] 0.0
          %525 = vst [vmem:[#allocation2 + $0x40] sm:$0xff] 0.0
          %526 = vst [vmem:[#allocation2 + $0x48] sm:$0xff] 0.0
          %527 = vst [vmem:[#allocation2 + $0x50] sm:$0xff] 0.0
          %528 = vst [vmem:[#allocation2 + $0x58] sm:$0xff] 0.0
          %529 = vst [vmem:[#allocation2 + $0x60] sm:$0xff] 0.0
          %530 = vst [vmem:[#allocation2 + $0x68] sm:$0xff] 0.0
          %531 = vst [vmem:[#allocation2 + $0x70] sm:$0xff] 0.0
          %532 = vst [vmem:[#allocation2 + $0x78] sm:$0xff] 0.0
          %533 = vst [vmem:[#allocation2 + $0x80] sm:$0xff] 0.0
          %534 = vst [vmem:[#allocation2 + $0x88] sm:$0xff] 0.0
          %535 = vst [vmem:[#allocation2 + $0x90] sm:$0xff] 0.0
          %536 = vst [vmem:[#allocation2 + $0x98] sm:$0xff] 0.0
          %537 = vst [vmem:[#allocation2 + $0xa0] sm:$0xff] 0.0
          %538 = vst [vmem:[#allocation2 + $0xa8] sm:$0xff] 0.0
          %539 = vst [vmem:[#allocation2 + $0xb0] sm:$0xff] 0.0
          %540 = vst [vmem:[#allocation2 + $0xb8] sm:$0xff] 0.0
          %541 = vst [vmem:[#allocation2 + $0xc0] sm:$0xff] 0.0
          %542 = vst [vmem:[#allocation2 + $0xc8] sm:$0xff] 0.0
          %543 = vst [vmem:[#allocation2 + $0xd0] sm:$0xff] 0.0
          %544 = vst [vmem:[#allocation2 + $0xd8] sm:$0xff] 0.0
          %545 = vst [vmem:[#allocation2 + $0xe0] sm:$0xff] 0.0
          %546 = vst [vmem:[#allocation2 + $0xe8] sm:$0xff] 0.0
          %547 = vst [vmem:[#allocation2 + $0xf0] sm:$0xff] 0.0
          %548 = vst [vmem:[#allocation2 + $0xf8] sm:$0xff] 0.0
          %549 = vst [vmem:[#allocation2 + $0x100] sm:$0xff] 0.0
          %550 = vst [vmem:[#allocation2 + $0x108] sm:$0xff] 0.0
          %551 = vst [vmem:[#allocation2 + $0x110] sm:$0xff] 0.0
          %552 = vst [vmem:[#allocation2 + $0x118] sm:$0xff] 0.0
          %553 = vst [vmem:[#allocation2 + $0x120] sm:$0xff] 0.0
          %554 = vst [vmem:[#allocation2 + $0x128] sm:$0xff] 0.0
          %555 = vst [vmem:[#allocation2 + $0x130] sm:$0xff] 0.0
          %556 = vst [vmem:[#allocation2 + $0x138] sm:$0xff] 0.0
          %557 = vst [vmem:[#allocation2 + $0x140] sm:$0xff] 0.0
          %558 = vst [vmem:[#allocation2 + $0x148] sm:$0xff] 0.0
          %559 = vst [vmem:[#allocation2 + $0x150] sm:$0xff] 0.0
          %560 = vst [vmem:[#allocation2 + $0x158] sm:$0xff] 0.0
          %561 = vst [vmem:[#allocation2 + $0x160] sm:$0xff] 0.0
          %562 = vst [vmem:[#allocation2 + $0x168] sm:$0xff] 0.0
          %563 = vst [vmem:[#allocation2 + $0x170] sm:$0xff] 0.0
          %564 = vst [vmem:[#allocation2 + $0x178] sm:$0xff] 0.0
          %565 = vst [vmem:[#allocation2 + $0x180] sm:$0xff] 0.0
          %566 = vst [vmem:[#allocation2 + $0x188] sm:$0xff] 0.0
          %567 = vst [vmem:[#allocation2 + $0x190] sm:$0xff] 0.0
          %568 = vst [vmem:[#allocation2 + $0x198] sm:$0xff] 0.0
          %569 = vst [vmem:[#allocation2 + $0x1a0] sm:$0xff] 0.0
          %570 = vst [vmem:[#allocation2 + $0x1a8] sm:$0xff] 0.0
          %571 = vst [vmem:[#allocation2 + $0x1b0] sm:$0xff] 0.0
          %572 = vst [vmem:[#allocation2 + $0x1b8] sm:$0xff] 0.0
          %573 = vst [vmem:[#allocation2 + $0x1c0] sm:$0xff] 0.0
          %574 = vst [vmem:[#allocation2 + $0x1c8] sm:$0xff] 0.0
          %575 = vst [vmem:[#allocation2 + $0x1d0] sm:$0xff] 0.0
          %576 = vst [vmem:[#allocation2 + $0x1d8] sm:$0xff] 0.0
          %577 = vst [vmem:[#allocation2 + $0x1e0] sm:$0xff] 0.0
          %578 = vst [vmem:[#allocation2 + $0x1e8] sm:$0xff] 0.0
          %579 = vst [vmem:[#allocation2 + $0x1f0] sm:$0xff] 0.0
          %580 = vst [vmem:[#allocation2 + $0x1f8] sm:$0xff] 0.0
          %581 = vst [vmem:[#allocation2 + $0x200] sm:$0xff] 0.0
          %582 = vst [vmem:[#allocation2 + $0x208] sm:$0xff] 0.0
          %583 = vst [vmem:[#allocation2 + $0x210] sm:$0xff] 0.0
          %584 = vst [vmem:[#allocation2 + $0x218] sm:$0xff] 0.0
          %585 = vst [vmem:[#allocation2 + $0x220] sm:$0xff] 0.0
          %586 = vst [vmem:[#allocation2 + $0x228] sm:$0xff] 0.0
          %587 = vst [vmem:[#allocation2 + $0x230] sm:$0xff] 0.0
          %588 = vst [vmem:[#allocation2 + $0x238] sm:$0xff] 0.0
          %589 = vst [vmem:[#allocation2 + $0x240] sm:$0xff] 0.0
          %590 = vst [vmem:[#allocation2 + $0x248] sm:$0xff] 0.0
          %591 = vst [vmem:[#allocation2 + $0x250] sm:$0xff] 0.0
          %592 = vst [vmem:[#allocation2 + $0x258] sm:$0xff] 0.0
          %593 = vst [vmem:[#allocation2 + $0x260] sm:$0xff] 0.0
          %594 = vst [vmem:[#allocation2 + $0x268] sm:$0xff] 0.0
          %595 = vst [vmem:[#allocation2 + $0x270] sm:$0xff] 0.0
          %596 = vst [vmem:[#allocation2 + $0x278] sm:$0xff] 0.0
          %597 = vst [vmem:[#allocation2 + $0x280] sm:$0xff] 0.0
          %598 = vst [vmem:[#allocation2 + $0x288] sm:$0xff] 0.0
          %599 = vst [vmem:[#allocation2 + $0x290] sm:$0xff] 0.0
          %600 = vst [vmem:[#allocation2 + $0x298] sm:$0xff] 0.0
          %601 = vst [vmem:[#allocation2 + $0x2a0] sm:$0xff] 0.0
          %602 = vst [vmem:[#allocation2 + $0x2a8] sm:$0xff] 0.0
          %603 = vst [vmem:[#allocation2 + $0x2b0] sm:$0xff] 0.0
          %604 = vst [vmem:[#allocation2 + $0x2b8] sm:$0xff] 0.0
          %605 = vst [vmem:[#allocation2 + $0x2c0] sm:$0xff] 0.0
          %606 = vst [vmem:[#allocation2 + $0x2c8] sm:$0xff] 0.0
          %607 = vst [vmem:[#allocation2 + $0x2d0] sm:$0xff] 0.0
          %608 = vst [vmem:[#allocation2 + $0x2d8] sm:$0xff] 0.0
          %609 = vst [vmem:[#allocation2 + $0x2e0] sm:$0xff] 0.0
          %610 = vst [vmem:[#allocation2 + $0x2e8] sm:$0xff] 0.0
          %611 = vst [vmem:[#allocation2 + $0x2f0] sm:$0xff] 0.0
          %612 = vst [vmem:[#allocation2 + $0x2f8] sm:$0xff] 0.0
          %613 = vst [vmem:[#allocation2 + $0x300] sm:$0xff] 0.0
          %614 = vst [vmem:[#allocation2 + $0x308] sm:$0xff] 0.0
          %615 = vst [vmem:[#allocation2 + $0x310] sm:$0xff] 0.0
          %616 = vst [vmem:[#allocation2 + $0x318] sm:$0xff] 0.0
          %617 = vst [vmem:[#allocation2 + $0x320] sm:$0xff] 0.0
          %618 = vst [vmem:[#allocation2 + $0x328] sm:$0xff] 0.0
          %619 = vst [vmem:[#allocation2 + $0x330] sm:$0xff] 0.0
          %620 = vst [vmem:[#allocation2 + $0x338] sm:$0xff] 0.0
          %621 = vst [vmem:[#allocation2 + $0x340] sm:$0xff] 0.0
          %622 = vst [vmem:[#allocation2 + $0x348] sm:$0xff] 0.0
          %623 = vst [vmem:[#allocation2 + $0x350] sm:$0xff] 0.0
          %624 = vst [vmem:[#allocation2 + $0x358] sm:$0xff] 0.0
          %625 = vst [vmem:[#allocation2 + $0x360] sm:$0xff] 0.0
          %626 = vst [vmem:[#allocation2 + $0x368] sm:$0xff] 0.0
          %627 = vst [vmem:[#allocation2 + $0x370] sm:$0xff] 0.0
          %628 = vst [vmem:[#allocation2 + $0x378] sm:$0xff] 0.0
          %629 = vst [vmem:[#allocation2 + $0x380] sm:$0xff] 0.0
          %630 = vst [vmem:[#allocation2 + $0x388] sm:$0xff] 0.0
          %631 = vst [vmem:[#allocation2 + $0x390] sm:$0xff] 0.0
          %632 = vst [vmem:[#allocation2 + $0x398] sm:$0xff] 0.0
          %633 = vst [vmem:[#allocation2 + $0x3a0] sm:$0xff] 0.0
          %634 = vst [vmem:[#allocation2 + $0x3a8] sm:$0xff] 0.0
          %635 = vst [vmem:[#allocation2 + $0x3b0] sm:$0xff] 0.0
          %636 = vst [vmem:[#allocation2 + $0x3b8] sm:$0xff] 0.0
          %637 = vst [vmem:[#allocation2 + $0x3c0] sm:$0xff] 0.0
          %638 = vst [vmem:[#allocation2 + $0x3c8] sm:$0xff] 0.0
          %639 = vst [vmem:[#allocation2 + $0x3d0] sm:$0xff] 0.0
          %640 = vst [vmem:[#allocation2 + $0x3d8] sm:$0xff] 0.0
          %641 = vst [vmem:[#allocation2 + $0x3e0] sm:$0xff] 0.0
          %642 = vst [vmem:[#allocation2 + $0x3e8] sm:$0xff] 0.0
          %643 = vst [vmem:[#allocation2 + $0x3f0] sm:$0xff] 0.0
          %644 = vst [vmem:[#allocation2 + $0x3f8] sm:$0xff] 0.0
        $region88: #{tpu_custom_call.1} parent=63 // pred_fallthru
          _
        %v645 = vld [vmem:[#allocation2] sm:$0xff]
        %v646 = vld [vmem:[#allocation2 + $0x8] sm:$0xff]
        %v647 = vld [vmem:[#allocation2 + $0x10] sm:$0xff]
        %v648 = vld [vmem:[#allocation2 + $0x18] sm:$0xff]
        %v649 = vld [vmem:[#allocation2 + $0x20] sm:$0xff]
        %v650 = vld [vmem:[#allocation2 + $0x28] sm:$0xff]
        %v651 = vld [vmem:[#allocation2 + $0x30] sm:$0xff]
        %v652 = vld [vmem:[#allocation2 + $0x38] sm:$0xff]
        %v653 = vld [vmem:[#allocation2 + $0x40] sm:$0xff]
        %v654 = vld [vmem:[#allocation2 + $0x48] sm:$0xff]
        %v655 = vld [vmem:[#allocation2 + $0x50] sm:$0xff]
        %v656 = vld [vmem:[#allocation2 + $0x58] sm:$0xff]
        %v657 = vld [vmem:[#allocation2 + $0x60] sm:$0xff]
        %v658 = vld [vmem:[#allocation2 + $0x68] sm:$0xff]
        %v659 = vld [vmem:[#allocation2 + $0x70] sm:$0xff]
        %v660 = vld [vmem:[#allocation2 + $0x78] sm:$0xff]
        %v661 = vld [vmem:[#allocation2 + $0x80] sm:$0xff]
        %v662 = vld [vmem:[#allocation2 + $0x88] sm:$0xff]
        %v663 = vld [vmem:[#allocation2 + $0x90] sm:$0xff]
        %v664 = vld [vmem:[#allocation2 + $0x98] sm:$0xff]
        %v665 = vld [vmem:[#allocation2 + $0xa0] sm:$0xff]
        %v666 = vld [vmem:[#allocation2 + $0xa8] sm:$0xff]
        %v667 = vld [vmem:[#allocation2 + $0xb0] sm:$0xff]
        %v668 = vld [vmem:[#allocation2 + $0xb8] sm:$0xff]
        %v669 = vld [vmem:[#allocation2 + $0xc0] sm:$0xff]
        %v670 = vld [vmem:[#allocation2 + $0xc8] sm:$0xff]
        %v671 = vld [vmem:[#allocation2 + $0xd0] sm:$0xff]
        %v672 = vld [vmem:[#allocation2 + $0xd8] sm:$0xff]
        %v673 = vld [vmem:[#allocation2 + $0xe0] sm:$0xff]
        %v674 = vld [vmem:[#allocation2 + $0xe8] sm:$0xff]
        %v675 = vld [vmem:[#allocation2 + $0xf0] sm:$0xff]
        %v676 = vld [vmem:[#allocation2 + $0xf8] sm:$0xff]
        %v677 = vld [vmem:[#allocation2 + $0x100] sm:$0xff]
        %v678 = vld [vmem:[#allocation2 + $0x108] sm:$0xff]
        %v679 = vld [vmem:[#allocation2 + $0x110] sm:$0xff]
        %v680 = vld [vmem:[#allocation2 + $0x118] sm:$0xff]
        %v681 = vld [vmem:[#allocation2 + $0x120] sm:$0xff]
        %v682 = vld [vmem:[#allocation2 + $0x128] sm:$0xff]
        %v683 = vld [vmem:[#allocation2 + $0x130] sm:$0xff]
        %v684 = vld [vmem:[#allocation2 + $0x138] sm:$0xff]
        %v685 = vld [vmem:[#allocation2 + $0x140] sm:$0xff]
        %v686 = vld [vmem:[#allocation2 + $0x148] sm:$0xff]
        %v687 = vld [vmem:[#allocation2 + $0x150] sm:$0xff]
        %v688 = vld [vmem:[#allocation2 + $0x158] sm:$0xff]
        %v689 = vld [vmem:[#allocation2 + $0x160] sm:$0xff]
        %v690 = vld [vmem:[#allocation2 + $0x168] sm:$0xff]
        %v691 = vld [vmem:[#allocation2 + $0x170] sm:$0xff]
        %v692 = vld [vmem:[#allocation2 + $0x178] sm:$0xff]
        %v693 = vld [vmem:[#allocation2 + $0x180] sm:$0xff]
        %v694 = vld [vmem:[#allocation2 + $0x188] sm:$0xff]
        %v695 = vld [vmem:[#allocation2 + $0x190] sm:$0xff]
        %v696 = vld [vmem:[#allocation2 + $0x198] sm:$0xff]
        %v697 = vld [vmem:[#allocation2 + $0x1a0] sm:$0xff]
        %v698 = vld [vmem:[#allocation2 + $0x1a8] sm:$0xff]
        %v699 = vld [vmem:[#allocation2 + $0x1b0] sm:$0xff]
        %v700 = vld [vmem:[#allocation2 + $0x1b8] sm:$0xff]
        %v701 = vld [vmem:[#allocation2 + $0x1c0] sm:$0xff]
        %v702 = vld [vmem:[#allocation2 + $0x1c8] sm:$0xff]
        %v703 = vld [vmem:[#allocation2 + $0x1d0] sm:$0xff]
        %v704 = vld [vmem:[#allocation2 + $0x1d8] sm:$0xff]
        %v705 = vld [vmem:[#allocation2 + $0x1e0] sm:$0xff]
        %v706 = vld [vmem:[#allocation2 + $0x1e8] sm:$0xff]
        %v707 = vld [vmem:[#allocation2 + $0x1f0] sm:$0xff]
        %v708 = vld [vmem:[#allocation2 + $0x1f8] sm:$0xff]
        %v709 = vld [vmem:[#allocation2 + $0x200] sm:$0xff]
        %v710 = vld [vmem:[#allocation2 + $0x208] sm:$0xff]
        %v711 = vld [vmem:[#allocation2 + $0x210] sm:$0xff]
        %v712 = vld [vmem:[#allocation2 + $0x218] sm:$0xff]
        %v713 = vld [vmem:[#allocation2 + $0x220] sm:$0xff]
        %v714 = vld [vmem:[#allocation2 + $0x228] sm:$0xff]
        %v715 = vld [vmem:[#allocation2 + $0x230] sm:$0xff]
        %v716 = vld [vmem:[#allocation2 + $0x238] sm:$0xff]
        %v717 = vld [vmem:[#allocation2 + $0x240] sm:$0xff]
        %v718 = vld [vmem:[#allocation2 + $0x248] sm:$0xff]
        %v719 = vld [vmem:[#allocation2 + $0x250] sm:$0xff]
        %v720 = vld [vmem:[#allocation2 + $0x258] sm:$0xff]
        %v721 = vld [vmem:[#allocation2 + $0x260] sm:$0xff]
        %v722 = vld [vmem:[#allocation2 + $0x268] sm:$0xff]
        %v723 = vld [vmem:[#allocation2 + $0x270] sm:$0xff]
        %v724 = vld [vmem:[#allocation2 + $0x278] sm:$0xff]
        %v725 = vld [vmem:[#allocation2 + $0x280] sm:$0xff]
        %v726 = vld [vmem:[#allocation2 + $0x288] sm:$0xff]
        %v727 = vld [vmem:[#allocation2 + $0x290] sm:$0xff]
        %v728 = vld [vmem:[#allocation2 + $0x298] sm:$0xff]
        %v729 = vld [vmem:[#allocation2 + $0x2a0] sm:$0xff]
        %v730 = vld [vmem:[#allocation2 + $0x2a8] sm:$0xff]
        %v731 = vld [vmem:[#allocation2 + $0x2b0] sm:$0xff]
        %v732 = vld [vmem:[#allocation2 + $0x2b8] sm:$0xff]
        %v733 = vld [vmem:[#allocation2 + $0x2c0] sm:$0xff]
        %v734 = vld [vmem:[#allocation2 + $0x2c8] sm:$0xff]
        %v735 = vld [vmem:[#allocation2 + $0x2d0] sm:$0xff]
        %v736 = vld [vmem:[#allocation2 + $0x2d8] sm:$0xff]
        %v737 = vld [vmem:[#allocation2 + $0x2e0] sm:$0xff]
        %v738 = vld [vmem:[#allocation2 + $0x2e8] sm:$0xff]
        %v739 = vld [vmem:[#allocation2 + $0x2f0] sm:$0xff]
        %v740 = vld [vmem:[#allocation2 + $0x2f8] sm:$0xff]
        %v741 = vld [vmem:[#allocation2 + $0x300] sm:$0xff]
        %v742 = vld [vmem:[#allocation2 + $0x308] sm:$0xff]
        %v743 = vld [vmem:[#allocation2 + $0x310] sm:$0xff]
        %v744 = vld [vmem:[#allocation2 + $0x318] sm:$0xff]
        %v745 = vld [vmem:[#allocation2 + $0x320] sm:$0xff]
        %v746 = vld [vmem:[#allocation2 + $0x328] sm:$0xff]
        %v747 = vld [vmem:[#allocation2 + $0x330] sm:$0xff]
        %v748 = vld [vmem:[#allocation2 + $0x338] sm:$0xff]
        %v749 = vld [vmem:[#allocation2 + $0x340] sm:$0xff]
        %v750 = vld [vmem:[#allocation2 + $0x348] sm:$0xff]
        %v751 = vld [vmem:[#allocation2 + $0x350] sm:$0xff]
        %v752 = vld [vmem:[#allocation2 + $0x358] sm:$0xff]
        %v753 = vld [vmem:[#allocation2 + $0x360] sm:$0xff]
        %v754 = vld [vmem:[#allocation2 + $0x368] sm:$0xff]
        %v755 = vld [vmem:[#allocation2 + $0x370] sm:$0xff]
        %v756 = vld [vmem:[#allocation2 + $0x378] sm:$0xff]
        %v757 = vld [vmem:[#allocation2 + $0x380] sm:$0xff]
        %v758 = vld [vmem:[#allocation2 + $0x388] sm:$0xff]
        %v759 = vld [vmem:[#allocation2 + $0x390] sm:$0xff]
        %v760 = vld [vmem:[#allocation2 + $0x398] sm:$0xff]
        %v761 = vld [vmem:[#allocation2 + $0x3a0] sm:$0xff]
        %v762 = vld [vmem:[#allocation2 + $0x3a8] sm:$0xff]
        %v763 = vld [vmem:[#allocation2 + $0x3b0] sm:$0xff]
        %v764 = vld [vmem:[#allocation2 + $0x3b8] sm:$0xff]
        %v765 = vld [vmem:[#allocation2 + $0x3c0] sm:$0xff]
        %v766 = vld [vmem:[#allocation2 + $0x3c8] sm:$0xff]
        %v767 = vld [vmem:[#allocation2 + $0x3d0] sm:$0xff]
        %v768 = vld [vmem:[#allocation2 + $0x3d8] sm:$0xff]
        %v769 = vld [vmem:[#allocation2 + $0x3e0] sm:$0xff]
        %v770 = vld [vmem:[#allocation2 + $0x3e8] sm:$0xff]
        %v771 = vld [vmem:[#allocation2 + $0x3f0] sm:$0xff]
        %v772 = vld [vmem:[#allocation2 + $0x3f8] sm:$0xff]
        %v773 = vld [vmem:[%s439] sm:$0xf]
        %v774 = vld [vmem:[%s439 + $0x4] sm:$0xf]
        %v775 = vld [vmem:[%s439 + $0x8] sm:$0xf]
        %v776 = vld [vmem:[%s439 + $0xc] sm:$0xf]
        %v777 = vld [vmem:[%s439 + $0x10] sm:$0xf]
        %v778 = vld [vmem:[%s439 + $0x14] sm:$0xf]
        %v779 = vld [vmem:[%s439 + $0x18] sm:$0xf]
        %v780 = vld [vmem:[%s439 + $0x1c] sm:$0xf]
        %v781 = vld [vmem:[%s439 + $0x20] sm:$0xf]
        %v782 = vld [vmem:[%s439 + $0x24] sm:$0xf]
        %v783 = vld [vmem:[%s439 + $0x28] sm:$0xf]
        %v784 = vld [vmem:[%s439 + $0x2c] sm:$0xf]
        %v785 = vld [vmem:[%s439 + $0x30] sm:$0xf]
        %v786 = vld [vmem:[%s439 + $0x34] sm:$0xf]
        %v787 = vld [vmem:[%s439 + $0x38] sm:$0xf]
        %v788 = vld [vmem:[%s439 + $0x3c] sm:$0xf]
        %v789 = vld [vmem:[%s439 + $0x40] sm:$0xf]
        %v790 = vld [vmem:[%s439 + $0x44] sm:$0xf]
        %v791 = vld [vmem:[%s439 + $0x48] sm:$0xf]
        %v792 = vld [vmem:[%s439 + $0x4c] sm:$0xf]
        %v793 = vld [vmem:[%s439 + $0x50] sm:$0xf]
        %v794 = vld [vmem:[%s439 + $0x54] sm:$0xf]
        %v795 = vld [vmem:[%s439 + $0x58] sm:$0xf]
        %v796 = vld [vmem:[%s439 + $0x5c] sm:$0xf]
        %v797 = vld [vmem:[%s439 + $0x60] sm:$0xf]
        %v798 = vld [vmem:[%s439 + $0x64] sm:$0xf]
        %v799 = vld [vmem:[%s439 + $0x68] sm:$0xf]
        %v800 = vld [vmem:[%s439 + $0x6c] sm:$0xf]
        %v801 = vld [vmem:[%s439 + $0x70] sm:$0xf]
        %v802 = vld [vmem:[%s439 + $0x74] sm:$0xf]
        %v803 = vld [vmem:[%s439 + $0x78] sm:$0xf]
        %v804 = vld [vmem:[%s439 + $0x7c] sm:$0xf]
        %v805 = vld [vmem:[%s448] sm:$0xff]
        %v806 = vld [vmem:[%s448 + $0x8] sm:$0xff]
        %v807 = vld [vmem:[%s448 + $0x10] sm:$0xff]
        %v808 = vld [vmem:[%s448 + $0x18] sm:$0xff]
        %v809 = vld [vmem:[%s448 + $0x20] sm:$0xff]
        %v810 = vld [vmem:[%s448 + $0x28] sm:$0xff]
        %v811 = vld [vmem:[%s448 + $0x30] sm:$0xff]
        %v812 = vld [vmem:[%s448 + $0x38] sm:$0xff]
        %v813 = vld [vmem:[%s448 + $0x40] sm:$0xff]
        %v814 = vld [vmem:[%s448 + $0x48] sm:$0xff]
        %v815 = vld [vmem:[%s448 + $0x50] sm:$0xff]
        %v816 = vld [vmem:[%s448 + $0x58] sm:$0xff]
        %v817 = vld [vmem:[%s448 + $0x60] sm:$0xff]
        %v818 = vld [vmem:[%s448 + $0x68] sm:$0xff]
        %v819 = vld [vmem:[%s448 + $0x70] sm:$0xff]
        %v820 = vld [vmem:[%s448 + $0x78] sm:$0xff]
        %v821 = vld [vmem:[%s448 + $0x80] sm:$0xff]
        %v822 = vld [vmem:[%s448 + $0x88] sm:$0xff]
        %v823 = vld [vmem:[%s448 + $0x90] sm:$0xff]
        %v824 = vld [vmem:[%s448 + $0x98] sm:$0xff]
        %v825 = vld [vmem:[%s448 + $0xa0] sm:$0xff]
        %v826 = vld [vmem:[%s448 + $0xa8] sm:$0xff]
        %v827 = vld [vmem:[%s448 + $0xb0] sm:$0xff]
        %v828 = vld [vmem:[%s448 + $0xb8] sm:$0xff]
        %v829 = vld [vmem:[%s448 + $0xc0] sm:$0xff]
        %v830 = vld [vmem:[%s448 + $0xc8] sm:$0xff]
        %v831 = vld [vmem:[%s448 + $0xd0] sm:$0xff]
        %v832 = vld [vmem:[%s448 + $0xd8] sm:$0xff]
        %v833 = vld [vmem:[%s448 + $0xe0] sm:$0xff]
        %v834 = vld [vmem:[%s448 + $0xe8] sm:$0xff]
        %v835 = vld [vmem:[%s448 + $0xf0] sm:$0xff]
        %v836 = vld [vmem:[%s448 + $0xf8] sm:$0xff]
        %v869 = vunpack.c.l.b16 %v773
        %v870 = vunpack.c.l.b16 %v774
        %v871 = vunpack.c.l.b16 %v775
        %v872 = vunpack.c.l.b16 %v776
        %v873 = vunpack.c.l.b16 %v777
        %v874 = vunpack.c.l.b16 %v778
        %v875 = vunpack.c.l.b16 %v779
        %v876 = vunpack.c.l.b16 %v780
        %v877 = vunpack.c.l.b16 %v781
        %v878 = vunpack.c.l.b16 %v782
        %v879 = vunpack.c.l.b16 %v783
        %v880 = vunpack.c.l.b16 %v784
        %v881 = vunpack.c.l.b16 %v785
        %v882 = vunpack.c.l.b16 %v786
        %v883 = vunpack.c.l.b16 %v787
        %v884 = vunpack.c.l.b16 %v788
        %v885 = vunpack.c.l.b16 %v789
        %v886 = vunpack.c.l.b16 %v790
        %v887 = vunpack.c.l.b16 %v791
        %v888 = vunpack.c.l.b16 %v792
        %v889 = vunpack.c.l.b16 %v793
        %v890 = vunpack.c.l.b16 %v794
        %v891 = vunpack.c.l.b16 %v795
        %v892 = vunpack.c.l.b16 %v796
        %v893 = vunpack.c.l.b16 %v797
        %v894 = vunpack.c.l.b16 %v798
        %v895 = vunpack.c.l.b16 %v799
        %v896 = vunpack.c.l.b16 %v800
        %v897 = vunpack.c.l.b16 %v801
        %v898 = vunpack.c.l.b16 %v802
        %v899 = vunpack.c.l.b16 %v803
        %v900 = vunpack.c.l.b16 %v804
        %v901 = vpack.c.b16 %v870, %v869
        %v902 = vpack.c.b16 %v872, %v871
        %v903 = vpack.c.b16 %v874, %v873
        %v904 = vpack.c.b16 %v876, %v875
        %v905 = vpack.c.b16 %v878, %v877
        %v906 = vpack.c.b16 %v880, %v879
        %v907 = vpack.c.b16 %v882, %v881
        %v908 = vpack.c.b16 %v884, %v883
        %v909 = vpack.c.b16 %v886, %v885
        %v910 = vpack.c.b16 %v888, %v887
        %v911 = vpack.c.b16 %v890, %v889
        %v912 = vpack.c.b16 %v892, %v891
        %v913 = vpack.c.b16 %v894, %v893
        %v914 = vpack.c.b16 %v896, %v895
        %v915 = vpack.c.b16 %v898, %v897
        %v916 = vpack.c.b16 %v900, %v899
        %v965 = vunpack.c.l.b16 %v805
        %v966 = vunpack.c.h.b16 %v805
        %v967 = vunpack.c.l.b16 %v806
        %v968 = vunpack.c.h.b16 %v806
        %v969 = vunpack.c.l.b16 %v807
        %v970 = vunpack.c.h.b16 %v807
        %v971 = vunpack.c.l.b16 %v808
        %v972 = vunpack.c.h.b16 %v808
        %v973 = vunpack.c.l.b16 %v809
        %v974 = vunpack.c.h.b16 %v809
        %v975 = vunpack.c.l.b16 %v810
        %v976 = vunpack.c.h.b16 %v810
        %v977 = vunpack.c.l.b16 %v811
        %v978 = vunpack.c.h.b16 %v811
        %v979 = vunpack.c.l.b16 %v812
        %v980 = vunpack.c.h.b16 %v812
        %v981 = vunpack.c.l.b16 %v813
        %v982 = vunpack.c.h.b16 %v813
        %v983 = vunpack.c.l.b16 %v814
        %v984 = vunpack.c.h.b16 %v814
        %v985 = vunpack.c.l.b16 %v815
        %v986 = vunpack.c.h.b16 %v815
        %v987 = vunpack.c.l.b16 %v816
        %v988 = vunpack.c.h.b16 %v816
        %v989 = vunpack.c.l.b16 %v817
        %v990 = vunpack.c.h.b16 %v817
        %v991 = vunpack.c.l.b16 %v818
        %v992 = vunpack.c.h.b16 %v818
        %v993 = vunpack.c.l.b16 %v819
        %v994 = vunpack.c.h.b16 %v819
        %v995 = vunpack.c.l.b16 %v820
        %v996 = vunpack.c.h.b16 %v820
        %v997 = vunpack.c.l.b16 %v821
        %v998 = vunpack.c.h.b16 %v821
        %v999 = vunpack.c.l.b16 %v822
        %v1000 = vunpack.c.h.b16 %v822
        %v1001 = vunpack.c.l.b16 %v823
        %v1002 = vunpack.c.h.b16 %v823
        %v1003 = vunpack.c.l.b16 %v824
        %v1004 = vunpack.c.h.b16 %v824
        %v1005 = vunpack.c.l.b16 %v825
        %v1006 = vunpack.c.h.b16 %v825
        %v1007 = vunpack.c.l.b16 %v826
        %v1008 = vunpack.c.h.b16 %v826
        %v1009 = vunpack.c.l.b16 %v827
        %v1010 = vunpack.c.h.b16 %v827
        %v1011 = vunpack.c.l.b16 %v828
        %v1012 = vunpack.c.h.b16 %v828
        %v1013 = vunpack.c.l.b16 %v829
        %v1014 = vunpack.c.h.b16 %v829
        %v1015 = vunpack.c.l.b16 %v830
        %v1016 = vunpack.c.h.b16 %v830
        %v1017 = vunpack.c.l.b16 %v831
        %v1018 = vunpack.c.h.b16 %v831
        %v1019 = vunpack.c.l.b16 %v832
        %v1020 = vunpack.c.h.b16 %v832
        %v1021 = vunpack.c.l.b16 %v833
        %v1022 = vunpack.c.h.b16 %v833
        %v1023 = vunpack.c.l.b16 %v834
        %v1024 = vunpack.c.h.b16 %v834
        %v1025 = vunpack.c.l.b16 %v835
        %v1026 = vunpack.c.h.b16 %v835
        %v1027 = vunpack.c.l.b16 %v836
        %v1028 = vunpack.c.h.b16 %v836
        %v1029 = vpack.c.b16 %v969, %v965
        %v1030 = vpack.c.b16 %v970, %v966
        %v1031 = vpack.c.b16 %v971, %v967
        %v1032 = vpack.c.b16 %v972, %v968
        %v1033 = vpack.c.b16 %v977, %v973
        %v1034 = vpack.c.b16 %v978, %v974
        %v1035 = vpack.c.b16 %v979, %v975
        %v1036 = vpack.c.b16 %v980, %v976
        %v1037 = vpack.c.b16 %v985, %v981
        %v1038 = vpack.c.b16 %v986, %v982
        %v1039 = vpack.c.b16 %v987, %v983
        %v1040 = vpack.c.b16 %v988, %v984
        %v1041 = vpack.c.b16 %v993, %v989
        %v1042 = vpack.c.b16 %v994, %v990
        %v1043 = vpack.c.b16 %v995, %v991
        %v1044 = vpack.c.b16 %v996, %v992
        %v1045 = vpack.c.b16 %v1001, %v997
        %v1046 = vpack.c.b16 %v1002, %v998
        %v1047 = vpack.c.b16 %v1003, %v999
        %v1048 = vpack.c.b16 %v1004, %v1000
        %v1049 = vpack.c.b16 %v1009, %v1005
        %v1050 = vpack.c.b16 %v1010, %v1006
        %v1051 = vpack.c.b16 %v1011, %v1007
        %v1052 = vpack.c.b16 %v1012, %v1008
        %v1053 = vpack.c.b16 %v1017, %v1013
        %v1054 = vpack.c.b16 %v1018, %v1014
        %v1055 = vpack.c.b16 %v1019, %v1015
        %v1056 = vpack.c.b16 %v1020, %v1016
        %v1057 = vpack.c.b16 %v1025, %v1021
        %v1058 = vpack.c.b16 %v1026, %v1022
        %v1059 = vpack.c.b16 %v1027, %v1023
        %v1060 = vpack.c.b16 %v1028, %v1024
        %1093 = vmatprep.subr.bf16.mxu0 %v1030
        %1094 = vmatpush1.bf16.msra.mxu0 %v1029
        %1095 = vmatprep.subr.bf16.mxu0 %v1034
        %1096 = vmatpush1.bf16.msra.mxu0 %v1033
        %1097 = vmatprep.subr.bf16.mxu0 %v1038
        %1098 = vmatpush1.bf16.msra.mxu0 %v1037
        %1099 = vmatprep.subr.bf16.mxu0 %v1042
        %1100 = vmatpush1.bf16.msra.mxu0 %v1041
        %1101 = vmatprep.subr.bf16.mxu0 %v1046
        %1102 = vmatpush1.bf16.msra.mxu0 %v1045
        %1103 = vmatprep.subr.bf16.mxu0 %v1050
        %1104 = vmatpush1.bf16.msra.mxu0 %v1049
        %1105 = vmatprep.subr.bf16.mxu0 %v1054
        %1106 = vmatpush1.bf16.msra.mxu0 %v1053
        %1107 = vmatprep.subr.bf16.mxu0 %v1058
        %1108 = vmatpush1.bf16.msra.mxu0 %v1057
        %1109 = vmatprep.subr.bf16.mxu0 0
        %1110 = vmatpush1.bf16.msra.mxu0 0
        %1111 = vmatprep.subr.bf16.mxu0 0
        %1112 = vmatpush1.bf16.msra.mxu0 0
        %1113 = vmatprep.subr.bf16.mxu0 0
        %1114 = vmatpush1.bf16.msra.mxu0 0
        %1115 = vmatprep.subr.bf16.mxu0 0
        %1116 = vmatpush1.bf16.msra.mxu0 0
        %1117 = vmatprep.subr.bf16.mxu0 0
        %1118 = vmatpush1.bf16.msra.mxu0 0
        %1119 = vmatprep.subr.bf16.mxu0 0
        %1120 = vmatpush1.bf16.msra.mxu0 0
        %1121 = vmatprep.subr.bf16.mxu0 0
        %1122 = vmatpush1.bf16.msra.mxu0 0
        %1123 = vmatprep.subr.bf16.mxu0 0
        %1124 = vmatpush1.bf16.msra.mxu0 0
        %1125 = vmatprep.mubr.bf16.mxu0 0
        %1126 = vmatmul.mubr.bf16.gmra.mrb[0].mxu0 %v901
        %v1127 = vpop.f32.mrb[0].mxu0
        %v1128 = vadd.f32 0.0, %v1127
        %v1129 = vpop.f32.mrb[0].mxu0
        %v1130 = vadd.f32 0.0, %v1129
        %v1131 = vpop.f32.mrb[0].mxu0
        %v1132 = vadd.f32 0.0, %v1131
        %v1133 = vpop.f32.mrb[0].mxu0
        %v1134 = vadd.f32 0.0, %v1133
        %1135 = vmatprep.mubr.bf16.mxu0 0
        %1136 = vmatmul.mubr.bf16.gmra.mrb[0].mxu0 %v902
        %v1137 = vpop.f32.mrb[0].mxu0
        %v1138 = vadd.f32 0.0, %v1137
        %v1139 = vpop.f32.mrb[0].mxu0
        %v1140 = vadd.f32 0.0, %v1139
        %v1141 = vpop.f32.mrb[0].mxu0
        %v1142 = vadd.f32 0.0, %v1141
        %v1143 = vpop.f32.mrb[0].mxu0
        %v1144 = vadd.f32 0.0, %v1143
        %1145 = vmatprep.mubr.bf16.mxu0 0
        %1146 = vmatmul.mubr.bf16.gmra.mrb[0].mxu0 %v903
        %v1147 = vpop.f32.mrb[0].mxu0
        %v1148 = vadd.f32 0.0, %v1147
        %v1149 = vpop.f32.mrb[0].mxu0
        %v1150 = vadd.f32 0.0, %v1149
        %v1151 = vpop.f32.mrb[0].mxu0
        %v1152 = vadd.f32 0.0, %v1151
        %v1153 = vpop.f32.mrb[0].mxu0
        %v1154 = vadd.f32 0.0, %v1153
        %1155 = vmatprep.mubr.bf16.mxu0 0
        %1156 = vmatmul.mubr.bf16.gmra.mrb[0].mxu0 %v904
        %v1157 = vpop.f32.mrb[0].mxu0
        %v1158 = vadd.f32 0.0, %v1157
        %v1159 = vpop.f32.mrb[0].mxu0
        %v1160 = vadd.f32 0.0, %v1159
        %v1161 = vpop.f32.mrb[0].mxu0
        %v1162 = vadd.f32 0.0, %v1161
        %v1163 = vpop.f32.mrb[0].mxu0
        %v1164 = vadd.f32 0.0, %v1163
        %1165 = vmatprep.mubr.bf16.mxu0 0
        %1166 = vmatmul.mubr.bf16.gmra.mrb[0].mxu0 %v905
        %v1167 = vpop.f32.mrb[0].mxu0
        %v1168 = vadd.f32 0.0, %v1167
        %v1169 = vpop.f32.mrb[0].mxu0
        %v1170 = vadd.f32 0.0, %v1169
        %v1171 = vpop.f32.mrb[0].mxu0
        %v1172 = vadd.f32 0.0, %v1171
        %v1173 = vpop.f32.mrb[0].mxu0
        %v1174 = vadd.f32 0.0, %v1173
        %1175 = vmatprep.mubr.bf16.mxu0 0
        %1176 = vmatmul.mubr.bf16.gmra.mrb[0].mxu0 %v906
        %v1177 = vpop.f32.mrb[0].mxu0
        %v1178 = vadd.f32 0.0, %v1177
        %v1179 = vpop.f32.mrb[0].mxu0
        %v1180 = vadd.f32 0.0, %v1179
        %v1181 = vpop.f32.mrb[0].mxu0
        %v1182 = vadd.f32 0.0, %v1181
        %v1183 = vpop.f32.mrb[0].mxu0
        %v1184 = vadd.f32 0.0, %v1183
        %1185 = vmatprep.mubr.bf16.mxu0 0
        %1186 = vmatmul.mubr.bf16.gmra.mrb[0].mxu0 %v907
        %v1187 = vpop.f32.mrb[0].mxu0
        %v1188 = vadd.f32 0.0, %v1187
        %v1189 = vpop.f32.mrb[0].mxu0
        %v1190 = vadd.f32 0.0, %v1189
        %v1191 = vpop.f32.mrb[0].mxu0
        %v1192 = vadd.f32 0.0, %v1191
        %v1193 = vpop.f32.mrb[0].mxu0
        %v1194 = vadd.f32 0.0, %v1193
        %1195 = vmatprep.mubr.bf16.mxu0 0
        %1196 = vmatmul.mubr.bf16.gmra.mrb[0].mxu0 %v908
        %v1197 = vpop.f32.mrb[0].mxu0
        %v1198 = vadd.f32 0.0, %v1197
        %v1199 = vpop.f32.mrb[0].mxu0
        %v1200 = vadd.f32 0.0, %v1199
        %v1201 = vpop.f32.mrb[0].mxu0
        %v1202 = vadd.f32 0.0, %v1201
        %v1203 = vpop.f32.mrb[0].mxu0
        %v1204 = vadd.f32 0.0, %v1203
        %1205 = vmatprep.mubr.bf16.mxu0 0
        %1206 = vmatmul.mubr.bf16.gmra.mrb[0].mxu0 %v909
        %v1207 = vpop.f32.mrb[0].mxu0
        %v1208 = vadd.f32 0.0, %v1207
        %v1209 = vpop.f32.mrb[0].mxu0
        %v1210 = vadd.f32 0.0, %v1209
        %v1211 = vpop.f32.mrb[0].mxu0
        %v1212 = vadd.f32 0.0, %v1211
        %v1213 = vpop.f32.mrb[0].mxu0
        %v1214 = vadd.f32 0.0, %v1213
        %1215 = vmatprep.mubr.bf16.mxu0 0
        %1216 = vmatmul.mubr.bf16.gmra.mrb[0].mxu0 %v910
        %v1217 = vpop.f32.mrb[0].mxu0
        %v1218 = vadd.f32 0.0, %v1217
        %v1219 = vpop.f32.mrb[0].mxu0
        %v1220 = vadd.f32 0.0, %v1219
        %v1221 = vpop.f32.mrb[0].mxu0
        %v1222 = vadd.f32 0.0, %v1221
        %v1223 = vpop.f32.mrb[0].mxu0
        %v1224 = vadd.f32 0.0, %v1223
        %1225 = vmatprep.mubr.bf16.mxu0 0
        %1226 = vmatmul.mubr.bf16.gmra.mrb[0].mxu0 %v911
        %v1227 = vpop.f32.mrb[0].mxu0
        %v1228 = vadd.f32 0.0, %v1227
        %v1229 = vpop.f32.mrb[0].mxu0
        %v1230 = vadd.f32 0.0, %v1229
        %v1231 = vpop.f32.mrb[0].mxu0
        %v1232 = vadd.f32 0.0, %v1231
        %v1233 = vpop.f32.mrb[0].mxu0
        %v1234 = vadd.f32 0.0, %v1233
        %1235 = vmatprep.mubr.bf16.mxu0 0
        %1236 = vmatmul.mubr.bf16.gmra.mrb[0].mxu0 %v912
        %v1237 = vpop.f32.mrb[0].mxu0
        %v1238 = vadd.f32 0.0, %v1237
        %v1239 = vpop.f32.mrb[0].mxu0
        %v1240 = vadd.f32 0.0, %v1239
        %v1241 = vpop.f32.mrb[0].mxu0
        %v1242 = vadd.f32 0.0, %v1241
        %v1243 = vpop.f32.mrb[0].mxu0
        %v1244 = vadd.f32 0.0, %v1243
        %1245 = vmatprep.mubr.bf16.mxu0 0
        %1246 = vmatmul.mubr.bf16.gmra.mrb[0].mxu0 %v913
        %v1247 = vpop.f32.mrb[0].mxu0
        %v1248 = vadd.f32 0.0, %v1247
        %v1249 = vpop.f32.mrb[0].mxu0
        %v1250 = vadd.f32 0.0, %v1249
        %v1251 = vpop.f32.mrb[0].mxu0
        %v1252 = vadd.f32 0.0, %v1251
        %v1253 = vpop.f32.mrb[0].mxu0
        %v1254 = vadd.f32 0.0, %v1253
        %1255 = vmatprep.mubr.bf16.mxu0 0
        %1256 = vmatmul.mubr.bf16.gmra.mrb[0].mxu0 %v914
        %v1257 = vpop.f32.mrb[0].mxu0
        %v1258 = vadd.f32 0.0, %v1257
        %v1259 = vpop.f32.mrb[0].mxu0
        %v1260 = vadd.f32 0.0, %v1259
        %v1261 = vpop.f32.mrb[0].mxu0
        %v1262 = vadd.f32 0.0, %v1261
        %v1263 = vpop.f32.mrb[0].mxu0
        %v1264 = vadd.f32 0.0, %v1263
        %1265 = vmatprep.mubr.bf16.mxu0 0
        %1266 = vmatmul.mubr.bf16.gmra.mrb[0].mxu0 %v915
        %v1267 = vpop.f32.mrb[0].mxu0
        %v1268 = vadd.f32 0.0, %v1267
        %v1269 = vpop.f32.mrb[0].mxu0
        %v1270 = vadd.f32 0.0, %v1269
        %v1271 = vpop.f32.mrb[0].mxu0
        %v1272 = vadd.f32 0.0, %v1271
        %v1273 = vpop.f32.mrb[0].mxu0
        %v1274 = vadd.f32 0.0, %v1273
        %1275 = vmatprep.mubr.bf16.mxu0 0
        %1276 = vmatmul.mubr.bf16.gmra.mrb[0].mxu0 %v916
        %v1277 = vpop.f32.mrb[0].mxu0
        %v1278 = vadd.f32 0.0, %v1277
        %v1279 = vpop.f32.mrb[0].mxu0
        %v1280 = vadd.f32 0.0, %v1279
        %v1281 = vpop.f32.mrb[0].mxu0
        %v1282 = vadd.f32 0.0, %v1281
        %v1283 = vpop.f32.mrb[0].mxu0
        %v1284 = vadd.f32 0.0, %v1283
        %1285 = vdwg.mxu0
        %1286 = vmatprep.subr.bf16.mxu0 %v1032
        %1287 = vmatpush1.bf16.msra.mxu0 %v1031
        %1288 = vmatprep.subr.bf16.mxu0 %v1036
        %1289 = vmatpush1.bf16.msra.mxu0 %v1035
        %1290 = vmatprep.subr.bf16.mxu0 %v1040
        %1291 = vmatpush1.bf16.msra.mxu0 %v1039
        %1292 = vmatprep.subr.bf16.mxu0 %v1044
        %1293 = vmatpush1.bf16.msra.mxu0 %v1043
        %1294 = vmatprep.subr.bf16.mxu0 %v1048
        %1295 = vmatpush1.bf16.msra.mxu0 %v1047
        %1296 = vmatprep.subr.bf16.mxu0 %v1052
        %1297 = vmatpush1.bf16.msra.mxu0 %v1051
        %1298 = vmatprep.subr.bf16.mxu0 %v1056
        %1299 = vmatpush1.bf16.msra.mxu0 %v1055
        %1300 = vmatprep.subr.bf16.mxu0 %v1060
        %1301 = vmatpush1.bf16.msra.mxu0 %v1059
        %1302 = vmatprep.subr.bf16.mxu0 0
        %1303 = vmatpush1.bf16.msra.mxu0 0
        %1304 = vmatprep.subr.bf16.mxu0 0
        %1305 = vmatpush1.bf16.msra.mxu0 0
        %1306 = vmatprep.subr.bf16.mxu0 0
        %1307 = vmatpush1.bf16.msra.mxu0 0
        %1308 = vmatprep.subr.bf16.mxu0 0
        %1309 = vmatpush1.bf16.msra.mxu0 0
        %1310 = vmatprep.subr.bf16.mxu0 0
        %1311 = vmatpush1.bf16.msra.mxu0 0
        %1312 = vmatprep.subr.bf16.mxu0 0
        %1313 = vmatpush1.bf16.msra.mxu0 0
        %1314 = vmatprep.subr.bf16.mxu0 0
        %1315 = vmatpush1.bf16.msra.mxu0 0
        %1316 = vmatprep.subr.bf16.mxu0 0
        %1317 = vmatpush1.bf16.msra.mxu0 0
        %1318 = vmatprep.mubr.bf16.mxu0 0
        %1319 = vmatmul.mubr.bf16.gmra.mrb[0].mxu0 %v901
        %v1320 = vpop.f32.mrb[0].mxu0
        %v1321 = vadd.f32 0.0, %v1320
        %v1322 = vpop.f32.mrb[0].mxu0
        %v1323 = vadd.f32 0.0, %v1322
        %v1324 = vpop.f32.mrb[0].mxu0
        %v1325 = vadd.f32 0.0, %v1324
        %v1326 = vpop.f32.mrb[0].mxu0
        %v1327 = vadd.f32 0.0, %v1326
        %1328 = vmatprep.mubr.bf16.mxu0 0
        %1329 = vmatmul.mubr.bf16.gmra.mrb[0].mxu0 %v902
        %v1330 = vpop.f32.mrb[0].mxu0
        %v1331 = vadd.f32 0.0, %v1330
        %v1332 = vpop.f32.mrb[0].mxu0
        %v1333 = vadd.f32 0.0, %v1332
        %v1334 = vpop.f32.mrb[0].mxu0
        %v1335 = vadd.f32 0.0, %v1334
        %v1336 = vpop.f32.mrb[0].mxu0
        %v1337 = vadd.f32 0.0, %v1336
        %1338 = vmatprep.mubr.bf16.mxu0 0
        %1339 = vmatmul.mubr.bf16.gmra.mrb[0].mxu0 %v903
        %v1340 = vpop.f32.mrb[0].mxu0
        %v1341 = vadd.f32 0.0, %v1340
        %v1342 = vpop.f32.mrb[0].mxu0
        %v1343 = vadd.f32 0.0, %v1342
        %v1344 = vpop.f32.mrb[0].mxu0
        %v1345 = vadd.f32 0.0, %v1344
        %v1346 = vpop.f32.mrb[0].mxu0
        %v1347 = vadd.f32 0.0, %v1346
        %1348 = vmatprep.mubr.bf16.mxu0 0
        %1349 = vmatmul.mubr.bf16.gmra.mrb[0].mxu0 %v904
        %v1350 = vpop.f32.mrb[0].mxu0
        %v1351 = vadd.f32 0.0, %v1350
        %v1352 = vpop.f32.mrb[0].mxu0
        %v1353 = vadd.f32 0.0, %v1352
        %v1354 = vpop.f32.mrb[0].mxu0
        %v1355 = vadd.f32 0.0, %v1354
        %v1356 = vpop.f32.mrb[0].mxu0
        %v1357 = vadd.f32 0.0, %v1356
        %1358 = vmatprep.mubr.bf16.mxu0 0
        %1359 = vmatmul.mubr.bf16.gmra.mrb[0].mxu0 %v905
        %v1360 = vpop.f32.mrb[0].mxu0
        %v1361 = vadd.f32 0.0, %v1360
        %v1362 = vpop.f32.mrb[0].mxu0
        %v1363 = vadd.f32 0.0, %v1362
        %v1364 = vpop.f32.mrb[0].mxu0
        %v1365 = vadd.f32 0.0, %v1364
        %v1366 = vpop.f32.mrb[0].mxu0
        %v1367 = vadd.f32 0.0, %v1366
        %1368 = vmatprep.mubr.bf16.mxu0 0
        %1369 = vmatmul.mubr.bf16.gmra.mrb[0].mxu0 %v906
        %v1370 = vpop.f32.mrb[0].mxu0
        %v1371 = vadd.f32 0.0, %v1370
        %v1372 = vpop.f32.mrb[0].mxu0
        %v1373 = vadd.f32 0.0, %v1372
        %v1374 = vpop.f32.mrb[0].mxu0
        %v1375 = vadd.f32 0.0, %v1374
        %v1376 = vpop.f32.mrb[0].mxu0
        %v1377 = vadd.f32 0.0, %v1376
        %1378 = vmatprep.mubr.bf16.mxu0 0
        %1379 = vmatmul.mubr.bf16.gmra.mrb[0].mxu0 %v907
        %v1380 = vpop.f32.mrb[0].mxu0
        %v1381 = vadd.f32 0.0, %v1380
        %v1382 = vpop.f32.mrb[0].mxu0
        %v1383 = vadd.f32 0.0, %v1382
        %v1384 = vpop.f32.mrb[0].mxu0
        %v1385 = vadd.f32 0.0, %v1384
        %v1386 = vpop.f32.mrb[0].mxu0
        %v1387 = vadd.f32 0.0, %v1386
        %1388 = vmatprep.mubr.bf16.mxu0 0
        %1389 = vmatmul.mubr.bf16.gmra.mrb[0].mxu0 %v908
        %v1390 = vpop.f32.mrb[0].mxu0
        %v1391 = vadd.f32 0.0, %v1390
        %v1392 = vpop.f32.mrb[0].mxu0
        %v1393 = vadd.f32 0.0, %v1392
        %v1394 = vpop.f32.mrb[0].mxu0
        %v1395 = vadd.f32 0.0, %v1394
        %v1396 = vpop.f32.mrb[0].mxu0
        %v1397 = vadd.f32 0.0, %v1396
        %1398 = vmatprep.mubr.bf16.mxu0 0
        %1399 = vmatmul.mubr.bf16.gmra.mrb[0].mxu0 %v909
        %v1400 = vpop.f32.mrb[0].mxu0
        %v1401 = vadd.f32 0.0, %v1400
        %v1402 = vpop.f32.mrb[0].mxu0
        %v1403 = vadd.f32 0.0, %v1402
        %v1404 = vpop.f32.mrb[0].mxu0
        %v1405 = vadd.f32 0.0, %v1404
        %v1406 = vpop.f32.mrb[0].mxu0
        %v1407 = vadd.f32 0.0, %v1406
        %1408 = vmatprep.mubr.bf16.mxu0 0
        %1409 = vmatmul.mubr.bf16.gmra.mrb[0].mxu0 %v910
        %v1410 = vpop.f32.mrb[0].mxu0
        %v1411 = vadd.f32 0.0, %v1410
        %v1412 = vpop.f32.mrb[0].mxu0
        %v1413 = vadd.f32 0.0, %v1412
        %v1414 = vpop.f32.mrb[0].mxu0
        %v1415 = vadd.f32 0.0, %v1414
        %v1416 = vpop.f32.mrb[0].mxu0
        %v1417 = vadd.f32 0.0, %v1416
        %1418 = vmatprep.mubr.bf16.mxu0 0
        %1419 = vmatmul.mubr.bf16.gmra.mrb[0].mxu0 %v911
        %v1420 = vpop.f32.mrb[0].mxu0
        %v1421 = vadd.f32 0.0, %v1420
        %v1422 = vpop.f32.mrb[0].mxu0
        %v1423 = vadd.f32 0.0, %v1422
        %v1424 = vpop.f32.mrb[0].mxu0
        %v1425 = vadd.f32 0.0, %v1424
        %v1426 = vpop.f32.mrb[0].mxu0
        %v1427 = vadd.f32 0.0, %v1426
        %1428 = vmatprep.mubr.bf16.mxu0 0
        %1429 = vmatmul.mubr.bf16.gmra.mrb[0].mxu0 %v912
        %v1430 = vpop.f32.mrb[0].mxu0
        %v1431 = vadd.f32 0.0, %v1430
        %v1432 = vpop.f32.mrb[0].mxu0
        %v1433 = vadd.f32 0.0, %v1432
        %v1434 = vpop.f32.mrb[0].mxu0
        %v1435 = vadd.f32 0.0, %v1434
        %v1436 = vpop.f32.mrb[0].mxu0
        %v1437 = vadd.f32 0.0, %v1436
        %1438 = vmatprep.mubr.bf16.mxu0 0
        %1439 = vmatmul.mubr.bf16.gmra.mrb[0].mxu0 %v913
        %v1440 = vpop.f32.mrb[0].mxu0
        %v1441 = vadd.f32 0.0, %v1440
        %v1442 = vpop.f32.mrb[0].mxu0
        %v1443 = vadd.f32 0.0, %v1442
        %v1444 = vpop.f32.mrb[0].mxu0
        %v1445 = vadd.f32 0.0, %v1444
        %v1446 = vpop.f32.mrb[0].mxu0
        %v1447 = vadd.f32 0.0, %v1446
        %1448 = vmatprep.mubr.bf16.mxu0 0
        %1449 = vmatmul.mubr.bf16.gmra.mrb[0].mxu0 %v914
        %v1450 = vpop.f32.mrb[0].mxu0
        %v1451 = vadd.f32 0.0, %v1450
        %v1452 = vpop.f32.mrb[0].mxu0
        %v1453 = vadd.f32 0.0, %v1452
        %v1454 = vpop.f32.mrb[0].mxu0
        %v1455 = vadd.f32 0.0, %v1454
        %v1456 = vpop.f32.mrb[0].mxu0
        %v1457 = vadd.f32 0.0, %v1456
        %1458 = vmatprep.mubr.bf16.mxu0 0
        %1459 = vmatmul.mubr.bf16.gmra.mrb[0].mxu0 %v915
        %v1460 = vpop.f32.mrb[0].mxu0
        %v1461 = vadd.f32 0.0, %v1460
        %v1462 = vpop.f32.mrb[0].mxu0
        %v1463 = vadd.f32 0.0, %v1462
        %v1464 = vpop.f32.mrb[0].mxu0
        %v1465 = vadd.f32 0.0, %v1464
        %v1466 = vpop.f32.mrb[0].mxu0
        %v1467 = vadd.f32 0.0, %v1466
        %1468 = vmatprep.mubr.bf16.mxu0 0
        %1469 = vmatmul.mubr.bf16.gmra.mrb[0].mxu0 %v916
        %v1470 = vpop.f32.mrb[0].mxu0
        %v1471 = vadd.f32 0.0, %v1470
        %v1472 = vpop.f32.mrb[0].mxu0
        %v1473 = vadd.f32 0.0, %v1472
        %v1474 = vpop.f32.mrb[0].mxu0
        %v1475 = vadd.f32 0.0, %v1474
        %v1476 = vpop.f32.mrb[0].mxu0
        %v1477 = vadd.f32 0.0, %v1476
        %1478 = vdwg.mxu0
        %v1479 = vadd.f32 %v645, %v1128
        %v1480 = vadd.f32 %v646, %v1130
        %v1481 = vadd.f32 %v647, %v1321
        %v1482 = vadd.f32 %v648, %v1323
        %v1483 = vadd.f32 %v649, %v1132
        %v1484 = vadd.f32 %v650, %v1134
        %v1485 = vadd.f32 %v651, %v1325
        %v1486 = vadd.f32 %v652, %v1327
        %v1487 = vadd.f32 %v653, %v1138
        %v1488 = vadd.f32 %v654, %v1140
        %v1489 = vadd.f32 %v655, %v1331
        %v1490 = vadd.f32 %v656, %v1333
        %v1491 = vadd.f32 %v657, %v1142
        %v1492 = vadd.f32 %v658, %v1144
        %v1493 = vadd.f32 %v659, %v1335
        %v1494 = vadd.f32 %v660, %v1337
        %v1495 = vadd.f32 %v661, %v1148
        %v1496 = vadd.f32 %v662, %v1150
        %v1497 = vadd.f32 %v663, %v1341
        %v1498 = vadd.f32 %v664, %v1343
        %v1499 = vadd.f32 %v665, %v1152
        %v1500 = vadd.f32 %v666, %v1154
        %v1501 = vadd.f32 %v667, %v1345
        %v1502 = vadd.f32 %v668, %v1347
        %v1503 = vadd.f32 %v669, %v1158
        %v1504 = vadd.f32 %v670, %v1160
        %v1505 = vadd.f32 %v671, %v1351
        %v1506 = vadd.f32 %v672, %v1353
        %v1507 = vadd.f32 %v673, %v1162
        %v1508 = vadd.f32 %v674, %v1164
        %v1509 = vadd.f32 %v675, %v1355
        %v1510 = vadd.f32 %v676, %v1357
        %v1511 = vadd.f32 %v677, %v1168
        %v1512 = vadd.f32 %v678, %v1170
        %v1513 = vadd.f32 %v679, %v1361
        %v1514 = vadd.f32 %v680, %v1363
        %v1515 = vadd.f32 %v681, %v1172
        %v1516 = vadd.f32 %v682, %v1174
        %v1517 = vadd.f32 %v683, %v1365
        %v1518 = vadd.f32 %v684, %v1367
        %v1519 = vadd.f32 %v685, %v1178
        %v1520 = vadd.f32 %v686, %v1180
        %v1521 = vadd.f32 %v687, %v1371
        %v1522 = vadd.f32 %v688, %v1373
        %v1523 = vadd.f32 %v689, %v1182
        %v1524 = vadd.f32 %v690, %v1184
        %v1525 = vadd.f32 %v691, %v1375
        %v1526 = vadd.f32 %v692, %v1377
        %v1527 = vadd.f32 %v693, %v1188
        %v1528 = vadd.f32 %v694, %v1190
        %v1529 = vadd.f32 %v695, %v1381
        %v1530 = vadd.f32 %v696, %v1383
        %v1531 = vadd.f32 %v697, %v1192
        %v1532 = vadd.f32 %v698, %v1194
        %v1533 = vadd.f32 %v699, %v1385
        %v1534 = vadd.f32 %v700, %v1387
        %v1535 = vadd.f32 %v701, %v1198
        %v1536 = vadd.f32 %v702, %v1200
        %v1537 = vadd.f32 %v703, %v1391
        %v1538 = vadd.f32 %v704, %v1393
        %v1539 = vadd.f32 %v705, %v1202
        %v1540 = vadd.f32 %v706, %v1204
        %v1541 = vadd.f32 %v707, %v1395
        %v1542 = vadd.f32 %v708, %v1397
        %v1543 = vadd.f32 %v709, %v1208
        %v1544 = vadd.f32 %v710, %v1210
        %v1545 = vadd.f32 %v711, %v1401
        %v1546 = vadd.f32 %v712, %v1403
        %v1547 = vadd.f32 %v713, %v1212
        %v1548 = vadd.f32 %v714, %v1214
        %v1549 = vadd.f32 %v715, %v1405
        %v1550 = vadd.f32 %v716, %v1407
        %v1551 = vadd.f32 %v717, %v1218
        %v1552 = vadd.f32 %v718, %v1220
        %v1553 = vadd.f32 %v719, %v1411
        %v1554 = vadd.f32 %v720, %v1413
        %v1555 = vadd.f32 %v721, %v1222
        %v1556 = vadd.f32 %v722, %v1224
        %v1557 = vadd.f32 %v723, %v1415
        %v1558 = vadd.f32 %v724, %v1417
        %v1559 = vadd.f32 %v725, %v1228
        %v1560 = vadd.f32 %v726, %v1230
        %v1561 = vadd.f32 %v727, %v1421
        %v1562 = vadd.f32 %v728, %v1423
        %v1563 = vadd.f32 %v729, %v1232
        %v1564 = vadd.f32 %v730, %v1234
        %v1565 = vadd.f32 %v731, %v1425
        %v1566 = vadd.f32 %v732, %v1427
        %v1567 = vadd.f32 %v733, %v1238
        %v1568 = vadd.f32 %v734, %v1240
        %v1569 = vadd.f32 %v735, %v1431
        %v1570 = vadd.f32 %v736, %v1433
        %v1571 = vadd.f32 %v737, %v1242
        %v1572 = vadd.f32 %v738, %v1244
        %v1573 = vadd.f32 %v739, %v1435
        %v1574 = vadd.f32 %v740, %v1437
        %v1575 = vadd.f32 %v741, %v1248
        %v1576 = vadd.f32 %v742, %v1250
        %v1577 = vadd.f32 %v743, %v1441
        %v1578 = vadd.f32 %v744, %v1443
        %v1579 = vadd.f32 %v745, %v1252
        %v1580 = vadd.f32 %v746, %v1254
        %v1581 = vadd.f32 %v747, %v1445
        %v1582 = vadd.f32 %v748, %v1447
        %v1583 = vadd.f32 %v749, %v1258
        %v1584 = vadd.f32 %v750, %v1260
        %v1585 = vadd.f32 %v751, %v1451
        %v1586 = vadd.f32 %v752, %v1453
        %v1587 = vadd.f32 %v753, %v1262
        %v1588 = vadd.f32 %v754, %v1264
        %v1589 = vadd.f32 %v755, %v1455
        %v1590 = vadd.f32 %v756, %v1457
        %v1591 = vadd.f32 %v757, %v1268
        %v1592 = vadd.f32 %v758, %v1270
        %v1593 = vadd.f32 %v759, %v1461
        %v1594 = vadd.f32 %v760, %v1463
        %v1595 = vadd.f32 %v761, %v1272
        %v1596 = vadd.f32 %v762, %v1274
        %v1597 = vadd.f32 %v763, %v1465
        %v1598 = vadd.f32 %v764, %v1467
        %v1599 = vadd.f32 %v765, %v1278
        %v1600 = vadd.f32 %v766, %v1280
        %v1601 = vadd.f32 %v767, %v1471
        %v1602 = vadd.f32 %v768, %v1473
        %v1603 = vadd.f32 %v769, %v1282
        %v1604 = vadd.f32 %v770, %v1284
        %v1605 = vadd.f32 %v771, %v1475
        %v1606 = vadd.f32 %v772, %v1477
        %1607 = vst [vmem:[#allocation2] sm:$0xff] %v1479
        %1608 = vst [vmem:[#allocation2 + $0x8] sm:$0xff] %v1480
        %1609 = vst [vmem:[#allocation2 + $0x10] sm:$0xff] %v1481
        %1610 = vst [vmem:[#allocation2 + $0x18] sm:$0xff] %v1482
        %1611 = vst [vmem:[#allocation2 + $0x20] sm:$0xff] %v1483
        %1612 = vst [vmem:[#allocation2 + $0x28] sm:$0xff] %v1484
        %1613 = vst [vmem:[#allocation2 + $0x30] sm:$0xff] %v1485
        %1614 = vst [vmem:[#allocation2 + $0x38] sm:$0xff] %v1486
        %1615 = vst [vmem:[#allocation2 + $0x40] sm:$0xff] %v1487
        %1616 = vst [vmem:[#allocation2 + $0x48] sm:$0xff] %v1488
        %1617 = vst [vmem:[#allocation2 + $0x50] sm:$0xff] %v1489
        %1618 = vst [vmem:[#allocation2 + $0x58] sm:$0xff] %v1490
        %1619 = vst [vmem:[#allocation2 + $0x60] sm:$0xff] %v1491
        %1620 = vst [vmem:[#allocation2 + $0x68] sm:$0xff] %v1492
        %1621 = vst [vmem:[#allocation2 + $0x70] sm:$0xff] %v1493
        %1622 = vst [vmem:[#allocation2 + $0x78] sm:$0xff] %v1494
        %1623 = vst [vmem:[#allocation2 + $0x80] sm:$0xff] %v1495
        %1624 = vst [vmem:[#allocation2 + $0x88] sm:$0xff] %v1496
        %1625 = vst [vmem:[#allocation2 + $0x90] sm:$0xff] %v1497
        %1626 = vst [vmem:[#allocation2 + $0x98] sm:$0xff] %v1498
        %1627 = vst [vmem:[#allocation2 + $0xa0] sm:$0xff] %v1499
        %1628 = vst [vmem:[#allocation2 + $0xa8] sm:$0xff] %v1500
        %1629 = vst [vmem:[#allocation2 + $0xb0] sm:$0xff] %v1501
        %1630 = vst [vmem:[#allocation2 + $0xb8] sm:$0xff] %v1502
        %1631 = vst [vmem:[#allocation2 + $0xc0] sm:$0xff] %v1503
        %1632 = vst [vmem:[#allocation2 + $0xc8] sm:$0xff] %v1504
        %1633 = vst [vmem:[#allocation2 + $0xd0] sm:$0xff] %v1505
        %1634 = vst [vmem:[#allocation2 + $0xd8] sm:$0xff] %v1506
        %1635 = vst [vmem:[#allocation2 + $0xe0] sm:$0xff] %v1507
        %1636 = vst [vmem:[#allocation2 + $0xe8] sm:$0xff] %v1508
        %1637 = vst [vmem:[#allocation2 + $0xf0] sm:$0xff] %v1509
        %1638 = vst [vmem:[#allocation2 + $0xf8] sm:$0xff] %v1510
        %1639 = vst [vmem:[#allocation2 + $0x100] sm:$0xff] %v1511
        %1640 = vst [vmem:[#allocation2 + $0x108] sm:$0xff] %v1512
        %1641 = vst [vmem:[#allocation2 + $0x110] sm:$0xff] %v1513
        %1642 = vst [vmem:[#allocation2 + $0x118] sm:$0xff] %v1514
        %1643 = vst [vmem:[#allocation2 + $0x120] sm:$0xff] %v1515
        %1644 = vst [vmem:[#allocation2 + $0x128] sm:$0xff] %v1516
        %1645 = vst [vmem:[#allocation2 + $0x130] sm:$0xff] %v1517
        %1646 = vst [vmem:[#allocation2 + $0x138] sm:$0xff] %v1518
        %1647 = vst [vmem:[#allocation2 + $0x140] sm:$0xff] %v1519
        %1648 = vst [vmem:[#allocation2 + $0x148] sm:$0xff] %v1520
        %1649 = vst [vmem:[#allocation2 + $0x150] sm:$0xff] %v1521
        %1650 = vst [vmem:[#allocation2 + $0x158] sm:$0xff] %v1522
        %1651 = vst [vmem:[#allocation2 + $0x160] sm:$0xff] %v1523
        %1652 = vst [vmem:[#allocation2 + $0x168] sm:$0xff] %v1524
        %1653 = vst [vmem:[#allocation2 + $0x170] sm:$0xff] %v1525
        %1654 = vst [vmem:[#allocation2 + $0x178] sm:$0xff] %v1526
        %1655 = vst [vmem:[#allocation2 + $0x180] sm:$0xff] %v1527
        %1656 = vst [vmem:[#allocation2 + $0x188] sm:$0xff] %v1528
        %1657 = vst [vmem:[#allocation2 + $0x190] sm:$0xff] %v1529
        %1658 = vst [vmem:[#allocation2 + $0x198] sm:$0xff] %v1530
        %1659 = vst [vmem:[#allocation2 + $0x1a0] sm:$0xff] %v1531
        %1660 = vst [vmem:[#allocation2 + $0x1a8] sm:$0xff] %v1532
        %1661 = vst [vmem:[#allocation2 + $0x1b0] sm:$0xff] %v1533
        %1662 = vst [vmem:[#allocation2 + $0x1b8] sm:$0xff] %v1534
        %1663 = vst [vmem:[#allocation2 + $0x1c0] sm:$0xff] %v1535
        %1664 = vst [vmem:[#allocation2 + $0x1c8] sm:$0xff] %v1536
        %1665 = vst [vmem:[#allocation2 + $0x1d0] sm:$0xff] %v1537
        %1666 = vst [vmem:[#allocation2 + $0x1d8] sm:$0xff] %v1538
        %1667 = vst [vmem:[#allocation2 + $0x1e0] sm:$0xff] %v1539
        %1668 = vst [vmem:[#allocation2 + $0x1e8] sm:$0xff] %v1540
        %1669 = vst [vmem:[#allocation2 + $0x1f0] sm:$0xff] %v1541
        %1670 = vst [vmem:[#allocation2 + $0x1f8] sm:$0xff] %v1542
        %1671 = vst [vmem:[#allocation2 + $0x200] sm:$0xff] %v1543
        %1672 = vst [vmem:[#allocation2 + $0x208] sm:$0xff] %v1544
        %1673 = vst [vmem:[#allocation2 + $0x210] sm:$0xff] %v1545
        %1674 = vst [vmem:[#allocation2 + $0x218] sm:$0xff] %v1546
        %1675 = vst [vmem:[#allocation2 + $0x220] sm:$0xff] %v1547
        %1676 = vst [vmem:[#allocation2 + $0x228] sm:$0xff] %v1548
        %1677 = vst [vmem:[#allocation2 + $0x230] sm:$0xff] %v1549
        %1678 = vst [vmem:[#allocation2 + $0x238] sm:$0xff] %v1550
        %1679 = vst [vmem:[#allocation2 + $0x240] sm:$0xff] %v1551
        %1680 = vst [vmem:[#allocation2 + $0x248] sm:$0xff] %v1552
        %1681 = vst [vmem:[#allocation2 + $0x250] sm:$0xff] %v1553
        %1682 = vst [vmem:[#allocation2 + $0x258] sm:$0xff] %v1554
        %1683 = vst [vmem:[#allocation2 + $0x260] sm:$0xff] %v1555
        %1684 = vst [vmem:[#allocation2 + $0x268] sm:$0xff] %v1556
        %1685 = vst [vmem:[#allocation2 + $0x270] sm:$0xff] %v1557
        %1686 = vst [vmem:[#allocation2 + $0x278] sm:$0xff] %v1558
        %1687 = vst [vmem:[#allocation2 + $0x280] sm:$0xff] %v1559
        %1688 = vst [vmem:[#allocation2 + $0x288] sm:$0xff] %v1560
        %1689 = vst [vmem:[#allocation2 + $0x290] sm:$0xff] %v1561
        %1690 = vst [vmem:[#allocation2 + $0x298] sm:$0xff] %v1562
        %1691 = vst [vmem:[#allocation2 + $0x2a0] sm:$0xff] %v1563
        %1692 = vst [vmem:[#allocation2 + $0x2a8] sm:$0xff] %v1564
        %1693 = vst [vmem:[#allocation2 + $0x2b0] sm:$0xff] %v1565
        %1694 = vst [vmem:[#allocation2 + $0x2b8] sm:$0xff] %v1566
        %1695 = vst [vmem:[#allocation2 + $0x2c0] sm:$0xff] %v1567
        %1696 = vst [vmem:[#allocation2 + $0x2c8] sm:$0xff] %v1568
        %1697 = vst [vmem:[#allocation2 + $0x2d0] sm:$0xff] %v1569
        %1698 = vst [vmem:[#allocation2 + $0x2d8] sm:$0xff] %v1570
        %1699 = vst [vmem:[#allocation2 + $0x2e0] sm:$0xff] %v1571
        %1700 = vst [vmem:[#allocation2 + $0x2e8] sm:$0xff] %v1572
        %1701 = vst [vmem:[#allocation2 + $0x2f0] sm:$0xff] %v1573
        %1702 = vst [vmem:[#allocation2 + $0x2f8] sm:$0xff] %v1574
        %1703 = vst [vmem:[#allocation2 + $0x300] sm:$0xff] %v1575
        %1704 = vst [vmem:[#allocation2 + $0x308] sm:$0xff] %v1576
        %1705 = vst [vmem:[#allocation2 + $0x310] sm:$0xff] %v1577
        %1706 = vst [vmem:[#allocation2 + $0x318] sm:$0xff] %v1578
        %1707 = vst [vmem:[#allocation2 + $0x320] sm:$0xff] %v1579
        %1708 = vst [vmem:[#allocation2 + $0x328] sm:$0xff] %v1580
        %1709 = vst [vmem:[#allocation2 + $0x330] sm:$0xff] %v1581
        %1710 = vst [vmem:[#allocation2 + $0x338] sm:$0xff] %v1582
        %1711 = vst [vmem:[#allocation2 + $0x340] sm:$0xff] %v1583
        %1712 = vst [vmem:[#allocation2 + $0x348] sm:$0xff] %v1584
        %1713 = vst [vmem:[#allocation2 + $0x350] sm:$0xff] %v1585
        %1714 = vst [vmem:[#allocation2 + $0x358] sm:$0xff] %v1586
        %1715 = vst [vmem:[#allocation2 + $0x360] sm:$0xff] %v1587
        %1716 = vst [vmem:[#allocation2 + $0x368] sm:$0xff] %v1588
        %1717 = vst [vmem:[#allocation2 + $0x370] sm:$0xff] %v1589
        %1718 = vst [vmem:[#allocation2 + $0x378] sm:$0xff] %v1590
        %1719 = vst [vmem:[#allocation2 + $0x380] sm:$0xff] %v1591
        %1720 = vst [vmem:[#allocation2 + $0x388] sm:$0xff] %v1592
        %1721 = vst [vmem:[#allocation2 + $0x390] sm:$0xff] %v1593
        %1722 = vst [vmem:[#allocation2 + $0x398] sm:$0xff] %v1594
        %1723 = vst [vmem:[#allocation2 + $0x3a0] sm:$0xff] %v1595
        %1724 = vst [vmem:[#allocation2 + $0x3a8] sm:$0xff] %v1596
        %1725 = vst [vmem:[#allocation2 + $0x3b0] sm:$0xff] %v1597
        %1726 = vst [vmem:[#allocation2 + $0x3b8] sm:$0xff] %v1598
        %1727 = vst [vmem:[#allocation2 + $0x3c0] sm:$0xff] %v1599
        %1728 = vst [vmem:[#allocation2 + $0x3c8] sm:$0xff] %v1600
        %1729 = vst [vmem:[#allocation2 + $0x3d0] sm:$0xff] %v1601
        %1730 = vst [vmem:[#allocation2 + $0x3d8] sm:$0xff] %v1602
        %1731 = vst [vmem:[#allocation2 + $0x3e0] sm:$0xff] %v1603
        %1732 = vst [vmem:[#allocation2 + $0x3e8] sm:$0xff] %v1604
        %1733 = vst [vmem:[#allocation2 + $0x3f0] sm:$0xff] %v1605
        %1734 = vst [vmem:[#allocation2 + $0x3f8] sm:$0xff] %v1606
        %p1735 = scmp.eq.s32.totalorder %s36, 1
        // Predicated region
        $region89: #{tpu_custom_call.1} parent=63 // pred_check
          %p1736 = pneg %p1735
        $region90: #{tpu_custom_call.1} parent=63 // pred_check_branch
          %1738 = sbr.rel (%p1736) target = $region92
        $region91: #{tpu_custom_call.1} parent=63 // pred_region
          %v1739 = vld [vmem:[#allocation2] sm:$0xff]
          %v1740 = vld [vmem:[#allocation2 + $0x8] sm:$0xff]
          %v1741 = vld [vmem:[#allocation2 + $0x10] sm:$0xff]
          %v1742 = vld [vmem:[#allocation2 + $0x18] sm:$0xff]
          %v1743 = vld [vmem:[#allocation2 + $0x20] sm:$0xff]
          %v1744 = vld [vmem:[#allocation2 + $0x28] sm:$0xff]
          %v1745 = vld [vmem:[#allocation2 + $0x30] sm:$0xff]
          %v1746 = vld [vmem:[#allocation2 + $0x38] sm:$0xff]
          %v1747 = vld [vmem:[#allocation2 + $0x40] sm:$0xff]
          %v1748 = vld [vmem:[#allocation2 + $0x48] sm:$0xff]
          %v1749 = vld [vmem:[#allocation2 + $0x50] sm:$0xff]
          %v1750 = vld [vmem:[#allocation2 + $0x58] sm:$0xff]
          %v1751 = vld [vmem:[#allocation2 + $0x60] sm:$0xff]
          %v1752 = vld [vmem:[#allocation2 + $0x68] sm:$0xff]
          %v1753 = vld [vmem:[#allocation2 + $0x70] sm:$0xff]
          %v1754 = vld [vmem:[#allocation2 + $0x78] sm:$0xff]
          %v1755 = vld [vmem:[#allocation2 + $0x80] sm:$0xff]
          %v1756 = vld [vmem:[#allocation2 + $0x88] sm:$0xff]
          %v1757 = vld [vmem:[#allocation2 + $0x90] sm:$0xff]
          %v1758 = vld [vmem:[#allocation2 + $0x98] sm:$0xff]
          %v1759 = vld [vmem:[#allocation2 + $0xa0] sm:$0xff]
          %v1760 = vld [vmem:[#allocation2 + $0xa8] sm:$0xff]
          %v1761 = vld [vmem:[#allocation2 + $0xb0] sm:$0xff]
          %v1762 = vld [vmem:[#allocation2 + $0xb8] sm:$0xff]
          %v1763 = vld [vmem:[#allocation2 + $0xc0] sm:$0xff]
          %v1764 = vld [vmem:[#allocation2 + $0xc8] sm:$0xff]
          %v1765 = vld [vmem:[#allocation2 + $0xd0] sm:$0xff]
          %v1766 = vld [vmem:[#allocation2 + $0xd8] sm:$0xff]
          %v1767 = vld [vmem:[#allocation2 + $0xe0] sm:$0xff]
          %v1768 = vld [vmem:[#allocation2 + $0xe8] sm:$0xff]
          %v1769 = vld [vmem:[#allocation2 + $0xf0] sm:$0xff]
          %v1770 = vld [vmem:[#allocation2 + $0xf8] sm:$0xff]
          %v1771 = vld [vmem:[#allocation2 + $0x100] sm:$0xff]
          %v1772 = vld [vmem:[#allocation2 + $0x108] sm:$0xff]
          %v1773 = vld [vmem:[#allocation2 + $0x110] sm:$0xff]
          %v1774 = vld [vmem:[#allocation2 + $0x118] sm:$0xff]
          %v1775 = vld [vmem:[#allocation2 + $0x120] sm:$0xff]
          %v1776 = vld [vmem:[#allocation2 + $0x128] sm:$0xff]
          %v1777 = vld [vmem:[#allocation2 + $0x130] sm:$0xff]
          %v1778 = vld [vmem:[#allocation2 + $0x138] sm:$0xff]
          %v1779 = vld [vmem:[#allocation2 + $0x140] sm:$0xff]
          %v1780 = vld [vmem:[#allocation2 + $0x148] sm:$0xff]
          %v1781 = vld [vmem:[#allocation2 + $0x150] sm:$0xff]
          %v1782 = vld [vmem:[#allocation2 + $0x158] sm:$0xff]
          %v1783 = vld [vmem:[#allocation2 + $0x160] sm:$0xff]
          %v1784 = vld [vmem:[#allocation2 + $0x168] sm:$0xff]
          %v1785 = vld [vmem:[#allocation2 + $0x170] sm:$0xff]
          %v1786 = vld [vmem:[#allocation2 + $0x178] sm:$0xff]
          %v1787 = vld [vmem:[#allocation2 + $0x180] sm:$0xff]
          %v1788 = vld [vmem:[#allocation2 + $0x188] sm:$0xff]
          %v1789 = vld [vmem:[#allocation2 + $0x190] sm:$0xff]
          %v1790 = vld [vmem:[#allocation2 + $0x198] sm:$0xff]
          %v1791 = vld [vmem:[#allocation2 + $0x1a0] sm:$0xff]
          %v1792 = vld [vmem:[#allocation2 + $0x1a8] sm:$0xff]
          %v1793 = vld [vmem:[#allocation2 + $0x1b0] sm:$0xff]
          %v1794 = vld [vmem:[#allocation2 + $0x1b8] sm:$0xff]
          %v1795 = vld [vmem:[#allocation2 + $0x1c0] sm:$0xff]
          %v1796 = vld [vmem:[#allocation2 + $0x1c8] sm:$0xff]
          %v1797 = vld [vmem:[#allocation2 + $0x1d0] sm:$0xff]
          %v1798 = vld [vmem:[#allocation2 + $0x1d8] sm:$0xff]
          %v1799 = vld [vmem:[#allocation2 + $0x1e0] sm:$0xff]
          %v1800 = vld [vmem:[#allocation2 + $0x1e8] sm:$0xff]
          %v1801 = vld [vmem:[#allocation2 + $0x1f0] sm:$0xff]
          %v1802 = vld [vmem:[#allocation2 + $0x1f8] sm:$0xff]
          %v1803 = vld [vmem:[#allocation2 + $0x200] sm:$0xff]
          %v1804 = vld [vmem:[#allocation2 + $0x208] sm:$0xff]
          %v1805 = vld [vmem:[#allocation2 + $0x210] sm:$0xff]
          %v1806 = vld [vmem:[#allocation2 + $0x218] sm:$0xff]
          %v1807 = vld [vmem:[#allocation2 + $0x220] sm:$0xff]
          %v1808 = vld [vmem:[#allocation2 + $0x228] sm:$0xff]
          %v1809 = vld [vmem:[#allocation2 + $0x230] sm:$0xff]
          %v1810 = vld [vmem:[#allocation2 + $0x238] sm:$0xff]
          %v1811 = vld [vmem:[#allocation2 + $0x240] sm:$0xff]
          %v1812 = vld [vmem:[#allocation2 + $0x248] sm:$0xff]
          %v1813 = vld [vmem:[#allocation2 + $0x250] sm:$0xff]
          %v1814 = vld [vmem:[#allocation2 + $0x258] sm:$0xff]
          %v1815 = vld [vmem:[#allocation2 + $0x260] sm:$0xff]
          %v1816 = vld [vmem:[#allocation2 + $0x268] sm:$0xff]
          %v1817 = vld [vmem:[#allocation2 + $0x270] sm:$0xff]
          %v1818 = vld [vmem:[#allocation2 + $0x278] sm:$0xff]
          %v1819 = vld [vmem:[#allocation2 + $0x280] sm:$0xff]
          %v1820 = vld [vmem:[#allocation2 + $0x288] sm:$0xff]
          %v1821 = vld [vmem:[#allocation2 + $0x290] sm:$0xff]
          %v1822 = vld [vmem:[#allocation2 + $0x298] sm:$0xff]
          %v1823 = vld [vmem:[#allocation2 + $0x2a0] sm:$0xff]
          %v1824 = vld [vmem:[#allocation2 + $0x2a8] sm:$0xff]
          %v1825 = vld [vmem:[#allocation2 + $0x2b0] sm:$0xff]
          %v1826 = vld [vmem:[#allocation2 + $0x2b8] sm:$0xff]
          %v1827 = vld [vmem:[#allocation2 + $0x2c0] sm:$0xff]
          %v1828 = vld [vmem:[#allocation2 + $0x2c8] sm:$0xff]
          %v1829 = vld [vmem:[#allocation2 + $0x2d0] sm:$0xff]
          %v1830 = vld [vmem:[#allocation2 + $0x2d8] sm:$0xff]
          %v1831 = vld [vmem:[#allocation2 + $0x2e0] sm:$0xff]
          %v1832 = vld [vmem:[#allocation2 + $0x2e8] sm:$0xff]
          %v1833 = vld [vmem:[#allocation2 + $0x2f0] sm:$0xff]
          %v1834 = vld [vmem:[#allocation2 + $0x2f8] sm:$0xff]
          %v1835 = vld [vmem:[#allocation2 + $0x300] sm:$0xff]
          %v1836 = vld [vmem:[#allocation2 + $0x308] sm:$0xff]
          %v1837 = vld [vmem:[#allocation2 + $0x310] sm:$0xff]
          %v1838 = vld [vmem:[#allocation2 + $0x318] sm:$0xff]
          %v1839 = vld [vmem:[#allocation2 + $0x320] sm:$0xff]
          %v1840 = vld [vmem:[#allocation2 + $0x328] sm:$0xff]
          %v1841 = vld [vmem:[#allocation2 + $0x330] sm:$0xff]
          %v1842 = vld [vmem:[#allocation2 + $0x338] sm:$0xff]
          %v1843 = vld [vmem:[#allocation2 + $0x340] sm:$0xff]
          %v1844 = vld [vmem:[#allocation2 + $0x348] sm:$0xff]
          %v1845 = vld [vmem:[#allocation2 + $0x350] sm:$0xff]
          %v1846 = vld [vmem:[#allocation2 + $0x358] sm:$0xff]
          %v1847 = vld [vmem:[#allocation2 + $0x360] sm:$0xff]
          %v1848 = vld [vmem:[#allocation2 + $0x368] sm:$0xff]
          %v1849 = vld [vmem:[#allocation2 + $0x370] sm:$0xff]
          %v1850 = vld [vmem:[#allocation2 + $0x378] sm:$0xff]
          %v1851 = vld [vmem:[#allocation2 + $0x380] sm:$0xff]
          %v1852 = vld [vmem:[#allocation2 + $0x388] sm:$0xff]
          %v1853 = vld [vmem:[#allocation2 + $0x390] sm:$0xff]
          %v1854 = vld [vmem:[#allocation2 + $0x398] sm:$0xff]
          %v1855 = vld [vmem:[#allocation2 + $0x3a0] sm:$0xff]
          %v1856 = vld [vmem:[#allocation2 + $0x3a8] sm:$0xff]
          %v1857 = vld [vmem:[#allocation2 + $0x3b0] sm:$0xff]
          %v1858 = vld [vmem:[#allocation2 + $0x3b8] sm:$0xff]
          %v1859 = vld [vmem:[#allocation2 + $0x3c0] sm:$0xff]
          %v1860 = vld [vmem:[#allocation2 + $0x3c8] sm:$0xff]
          %v1861 = vld [vmem:[#allocation2 + $0x3d0] sm:$0xff]
          %v1862 = vld [vmem:[#allocation2 + $0x3d8] sm:$0xff]
          %v1863 = vld [vmem:[#allocation2 + $0x3e0] sm:$0xff]
          %v1864 = vld [vmem:[#allocation2 + $0x3e8] sm:$0xff]
          %v1865 = vld [vmem:[#allocation2 + $0x3f0] sm:$0xff]
          %v1866 = vld [vmem:[#allocation2 + $0x3f8] sm:$0xff]
          %v1867 = vld [vmem:[%s2] sm:$0xf]
          %v1869 = vlaneseq
          %v1870 = vshrl.u32 %v1869, 7
          %v1871 = vsub.s32 0, %v1870
          %v1872 = vrot.slane %v1867, %v1871
          %v1873 = vlaneseq
          %v1874 = vshrl.u32 %v1873, 7
          %v1875 = vsub.s32 1, %v1874
          %v1876 = vrot.slane %v1867, %v1875
          %v1877 = vlaneseq
          %v1878 = vshrl.u32 %v1877, 7
          %v1879 = vsub.s32 2, %v1878
          %v1880 = vrot.slane %v1867, %v1879
          %v1881 = vlaneseq
          %v1882 = vshrl.u32 %v1881, 7
          %v1883 = vsub.s32 3, %v1882
          %v1884 = vrot.slane %v1867, %v1883
          %v1889 = vadd.f32 %v1739, %v1872
          %v1890 = vadd.f32 %v1740, %v1876
          %v1891 = vadd.f32 %v1741, %v1880
          %v1892 = vadd.f32 %v1742, %v1884
          %v1893 = vadd.f32 %v1743, %v1872
          %v1894 = vadd.f32 %v1744, %v1876
          %v1895 = vadd.f32 %v1745, %v1880
          %v1896 = vadd.f32 %v1746, %v1884
          %v1897 = vadd.f32 %v1747, %v1872
          %v1898 = vadd.f32 %v1748, %v1876
          %v1899 = vadd.f32 %v1749, %v1880
          %v1900 = vadd.f32 %v1750, %v1884
          %v1901 = vadd.f32 %v1751, %v1872
          %v1902 = vadd.f32 %v1752, %v1876
          %v1903 = vadd.f32 %v1753, %v1880
          %v1904 = vadd.f32 %v1754, %v1884
          %v1905 = vadd.f32 %v1755, %v1872
          %v1906 = vadd.f32 %v1756, %v1876
          %v1907 = vadd.f32 %v1757, %v1880
          %v1908 = vadd.f32 %v1758, %v1884
          %v1909 = vadd.f32 %v1759, %v1872
          %v1910 = vadd.f32 %v1760, %v1876
          %v1911 = vadd.f32 %v1761, %v1880
          %v1912 = vadd.f32 %v1762, %v1884
          %v1913 = vadd.f32 %v1763, %v1872
          %v1914 = vadd.f32 %v1764, %v1876
          %v1915 = vadd.f32 %v1765, %v1880
          %v1916 = vadd.f32 %v1766, %v1884
          %v1917 = vadd.f32 %v1767, %v1872
          %v1918 = vadd.f32 %v1768, %v1876
          %v1919 = vadd.f32 %v1769, %v1880
          %v1920 = vadd.f32 %v1770, %v1884
          %v1921 = vadd.f32 %v1771, %v1872
          %v1922 = vadd.f32 %v1772, %v1876
          %v1923 = vadd.f32 %v1773, %v1880
          %v1924 = vadd.f32 %v1774, %v1884
          %v1925 = vadd.f32 %v1775, %v1872
          %v1926 = vadd.f32 %v1776, %v1876
          %v1927 = vadd.f32 %v1777, %v1880
          %v1928 = vadd.f32 %v1778, %v1884
          %v1929 = vadd.f32 %v1779, %v1872
          %v1930 = vadd.f32 %v1780, %v1876
          %v1931 = vadd.f32 %v1781, %v1880
          %v1932 = vadd.f32 %v1782, %v1884
          %v1933 = vadd.f32 %v1783, %v1872
          %v1934 = vadd.f32 %v1784, %v1876
          %v1935 = vadd.f32 %v1785, %v1880
          %v1936 = vadd.f32 %v1786, %v1884
          %v1937 = vadd.f32 %v1787, %v1872
          %v1938 = vadd.f32 %v1788, %v1876
          %v1939 = vadd.f32 %v1789, %v1880
          %v1940 = vadd.f32 %v1790, %v1884
          %v1941 = vadd.f32 %v1791, %v1872
          %v1942 = vadd.f32 %v1792, %v1876
          %v1943 = vadd.f32 %v1793, %v1880
          %v1944 = vadd.f32 %v1794, %v1884
          %v1945 = vadd.f32 %v1795, %v1872
          %v1946 = vadd.f32 %v1796, %v1876
          %v1947 = vadd.f32 %v1797, %v1880
          %v1948 = vadd.f32 %v1798, %v1884
          %v1949 = vadd.f32 %v1799, %v1872
          %v1950 = vadd.f32 %v1800, %v1876
          %v1951 = vadd.f32 %v1801, %v1880
          %v1952 = vadd.f32 %v1802, %v1884
          %v1953 = vadd.f32 %v1803, %v1872
          %v1954 = vadd.f32 %v1804, %v1876
          %v1955 = vadd.f32 %v1805, %v1880
          %v1956 = vadd.f32 %v1806, %v1884
          %v1957 = vadd.f32 %v1807, %v1872
          %v1958 = vadd.f32 %v1808, %v1876
          %v1959 = vadd.f32 %v1809, %v1880
          %v1960 = vadd.f32 %v1810, %v1884
          %v1961 = vadd.f32 %v1811, %v1872
          %v1962 = vadd.f32 %v1812, %v1876
          %v1963 = vadd.f32 %v1813, %v1880
          %v1964 = vadd.f32 %v1814, %v1884
          %v1965 = vadd.f32 %v1815, %v1872
          %v1966 = vadd.f32 %v1816, %v1876
          %v1967 = vadd.f32 %v1817, %v1880
          %v1968 = vadd.f32 %v1818, %v1884
          %v1969 = vadd.f32 %v1819, %v1872
          %v1970 = vadd.f32 %v1820, %v1876
          %v1971 = vadd.f32 %v1821, %v1880
          %v1972 = vadd.f32 %v1822, %v1884
          %v1973 = vadd.f32 %v1823, %v1872
          %v1974 = vadd.f32 %v1824, %v1876
          %v1975 = vadd.f32 %v1825, %v1880
          %v1976 = vadd.f32 %v1826, %v1884
          %v1977 = vadd.f32 %v1827, %v1872
          %v1978 = vadd.f32 %v1828, %v1876
          %v1979 = vadd.f32 %v1829, %v1880
          %v1980 = vadd.f32 %v1830, %v1884
          %v1981 = vadd.f32 %v1831, %v1872
          %v1982 = vadd.f32 %v1832, %v1876
          %v1983 = vadd.f32 %v1833, %v1880
          %v1984 = vadd.f32 %v1834, %v1884
          %v1985 = vadd.f32 %v1835, %v1872
          %v1986 = vadd.f32 %v1836, %v1876
          %v1987 = vadd.f32 %v1837, %v1880
          %v1988 = vadd.f32 %v1838, %v1884
          %v1989 = vadd.f32 %v1839, %v1872
          %v1990 = vadd.f32 %v1840, %v1876
          %v1991 = vadd.f32 %v1841, %v1880
          %v1992 = vadd.f32 %v1842, %v1884
          %v1993 = vadd.f32 %v1843, %v1872
          %v1994 = vadd.f32 %v1844, %v1876
          %v1995 = vadd.f32 %v1845, %v1880
          %v1996 = vadd.f32 %v1846, %v1884
          %v1997 = vadd.f32 %v1847, %v1872
          %v1998 = vadd.f32 %v1848, %v1876
          %v1999 = vadd.f32 %v1849, %v1880
          %v2000 = vadd.f32 %v1850, %v1884
          %v2001 = vadd.f32 %v1851, %v1872
          %v2002 = vadd.f32 %v1852, %v1876
          %v2003 = vadd.f32 %v1853, %v1880
          %v2004 = vadd.f32 %v1854, %v1884
          %v2005 = vadd.f32 %v1855, %v1872
          %v2006 = vadd.f32 %v1856, %v1876
          %v2007 = vadd.f32 %v1857, %v1880
          %v2008 = vadd.f32 %v1858, %v1884
          %v2009 = vadd.f32 %v1859, %v1872
          %v2010 = vadd.f32 %v1860, %v1876
          %v2011 = vadd.f32 %v1861, %v1880
          %v2012 = vadd.f32 %v1862, %v1884
          %v2013 = vadd.f32 %v1863, %v1872
          %v2014 = vadd.f32 %v1864, %v1876
          %v2015 = vadd.f32 %v1865, %v1880
          %v2016 = vadd.f32 %v1866, %v1884
          %v2017 = vmax.f32 %v1889, 0.0
          %v2018 = vmax.f32 %v1890, 0.0
          %v2019 = vmax.f32 %v1891, 0.0
          %v2020 = vmax.f32 %v1892, 0.0
          %v2021 = vmax.f32 %v1893, 0.0
          %v2022 = vmax.f32 %v1894, 0.0
          %v2023 = vmax.f32 %v1895, 0.0
          %v2024 = vmax.f32 %v1896, 0.0
          %v2025 = vmax.f32 %v1897, 0.0
          %v2026 = vmax.f32 %v1898, 0.0
          %v2027 = vmax.f32 %v1899, 0.0
          %v2028 = vmax.f32 %v1900, 0.0
          %v2029 = vmax.f32 %v1901, 0.0
          %v2030 = vmax.f32 %v1902, 0.0
          %v2031 = vmax.f32 %v1903, 0.0
          %v2032 = vmax.f32 %v1904, 0.0
          %v2033 = vmax.f32 %v1905, 0.0
          %v2034 = vmax.f32 %v1906, 0.0
          %v2035 = vmax.f32 %v1907, 0.0
          %v2036 = vmax.f32 %v1908, 0.0
          %v2037 = vmax.f32 %v1909, 0.0
          %v2038 = vmax.f32 %v1910, 0.0
          %v2039 = vmax.f32 %v1911, 0.0
          %v2040 = vmax.f32 %v1912, 0.0
          %v2041 = vmax.f32 %v1913, 0.0
          %v2042 = vmax.f32 %v1914, 0.0
          %v2043 = vmax.f32 %v1915, 0.0
          %v2044 = vmax.f32 %v1916, 0.0
          %v2045 = vmax.f32 %v1917, 0.0
          %v2046 = vmax.f32 %v1918, 0.0
          %v2047 = vmax.f32 %v1919, 0.0
          %v2048 = vmax.f32 %v1920, 0.0
          %v2049 = vmax.f32 %v1921, 0.0
          %v2050 = vmax.f32 %v1922, 0.0
          %v2051 = vmax.f32 %v1923, 0.0
          %v2052 = vmax.f32 %v1924, 0.0
          %v2053 = vmax.f32 %v1925, 0.0
          %v2054 = vmax.f32 %v1926, 0.0
          %v2055 = vmax.f32 %v1927, 0.0
          %v2056 = vmax.f32 %v1928, 0.0
          %v2057 = vmax.f32 %v1929, 0.0
          %v2058 = vmax.f32 %v1930, 0.0
          %v2059 = vmax.f32 %v1931, 0.0
          %v2060 = vmax.f32 %v1932, 0.0
          %v2061 = vmax.f32 %v1933, 0.0
          %v2062 = vmax.f32 %v1934, 0.0
          %v2063 = vmax.f32 %v1935, 0.0
          %v2064 = vmax.f32 %v1936, 0.0
          %v2065 = vmax.f32 %v1937, 0.0
          %v2066 = vmax.f32 %v1938, 0.0
          %v2067 = vmax.f32 %v1939, 0.0
          %v2068 = vmax.f32 %v1940, 0.0
          %v2069 = vmax.f32 %v1941, 0.0
          %v2070 = vmax.f32 %v1942, 0.0
          %v2071 = vmax.f32 %v1943, 0.0
          %v2072 = vmax.f32 %v1944, 0.0
          %v2073 = vmax.f32 %v1945, 0.0
          %v2074 = vmax.f32 %v1946, 0.0
          %v2075 = vmax.f32 %v1947, 0.0
          %v2076 = vmax.f32 %v1948, 0.0
          %v2077 = vmax.f32 %v1949, 0.0
          %v2078 = vmax.f32 %v1950, 0.0
          %v2079 = vmax.f32 %v1951, 0.0
          %v2080 = vmax.f32 %v1952, 0.0
          %v2081 = vmax.f32 %v1953, 0.0
          %v2082 = vmax.f32 %v1954, 0.0
          %v2083 = vmax.f32 %v1955, 0.0
          %v2084 = vmax.f32 %v1956, 0.0
          %v2085 = vmax.f32 %v1957, 0.0
          %v2086 = vmax.f32 %v1958, 0.0
          %v2087 = vmax.f32 %v1959, 0.0
          %v2088 = vmax.f32 %v1960, 0.0
          %v2089 = vmax.f32 %v1961, 0.0
          %v2090 = vmax.f32 %v1962, 0.0
          %v2091 = vmax.f32 %v1963, 0.0
          %v2092 = vmax.f32 %v1964, 0.0
          %v2093 = vmax.f32 %v1965, 0.0
          %v2094 = vmax.f32 %v1966, 0.0
          %v2095 = vmax.f32 %v1967, 0.0
          %v2096 = vmax.f32 %v1968, 0.0
          %v2097 = vmax.f32 %v1969, 0.0
          %v2098 = vmax.f32 %v1970, 0.0
          %v2099 = vmax.f32 %v1971, 0.0
          %v2100 = vmax.f32 %v1972, 0.0
          %v2101 = vmax.f32 %v1973, 0.0
          %v2102 = vmax.f32 %v1974, 0.0
          %v2103 = vmax.f32 %v1975, 0.0
          %v2104 = vmax.f32 %v1976, 0.0
          %v2105 = vmax.f32 %v1977, 0.0
          %v2106 = vmax.f32 %v1978, 0.0
          %v2107 = vmax.f32 %v1979, 0.0
          %v2108 = vmax.f32 %v1980, 0.0
          %v2109 = vmax.f32 %v1981, 0.0
          %v2110 = vmax.f32 %v1982, 0.0
          %v2111 = vmax.f32 %v1983, 0.0
          %v2112 = vmax.f32 %v1984, 0.0
          %v2113 = vmax.f32 %v1985, 0.0
          %v2114 = vmax.f32 %v1986, 0.0
          %v2115 = vmax.f32 %v1987, 0.0
          %v2116 = vmax.f32 %v1988, 0.0
          %v2117 = vmax.f32 %v1989, 0.0
          %v2118 = vmax.f32 %v1990, 0.0
          %v2119 = vmax.f32 %v1991, 0.0
          %v2120 = vmax.f32 %v1992, 0.0
          %v2121 = vmax.f32 %v1993, 0.0
          %v2122 = vmax.f32 %v1994, 0.0
          %v2123 = vmax.f32 %v1995, 0.0
          %v2124 = vmax.f32 %v1996, 0.0
          %v2125 = vmax.f32 %v1997, 0.0
          %v2126 = vmax.f32 %v1998, 0.0
          %v2127 = vmax.f32 %v1999, 0.0
          %v2128 = vmax.f32 %v2000, 0.0
          %v2129 = vmax.f32 %v2001, 0.0
          %v2130 = vmax.f32 %v2002, 0.0
          %v2131 = vmax.f32 %v2003, 0.0
          %v2132 = vmax.f32 %v2004, 0.0
          %v2133 = vmax.f32 %v2005, 0.0
          %v2134 = vmax.f32 %v2006, 0.0
          %v2135 = vmax.f32 %v2007, 0.0
          %v2136 = vmax.f32 %v2008, 0.0
          %v2137 = vmax.f32 %v2009, 0.0
          %v2138 = vmax.f32 %v2010, 0.0
          %v2139 = vmax.f32 %v2011, 0.0
          %v2140 = vmax.f32 %v2012, 0.0
          %v2141 = vmax.f32 %v2013, 0.0
          %v2142 = vmax.f32 %v2014, 0.0
          %v2143 = vmax.f32 %v2015, 0.0
          %v2144 = vmax.f32 %v2016, 0.0
          %v2145 = vpack.c.bf16 %v2021, %v2017
          %v2146 = vpack.c.bf16 %v2022, %v2018
          %v2147 = vpack.c.bf16 %v2023, %v2019
          %v2148 = vpack.c.bf16 %v2024, %v2020
          %v2149 = vpack.c.bf16 %v2029, %v2025
          %v2150 = vpack.c.bf16 %v2030, %v2026
          %v2151 = vpack.c.bf16 %v2031, %v2027
          %v2152 = vpack.c.bf16 %v2032, %v2028
          %v2153 = vpack.c.bf16 %v2037, %v2033
          %v2154 = vpack.c.bf16 %v2038, %v2034
          %v2155 = vpack.c.bf16 %v2039, %v2035
          %v2156 = vpack.c.bf16 %v2040, %v2036
          %v2157 = vpack.c.bf16 %v2045, %v2041
          %v2158 = vpack.c.bf16 %v2046, %v2042
          %v2159 = vpack.c.bf16 %v2047, %v2043
          %v2160 = vpack.c.bf16 %v2048, %v2044
          %v2161 = vpack.c.bf16 %v2053, %v2049
          %v2162 = vpack.c.bf16 %v2054, %v2050
          %v2163 = vpack.c.bf16 %v2055, %v2051
          %v2164 = vpack.c.bf16 %v2056, %v2052
          %v2165 = vpack.c.bf16 %v2061, %v2057
          %v2166 = vpack.c.bf16 %v2062, %v2058
          %v2167 = vpack.c.bf16 %v2063, %v2059
          %v2168 = vpack.c.bf16 %v2064, %v2060
          %v2169 = vpack.c.bf16 %v2069, %v2065
          %v2170 = vpack.c.bf16 %v2070, %v2066
          %v2171 = vpack.c.bf16 %v2071, %v2067
          %v2172 = vpack.c.bf16 %v2072, %v2068
          %v2173 = vpack.c.bf16 %v2077, %v2073
          %v2174 = vpack.c.bf16 %v2078, %v2074
          %v2175 = vpack.c.bf16 %v2079, %v2075
          %v2176 = vpack.c.bf16 %v2080, %v2076
          %v2177 = vpack.c.bf16 %v2085, %v2081
          %v2178 = vpack.c.bf16 %v2086, %v2082
          %v2179 = vpack.c.bf16 %v2087, %v2083
          %v2180 = vpack.c.bf16 %v2088, %v2084
          %v2181 = vpack.c.bf16 %v2093, %v2089
          %v2182 = vpack.c.bf16 %v2094, %v2090
          %v2183 = vpack.c.bf16 %v2095, %v2091
          %v2184 = vpack.c.bf16 %v2096, %v2092
          %v2185 = vpack.c.bf16 %v2101, %v2097
          %v2186 = vpack.c.bf16 %v2102, %v2098
          %v2187 = vpack.c.bf16 %v2103, %v2099
          %v2188 = vpack.c.bf16 %v2104, %v2100
          %v2189 = vpack.c.bf16 %v2109, %v2105
          %v2190 = vpack.c.bf16 %v2110, %v2106
          %v2191 = vpack.c.bf16 %v2111, %v2107
          %v2192 = vpack.c.bf16 %v2112, %v2108
          %v2193 = vpack.c.bf16 %v2117, %v2113
          %v2194 = vpack.c.bf16 %v2118, %v2114
          %v2195 = vpack.c.bf16 %v2119, %v2115
          %v2196 = vpack.c.bf16 %v2120, %v2116
          %v2197 = vpack.c.bf16 %v2125, %v2121
          %v2198 = vpack.c.bf16 %v2126, %v2122
          %v2199 = vpack.c.bf16 %v2127, %v2123
          %v2200 = vpack.c.bf16 %v2128, %v2124
          %v2201 = vpack.c.bf16 %v2133, %v2129
          %v2202 = vpack.c.bf16 %v2134, %v2130
          %v2203 = vpack.c.bf16 %v2135, %v2131
          %v2204 = vpack.c.bf16 %v2136, %v2132
          %v2205 = vpack.c.bf16 %v2141, %v2137
          %v2206 = vpack.c.bf16 %v2142, %v2138
          %v2207 = vpack.c.bf16 %v2143, %v2139
          %v2208 = vpack.c.bf16 %v2144, %v2140
          %v2209 = vld [vmem:[#allocation8] sm:$0xff]
          %v2210 = vld [vmem:[#allocation8 + $0x8] sm:$0xff]
          %v2211 = vld [vmem:[#allocation8 + $0x10] sm:$0xff]
          %v2212 = vld [vmem:[#allocation8 + $0x18] sm:$0xff]
          %v2213 = vld [vmem:[#allocation8 + $0x20] sm:$0xff]
          %v2214 = vld [vmem:[#allocation8 + $0x28] sm:$0xff]
          %v2215 = vld [vmem:[#allocation8 + $0x30] sm:$0xff]
          %v2216 = vld [vmem:[#allocation8 + $0x38] sm:$0xff]
          %v2217 = vld [vmem:[#allocation8 + $0x40] sm:$0xff]
          %v2218 = vld [vmem:[#allocation8 + $0x48] sm:$0xff]
          %v2219 = vld [vmem:[#allocation8 + $0x50] sm:$0xff]
          %v2220 = vld [vmem:[#allocation8 + $0x58] sm:$0xff]
          %v2221 = vld [vmem:[#allocation8 + $0x60] sm:$0xff]
          %v2222 = vld [vmem:[#allocation8 + $0x68] sm:$0xff]
          %v2223 = vld [vmem:[#allocation8 + $0x70] sm:$0xff]
          %v2224 = vld [vmem:[#allocation8 + $0x78] sm:$0xff]
          %v2225 = vld [vmem:[#allocation8 + $0x80] sm:$0xff]
          %v2226 = vld [vmem:[#allocation8 + $0x88] sm:$0xff]
          %v2227 = vld [vmem:[#allocation8 + $0x90] sm:$0xff]
          %v2228 = vld [vmem:[#allocation8 + $0x98] sm:$0xff]
          %v2229 = vld [vmem:[#allocation8 + $0xa0] sm:$0xff]
          %v2230 = vld [vmem:[#allocation8 + $0xa8] sm:$0xff]
          %v2231 = vld [vmem:[#allocation8 + $0xb0] sm:$0xff]
          %v2232 = vld [vmem:[#allocation8 + $0xb8] sm:$0xff]
          %v2233 = vld [vmem:[#allocation8 + $0xc0] sm:$0xff]
          %v2234 = vld [vmem:[#allocation8 + $0xc8] sm:$0xff]
          %v2235 = vld [vmem:[#allocation8 + $0xd0] sm:$0xff]
          %v2236 = vld [vmem:[#allocation8 + $0xd8] sm:$0xff]
          %v2237 = vld [vmem:[#allocation8 + $0xe0] sm:$0xff]
          %v2238 = vld [vmem:[#allocation8 + $0xe8] sm:$0xff]
          %v2239 = vld [vmem:[#allocation8 + $0xf0] sm:$0xff]
          %v2240 = vld [vmem:[#allocation8 + $0xf8] sm:$0xff]
          %v2241 = vld [vmem:[#allocation8 + $0x100] sm:$0xff]
          %v2242 = vld [vmem:[#allocation8 + $0x108] sm:$0xff]
          %v2243 = vld [vmem:[#allocation8 + $0x110] sm:$0xff]
          %v2244 = vld [vmem:[#allocation8 + $0x118] sm:$0xff]
          %v2245 = vld [vmem:[#allocation8 + $0x120] sm:$0xff]
          %v2246 = vld [vmem:[#allocation8 + $0x128] sm:$0xff]
          %v2247 = vld [vmem:[#allocation8 + $0x130] sm:$0xff]
          %v2248 = vld [vmem:[#allocation8 + $0x138] sm:$0xff]
          %v2249 = vld [vmem:[#allocation8 + $0x140] sm:$0xff]
          %v2250 = vld [vmem:[#allocation8 + $0x148] sm:$0xff]
          %v2251 = vld [vmem:[#allocation8 + $0x150] sm:$0xff]
          %v2252 = vld [vmem:[#allocation8 + $0x158] sm:$0xff]
          %v2253 = vld [vmem:[#allocation8 + $0x160] sm:$0xff]
          %v2254 = vld [vmem:[#allocation8 + $0x168] sm:$0xff]
          %v2255 = vld [vmem:[#allocation8 + $0x170] sm:$0xff]
          %v2256 = vld [vmem:[#allocation8 + $0x178] sm:$0xff]
          %v2257 = vld [vmem:[#allocation8 + $0x180] sm:$0xff]
          %v2258 = vld [vmem:[#allocation8 + $0x188] sm:$0xff]
          %v2259 = vld [vmem:[#allocation8 + $0x190] sm:$0xff]
          %v2260 = vld [vmem:[#allocation8 + $0x198] sm:$0xff]
          %v2261 = vld [vmem:[#allocation8 + $0x1a0] sm:$0xff]
          %v2262 = vld [vmem:[#allocation8 + $0x1a8] sm:$0xff]
          %v2263 = vld [vmem:[#allocation8 + $0x1b0] sm:$0xff]
          %v2264 = vld [vmem:[#allocation8 + $0x1b8] sm:$0xff]
          %v2265 = vld [vmem:[#allocation8 + $0x1c0] sm:$0xff]
          %v2266 = vld [vmem:[#allocation8 + $0x1c8] sm:$0xff]
          %v2267 = vld [vmem:[#allocation8 + $0x1d0] sm:$0xff]
          %v2268 = vld [vmem:[#allocation8 + $0x1d8] sm:$0xff]
          %v2269 = vld [vmem:[#allocation8 + $0x1e0] sm:$0xff]
          %v2270 = vld [vmem:[#allocation8 + $0x1e8] sm:$0xff]
          %v2271 = vld [vmem:[#allocation8 + $0x1f0] sm:$0xff]
          %v2272 = vld [vmem:[#allocation8 + $0x1f8] sm:$0xff]
          %v2273 = vld [vmem:[%s4] sm:$0x3]
          %v2275 = vlaneseq
          %v2276 = vshrl.u32 %v2275, 7
          %v2277 = vsub.s32 0, %v2276
          %v2278 = vrot.slane %v2273, %v2277
          %v2279 = vlaneseq
          %v2280 = vshrl.u32 %v2279, 7
          %v2281 = vsub.s32 1, %v2280
          %v2282 = vrot.slane %v2273, %v2281
          %v2349 = vunpack.c.l.b16 %v2209
          %v2350 = vunpack.c.h.b16 %v2209
          %v2351 = vunpack.c.l.b16 %v2210
          %v2352 = vunpack.c.h.b16 %v2210
          %v2353 = vunpack.c.l.b16 %v2211
          %v2354 = vunpack.c.h.b16 %v2211
          %v2355 = vunpack.c.l.b16 %v2212
          %v2356 = vunpack.c.h.b16 %v2212
          %v2357 = vunpack.c.l.b16 %v2213
          %v2358 = vunpack.c.h.b16 %v2213
          %v2359 = vunpack.c.l.b16 %v2214
          %v2360 = vunpack.c.h.b16 %v2214
          %v2361 = vunpack.c.l.b16 %v2215
          %v2362 = vunpack.c.h.b16 %v2215
          %v2363 = vunpack.c.l.b16 %v2216
          %v2364 = vunpack.c.h.b16 %v2216
          %v2365 = vunpack.c.l.b16 %v2217
          %v2366 = vunpack.c.h.b16 %v2217
          %v2367 = vunpack.c.l.b16 %v2218
          %v2368 = vunpack.c.h.b16 %v2218
          %v2369 = vunpack.c.l.b16 %v2219
          %v2370 = vunpack.c.h.b16 %v2219
          %v2371 = vunpack.c.l.b16 %v2220
          %v2372 = vunpack.c.h.b16 %v2220
          %v2373 = vunpack.c.l.b16 %v2221
          %v2374 = vunpack.c.h.b16 %v2221
          %v2375 = vunpack.c.l.b16 %v2222
          %v2376 = vunpack.c.h.b16 %v2222
          %v2377 = vunpack.c.l.b16 %v2223
          %v2378 = vunpack.c.h.b16 %v2223
          %v2379 = vunpack.c.l.b16 %v2224
          %v2380 = vunpack.c.h.b16 %v2224
          %v2381 = vunpack.c.l.b16 %v2225
          %v2382 = vunpack.c.h.b16 %v2225
          %v2383 = vunpack.c.l.b16 %v2226
          %v2384 = vunpack.c.h.b16 %v2226
          %v2385 = vunpack.c.l.b16 %v2227
          %v2386 = vunpack.c.h.b16 %v2227
          %v2387 = vunpack.c.l.b16 %v2228
          %v2388 = vunpack.c.h.b16 %v2228
          %v2389 = vunpack.c.l.b16 %v2229
          %v2390 = vunpack.c.h.b16 %v2229
          %v2391 = vunpack.c.l.b16 %v2230
          %v2392 = vunpack.c.h.b16 %v2230
          %v2393 = vunpack.c.l.b16 %v2231
          %v2394 = vunpack.c.h.b16 %v2231
          %v2395 = vunpack.c.l.b16 %v2232
          %v2396 = vunpack.c.h.b16 %v2232
          %v2397 = vunpack.c.l.b16 %v2233
          %v2398 = vunpack.c.h.b16 %v2233
          %v2399 = vunpack.c.l.b16 %v2234
          %v2400 = vunpack.c.h.b16 %v2234
          %v2401 = vunpack.c.l.b16 %v2235
          %v2402 = vunpack.c.h.b16 %v2235
          %v2403 = vunpack.c.l.b16 %v2236
          %v2404 = vunpack.c.h.b16 %v2236
          %v2405 = vunpack.c.l.b16 %v2237
          %v2406 = vunpack.c.h.b16 %v2237
          %v2407 = vunpack.c.l.b16 %v2238
          %v2408 = vunpack.c.h.b16 %v2238
          %v2409 = vunpack.c.l.b16 %v2239
          %v2410 = vunpack.c.h.b16 %v2239
          %v2411 = vunpack.c.l.b16 %v2240
          %v2412 = vunpack.c.h.b16 %v2240
          %v2413 = vunpack.c.l.b16 %v2241
          %v2414 = vunpack.c.h.b16 %v2241
          %v2415 = vunpack.c.l.b16 %v2242
          %v2416 = vunpack.c.h.b16 %v2242
          %v2417 = vunpack.c.l.b16 %v2243
          %v2418 = vunpack.c.h.b16 %v2243
          %v2419 = vunpack.c.l.b16 %v2244
          %v2420 = vunpack.c.h.b16 %v2244
          %v2421 = vunpack.c.l.b16 %v2245
          %v2422 = vunpack.c.h.b16 %v2245
          %v2423 = vunpack.c.l.b16 %v2246
          %v2424 = vunpack.c.h.b16 %v2246
          %v2425 = vunpack.c.l.b16 %v2247
          %v2426 = vunpack.c.h.b16 %v2247
          %v2427 = vunpack.c.l.b16 %v2248
          %v2428 = vunpack.c.h.b16 %v2248
          %v2429 = vunpack.c.l.b16 %v2249
          %v2430 = vunpack.c.h.b16 %v2249
          %v2431 = vunpack.c.l.b16 %v2250
          %v2432 = vunpack.c.h.b16 %v2250
          %v2433 = vunpack.c.l.b16 %v2251
          %v2434 = vunpack.c.h.b16 %v2251
          %v2435 = vunpack.c.l.b16 %v2252
          %v2436 = vunpack.c.h.b16 %v2252
          %v2437 = vunpack.c.l.b16 %v2253
          %v2438 = vunpack.c.h.b16 %v2253
          %v2439 = vunpack.c.l.b16 %v2254
          %v2440 = vunpack.c.h.b16 %v2254
          %v2441 = vunpack.c.l.b16 %v2255
          %v2442 = vunpack.c.h.b16 %v2255
          %v2443 = vunpack.c.l.b16 %v2256
          %v2444 = vunpack.c.h.b16 %v2256
          %v2445 = vunpack.c.l.b16 %v2257
          %v2446 = vunpack.c.h.b16 %v2257
          %v2447 = vunpack.c.l.b16 %v2258
          %v2448 = vunpack.c.h.b16 %v2258
          %v2449 = vunpack.c.l.b16 %v2259
          %v2450 = vunpack.c.h.b16 %v2259
          %v2451 = vunpack.c.l.b16 %v2260
          %v2452 = vunpack.c.h.b16 %v2260
          %v2453 = vunpack.c.l.b16 %v2261
          %v2454 = vunpack.c.h.b16 %v2261
          %v2455 = vunpack.c.l.b16 %v2262
          %v2456 = vunpack.c.h.b16 %v2262
          %v2457 = vunpack.c.l.b16 %v2263
          %v2458 = vunpack.c.h.b16 %v2263
          %v2459 = vunpack.c.l.b16 %v2264
          %v2460 = vunpack.c.h.b16 %v2264
          %v2461 = vunpack.c.l.b16 %v2265
          %v2462 = vunpack.c.h.b16 %v2265
          %v2463 = vunpack.c.l.b16 %v2266
          %v2464 = vunpack.c.h.b16 %v2266
          %v2465 = vunpack.c.l.b16 %v2267
          %v2466 = vunpack.c.h.b16 %v2267
          %v2467 = vunpack.c.l.b16 %v2268
          %v2468 = vunpack.c.h.b16 %v2268
          %v2469 = vunpack.c.l.b16 %v2269
          %v2470 = vunpack.c.h.b16 %v2269
          %v2471 = vunpack.c.l.b16 %v2270
          %v2472 = vunpack.c.h.b16 %v2270
          %v2473 = vunpack.c.l.b16 %v2271
          %v2474 = vunpack.c.h.b16 %v2271
          %v2475 = vunpack.c.l.b16 %v2272
          %v2476 = vunpack.c.h.b16 %v2272
          %v2477 = vpack.c.b16 %v2351, %v2349
          %v2478 = vpack.c.b16 %v2352, %v2350
          %v2479 = vpack.c.b16 %v2355, %v2353
          %v2480 = vpack.c.b16 %v2356, %v2354
          %v2481 = vpack.c.b16 %v2359, %v2357
          %v2482 = vpack.c.b16 %v2360, %v2358
          %v2483 = vpack.c.b16 %v2363, %v2361
          %v2484 = vpack.c.b16 %v2364, %v2362
          %v2485 = vpack.c.b16 %v2367, %v2365
          %v2486 = vpack.c.b16 %v2368, %v2366
          %v2487 = vpack.c.b16 %v2371, %v2369
          %v2488 = vpack.c.b16 %v2372, %v2370
          %v2489 = vpack.c.b16 %v2375, %v2373
          %v2490 = vpack.c.b16 %v2376, %v2374
          %v2491 = vpack.c.b16 %v2379, %v2377
          %v2492 = vpack.c.b16 %v2380, %v2378
          %v2493 = vpack.c.b16 %v2383, %v2381
          %v2494 = vpack.c.b16 %v2384, %v2382
          %v2495 = vpack.c.b16 %v2387, %v2385
          %v2496 = vpack.c.b16 %v2388, %v2386
          %v2497 = vpack.c.b16 %v2391, %v2389
          %v2498 = vpack.c.b16 %v2392, %v2390
          %v2499 = vpack.c.b16 %v2395, %v2393
          %v2500 = vpack.c.b16 %v2396, %v2394
          %v2501 = vpack.c.b16 %v2399, %v2397
          %v2502 = vpack.c.b16 %v2400, %v2398
          %v2503 = vpack.c.b16 %v2403, %v2401
          %v2504 = vpack.c.b16 %v2404, %v2402
          %v2505 = vpack.c.b16 %v2407, %v2405
          %v2506 = vpack.c.b16 %v2408, %v2406
          %v2507 = vpack.c.b16 %v2411, %v2409
          %v2508 = vpack.c.b16 %v2412, %v2410
          %v2509 = vpack.c.b16 %v2415, %v2413
          %v2510 = vpack.c.b16 %v2416, %v2414
          %v2511 = vpack.c.b16 %v2419, %v2417
          %v2512 = vpack.c.b16 %v2420, %v2418
          %v2513 = vpack.c.b16 %v2423, %v2421
          %v2514 = vpack.c.b16 %v2424, %v2422
          %v2515 = vpack.c.b16 %v2427, %v2425
          %v2516 = vpack.c.b16 %v2428, %v2426
          %v2517 = vpack.c.b16 %v2431, %v2429
          %v2518 = vpack.c.b16 %v2432, %v2430
          %v2519 = vpack.c.b16 %v2435, %v2433
          %v2520 = vpack.c.b16 %v2436, %v2434
          %v2521 = vpack.c.b16 %v2439, %v2437
          %v2522 = vpack.c.b16 %v2440, %v2438
          %v2523 = vpack.c.b16 %v2443, %v2441
          %v2524 = vpack.c.b16 %v2444, %v2442
          %v2525 = vpack.c.b16 %v2447, %v2445
          %v2526 = vpack.c.b16 %v2448, %v2446
          %v2527 = vpack.c.b16 %v2451, %v2449
          %v2528 = vpack.c.b16 %v2452, %v2450
          %v2529 = vpack.c.b16 %v2455, %v2453
          %v2530 = vpack.c.b16 %v2456, %v2454
          %v2531 = vpack.c.b16 %v2459, %v2457
          %v2532 = vpack.c.b16 %v2460, %v2458
          %v2533 = vpack.c.b16 %v2463, %v2461
          %v2534 = vpack.c.b16 %v2464, %v2462
          %v2535 = vpack.c.b16 %v2467, %v2465
          %v2536 = vpack.c.b16 %v2468, %v2466
          %v2537 = vpack.c.b16 %v2471, %v2469
          %v2538 = vpack.c.b16 %v2472, %v2470
          %v2539 = vpack.c.b16 %v2475, %v2473
          %v2540 = vpack.c.b16 %v2476, %v2474
          %2605 = vmatprep.subr.bf16.mxu0 %v2478
          %2606 = vmatpush1.bf16.msra.mxu0 %v2477
          %2607 = vmatprep.subr.bf16.mxu0 %v2480
          %2608 = vmatpush1.bf16.msra.mxu0 %v2479
          %2609 = vmatprep.subr.bf16.mxu0 %v2482
          %2610 = vmatpush1.bf16.msra.mxu0 %v2481
          %2611 = vmatprep.subr.bf16.mxu0 %v2484
          %2612 = vmatpush1.bf16.msra.mxu0 %v2483
          %2613 = vmatprep.subr.bf16.mxu0 %v2486
          %2614 = vmatpush1.bf16.msra.mxu0 %v2485
          %2615 = vmatprep.subr.bf16.mxu0 %v2488
          %2616 = vmatpush1.bf16.msra.mxu0 %v2487
          %2617 = vmatprep.subr.bf16.mxu0 %v2490
          %2618 = vmatpush1.bf16.msra.mxu0 %v2489
          %2619 = vmatprep.subr.bf16.mxu0 %v2492
          %2620 = vmatpush1.bf16.msra.mxu0 %v2491
          %2621 = vmatprep.subr.bf16.mxu0 %v2494
          %2622 = vmatpush1.bf16.msra.mxu0 %v2493
          %2623 = vmatprep.subr.bf16.mxu0 %v2496
          %2624 = vmatpush1.bf16.msra.mxu0 %v2495
          %2625 = vmatprep.subr.bf16.mxu0 %v2498
          %2626 = vmatpush1.bf16.msra.mxu0 %v2497
          %2627 = vmatprep.subr.bf16.mxu0 %v2500
          %2628 = vmatpush1.bf16.msra.mxu0 %v2499
          %2629 = vmatprep.subr.bf16.mxu0 %v2502
          %2630 = vmatpush1.bf16.msra.mxu0 %v2501
          %2631 = vmatprep.subr.bf16.mxu0 %v2504
          %2632 = vmatpush1.bf16.msra.mxu0 %v2503
          %2633 = vmatprep.subr.bf16.mxu0 %v2506
          %2634 = vmatpush1.bf16.msra.mxu0 %v2505
          %2635 = vmatprep.subr.bf16.mxu0 %v2508
          %2636 = vmatpush1.bf16.msra.mxu0 %v2507
          %2637 = vmatprep.mubr.bf16.mxu0 %v2146
          %2638 = vmatmul.mubr.bf16.gmra.mrb[0].mxu0 %v2145
          %v2639 = vpop.f32.mrb[0].mxu0
          %v2640 = vadd.f32 %v2278, %v2639
          %v2641 = vpop.f32.mrb[0].mxu0
          %v2642 = vadd.f32 %v2282, %v2641
          %v2643 = vpop.f32.mrb[0].mxu0
          %v2644 = vadd.f32 %v2278, %v2643
          %v2645 = vpop.f32.mrb[0].mxu0
          %v2646 = vadd.f32 %v2282, %v2645
          %2647 = vmatprep.mubr.bf16.mxu0 %v2150
          %2648 = vmatmul.mubr.bf16.gmra.mrb[0].mxu0 %v2149
          %v2649 = vpop.f32.mrb[0].mxu0
          %v2650 = vadd.f32 %v2278, %v2649
          %v2651 = vpop.f32.mrb[0].mxu0
          %v2652 = vadd.f32 %v2282, %v2651
          %v2653 = vpop.f32.mrb[0].mxu0
          %v2654 = vadd.f32 %v2278, %v2653
          %v2655 = vpop.f32.mrb[0].mxu0
          %v2656 = vadd.f32 %v2282, %v2655
          %2657 = vmatprep.mubr.bf16.mxu0 %v2154
          %2658 = vmatmul.mubr.bf16.gmra.mrb[0].mxu0 %v2153
          %v2659 = vpop.f32.mrb[0].mxu0
          %v2660 = vadd.f32 %v2278, %v2659
          %v2661 = vpop.f32.mrb[0].mxu0
          %v2662 = vadd.f32 %v2282, %v2661
          %v2663 = vpop.f32.mrb[0].mxu0
          %v2664 = vadd.f32 %v2278, %v2663
          %v2665 = vpop.f32.mrb[0].mxu0
          %v2666 = vadd.f32 %v2282, %v2665
          %2667 = vmatprep.mubr.bf16.mxu0 %v2158
          %2668 = vmatmul.mubr.bf16.gmra.mrb[0].mxu0 %v2157
          %v2669 = vpop.f32.mrb[0].mxu0
          %v2670 = vadd.f32 %v2278, %v2669
          %v2671 = vpop.f32.mrb[0].mxu0
          %v2672 = vadd.f32 %v2282, %v2671
          %v2673 = vpop.f32.mrb[0].mxu0
          %v2674 = vadd.f32 %v2278, %v2673
          %v2675 = vpop.f32.mrb[0].mxu0
          %v2676 = vadd.f32 %v2282, %v2675
          %2677 = vmatprep.mubr.bf16.mxu0 %v2162
          %2678 = vmatmul.mubr.bf16.gmra.mrb[0].mxu0 %v2161
          %v2679 = vpop.f32.mrb[0].mxu0
          %v2680 = vadd.f32 %v2278, %v2679
          %v2681 = vpop.f32.mrb[0].mxu0
          %v2682 = vadd.f32 %v2282, %v2681
          %v2683 = vpop.f32.mrb[0].mxu0
          %v2684 = vadd.f32 %v2278, %v2683
          %v2685 = vpop.f32.mrb[0].mxu0
          %v2686 = vadd.f32 %v2282, %v2685
          %2687 = vmatprep.mubr.bf16.mxu0 %v2166
          %2688 = vmatmul.mubr.bf16.gmra.mrb[0].mxu0 %v2165
          %v2689 = vpop.f32.mrb[0].mxu0
          %v2690 = vadd.f32 %v2278, %v2689
          %v2691 = vpop.f32.mrb[0].mxu0
          %v2692 = vadd.f32 %v2282, %v2691
          %v2693 = vpop.f32.mrb[0].mxu0
          %v2694 = vadd.f32 %v2278, %v2693
          %v2695 = vpop.f32.mrb[0].mxu0
          %v2696 = vadd.f32 %v2282, %v2695
          %2697 = vmatprep.mubr.bf16.mxu0 %v2170
          %2698 = vmatmul.mubr.bf16.gmra.mrb[0].mxu0 %v2169
          %v2699 = vpop.f32.mrb[0].mxu0
          %v2700 = vadd.f32 %v2278, %v2699
          %v2701 = vpop.f32.mrb[0].mxu0
          %v2702 = vadd.f32 %v2282, %v2701
          %v2703 = vpop.f32.mrb[0].mxu0
          %v2704 = vadd.f32 %v2278, %v2703
          %v2705 = vpop.f32.mrb[0].mxu0
          %v2706 = vadd.f32 %v2282, %v2705
          %2707 = vmatprep.mubr.bf16.mxu0 %v2174
          %2708 = vmatmul.mubr.bf16.gmra.mrb[0].mxu0 %v2173
          %v2709 = vpop.f32.mrb[0].mxu0
          %v2710 = vadd.f32 %v2278, %v2709
          %v2711 = vpop.f32.mrb[0].mxu0
          %v2712 = vadd.f32 %v2282, %v2711
          %v2713 = vpop.f32.mrb[0].mxu0
          %v2714 = vadd.f32 %v2278, %v2713
          %v2715 = vpop.f32.mrb[0].mxu0
          %v2716 = vadd.f32 %v2282, %v2715
          %2717 = vmatprep.mubr.bf16.mxu0 %v2178
          %2718 = vmatmul.mubr.bf16.gmra.mrb[0].mxu0 %v2177
          %v2719 = vpop.f32.mrb[0].mxu0
          %v2720 = vadd.f32 %v2278, %v2719
          %v2721 = vpop.f32.mrb[0].mxu0
          %v2722 = vadd.f32 %v2282, %v2721
          %v2723 = vpop.f32.mrb[0].mxu0
          %v2724 = vadd.f32 %v2278, %v2723
          %v2725 = vpop.f32.mrb[0].mxu0
          %v2726 = vadd.f32 %v2282, %v2725
          %2727 = vmatprep.mubr.bf16.mxu0 %v2182
          %2728 = vmatmul.mubr.bf16.gmra.mrb[0].mxu0 %v2181
          %v2729 = vpop.f32.mrb[0].mxu0
          %v2730 = vadd.f32 %v2278, %v2729
          %v2731 = vpop.f32.mrb[0].mxu0
          %v2732 = vadd.f32 %v2282, %v2731
          %v2733 = vpop.f32.mrb[0].mxu0
          %v2734 = vadd.f32 %v2278, %v2733
          %v2735 = vpop.f32.mrb[0].mxu0
          %v2736 = vadd.f32 %v2282, %v2735
          %2737 = vmatprep.mubr.bf16.mxu0 %v2186
          %2738 = vmatmul.mubr.bf16.gmra.mrb[0].mxu0 %v2185
          %v2739 = vpop.f32.mrb[0].mxu0
          %v2740 = vadd.f32 %v2278, %v2739
          %v2741 = vpop.f32.mrb[0].mxu0
          %v2742 = vadd.f32 %v2282, %v2741
          %v2743 = vpop.f32.mrb[0].mxu0
          %v2744 = vadd.f32 %v2278, %v2743
          %v2745 = vpop.f32.mrb[0].mxu0
          %v2746 = vadd.f32 %v2282, %v2745
          %2747 = vmatprep.mubr.bf16.mxu0 %v2190
          %2748 = vmatmul.mubr.bf16.gmra.mrb[0].mxu0 %v2189
          %v2749 = vpop.f32.mrb[0].mxu0
          %v2750 = vadd.f32 %v2278, %v2749
          %v2751 = vpop.f32.mrb[0].mxu0
          %v2752 = vadd.f32 %v2282, %v2751
          %v2753 = vpop.f32.mrb[0].mxu0
          %v2754 = vadd.f32 %v2278, %v2753
          %v2755 = vpop.f32.mrb[0].mxu0
          %v2756 = vadd.f32 %v2282, %v2755
          %2757 = vmatprep.mubr.bf16.mxu0 %v2194
          %2758 = vmatmul.mubr.bf16.gmra.mrb[0].mxu0 %v2193
          %v2759 = vpop.f32.mrb[0].mxu0
          %v2760 = vadd.f32 %v2278, %v2759
          %v2761 = vpop.f32.mrb[0].mxu0
          %v2762 = vadd.f32 %v2282, %v2761
          %v2763 = vpop.f32.mrb[0].mxu0
          %v2764 = vadd.f32 %v2278, %v2763
          %v2765 = vpop.f32.mrb[0].mxu0
          %v2766 = vadd.f32 %v2282, %v2765
          %2767 = vmatprep.mubr.bf16.mxu0 %v2198
          %2768 = vmatmul.mubr.bf16.gmra.mrb[0].mxu0 %v2197
          %v2769 = vpop.f32.mrb[0].mxu0
          %v2770 = vadd.f32 %v2278, %v2769
          %v2771 = vpop.f32.mrb[0].mxu0
          %v2772 = vadd.f32 %v2282, %v2771
          %v2773 = vpop.f32.mrb[0].mxu0
          %v2774 = vadd.f32 %v2278, %v2773
          %v2775 = vpop.f32.mrb[0].mxu0
          %v2776 = vadd.f32 %v2282, %v2775
          %2777 = vmatprep.mubr.bf16.mxu0 %v2202
          %2778 = vmatmul.mubr.bf16.gmra.mrb[0].mxu0 %v2201
          %v2779 = vpop.f32.mrb[0].mxu0
          %v2780 = vadd.f32 %v2278, %v2779
          %v2781 = vpop.f32.mrb[0].mxu0
          %v2782 = vadd.f32 %v2282, %v2781
          %v2783 = vpop.f32.mrb[0].mxu0
          %v2784 = vadd.f32 %v2278, %v2783
          %v2785 = vpop.f32.mrb[0].mxu0
          %v2786 = vadd.f32 %v2282, %v2785
          %2787 = vmatprep.mubr.bf16.mxu0 %v2206
          %2788 = vmatmul.mubr.bf16.gmra.mrb[0].mxu0 %v2205
          %v2789 = vpop.f32.mrb[0].mxu0
          %v2790 = vadd.f32 %v2278, %v2789
          %v2791 = vpop.f32.mrb[0].mxu0
          %v2792 = vadd.f32 %v2282, %v2791
          %v2793 = vpop.f32.mrb[0].mxu0
          %v2794 = vadd.f32 %v2278, %v2793
          %v2795 = vpop.f32.mrb[0].mxu0
          %v2796 = vadd.f32 %v2282, %v2795
          %2797 = vdwg.mxu0
          %2798 = vmatprep.subr.bf16.mxu0 %v2510
          %2799 = vmatpush1.bf16.msra.mxu0 %v2509
          %2800 = vmatprep.subr.bf16.mxu0 %v2512
          %2801 = vmatpush1.bf16.msra.mxu0 %v2511
          %2802 = vmatprep.subr.bf16.mxu0 %v2514
          %2803 = vmatpush1.bf16.msra.mxu0 %v2513
          %2804 = vmatprep.subr.bf16.mxu0 %v2516
          %2805 = vmatpush1.bf16.msra.mxu0 %v2515
          %2806 = vmatprep.subr.bf16.mxu0 %v2518
          %2807 = vmatpush1.bf16.msra.mxu0 %v2517
          %2808 = vmatprep.subr.bf16.mxu0 %v2520
          %2809 = vmatpush1.bf16.msra.mxu0 %v2519
          %2810 = vmatprep.subr.bf16.mxu0 %v2522
          %2811 = vmatpush1.bf16.msra.mxu0 %v2521
          %2812 = vmatprep.subr.bf16.mxu0 %v2524
          %2813 = vmatpush1.bf16.msra.mxu0 %v2523
          %2814 = vmatprep.subr.bf16.mxu0 %v2526
          %2815 = vmatpush1.bf16.msra.mxu0 %v2525
          %2816 = vmatprep.subr.bf16.mxu0 %v2528
          %2817 = vmatpush1.bf16.msra.mxu0 %v2527
          %2818 = vmatprep.subr.bf16.mxu0 %v2530
          %2819 = vmatpush1.bf16.msra.mxu0 %v2529
          %2820 = vmatprep.subr.bf16.mxu0 %v2532
          %2821 = vmatpush1.bf16.msra.mxu0 %v2531
          %2822 = vmatprep.subr.bf16.mxu0 %v2534
          %2823 = vmatpush1.bf16.msra.mxu0 %v2533
          %2824 = vmatprep.subr.bf16.mxu0 %v2536
          %2825 = vmatpush1.bf16.msra.mxu0 %v2535
          %2826 = vmatprep.subr.bf16.mxu0 %v2538
          %2827 = vmatpush1.bf16.msra.mxu0 %v2537
          %2828 = vmatprep.subr.bf16.mxu0 %v2540
          %2829 = vmatpush1.bf16.msra.mxu0 %v2539
          %2830 = vmatprep.mubr.bf16.mxu0 %v2148
          %2831 = vmatmul.mubr.bf16.gmra.mrb[0].mxu0 %v2147
          %v2832 = vpop.f32.mrb[0].mxu0
          %v2833 = vadd.f32 %v2640, %v2832
          %v2834 = vpop.f32.mrb[0].mxu0
          %v2835 = vadd.f32 %v2642, %v2834
          %v2836 = vpop.f32.mrb[0].mxu0
          %v2837 = vadd.f32 %v2644, %v2836
          %v2838 = vpop.f32.mrb[0].mxu0
          %v2839 = vadd.f32 %v2646, %v2838
          %2840 = vmatprep.mubr.bf16.mxu0 %v2152
          %2841 = vmatmul.mubr.bf16.gmra.mrb[0].mxu0 %v2151
          %v2842 = vpop.f32.mrb[0].mxu0
          %v2843 = vadd.f32 %v2650, %v2842
          %v2844 = vpop.f32.mrb[0].mxu0
          %v2845 = vadd.f32 %v2652, %v2844
          %v2846 = vpop.f32.mrb[0].mxu0
          %v2847 = vadd.f32 %v2654, %v2846
          %v2848 = vpop.f32.mrb[0].mxu0
          %v2849 = vadd.f32 %v2656, %v2848
          %2850 = vmatprep.mubr.bf16.mxu0 %v2156
          %2851 = vmatmul.mubr.bf16.gmra.mrb[0].mxu0 %v2155
          %v2852 = vpop.f32.mrb[0].mxu0
          %v2853 = vadd.f32 %v2660, %v2852
          %v2854 = vpop.f32.mrb[0].mxu0
          %v2855 = vadd.f32 %v2662, %v2854
          %v2856 = vpop.f32.mrb[0].mxu0
          %v2857 = vadd.f32 %v2664, %v2856
          %v2858 = vpop.f32.mrb[0].mxu0
          %v2859 = vadd.f32 %v2666, %v2858
          %2860 = vmatprep.mubr.bf16.mxu0 %v2160
          %2861 = vmatmul.mubr.bf16.gmra.mrb[0].mxu0 %v2159
          %v2862 = vpop.f32.mrb[0].mxu0
          %v2863 = vadd.f32 %v2670, %v2862
          %v2864 = vpop.f32.mrb[0].mxu0
          %v2865 = vadd.f32 %v2672, %v2864
          %v2866 = vpop.f32.mrb[0].mxu0
          %v2867 = vadd.f32 %v2674, %v2866
          %v2868 = vpop.f32.mrb[0].mxu0
          %v2869 = vadd.f32 %v2676, %v2868
          %2870 = vmatprep.mubr.bf16.mxu0 %v2164
          %2871 = vmatmul.mubr.bf16.gmra.mrb[0].mxu0 %v2163
          %v2872 = vpop.f32.mrb[0].mxu0
          %v2873 = vadd.f32 %v2680, %v2872
          %v2874 = vpop.f32.mrb[0].mxu0
          %v2875 = vadd.f32 %v2682, %v2874
          %v2876 = vpop.f32.mrb[0].mxu0
          %v2877 = vadd.f32 %v2684, %v2876
          %v2878 = vpop.f32.mrb[0].mxu0
          %v2879 = vadd.f32 %v2686, %v2878
          %2880 = vmatprep.mubr.bf16.mxu0 %v2168
          %2881 = vmatmul.mubr.bf16.gmra.mrb[0].mxu0 %v2167
          %v2882 = vpop.f32.mrb[0].mxu0
          %v2883 = vadd.f32 %v2690, %v2882
          %v2884 = vpop.f32.mrb[0].mxu0
          %v2885 = vadd.f32 %v2692, %v2884
          %v2886 = vpop.f32.mrb[0].mxu0
          %v2887 = vadd.f32 %v2694, %v2886
          %v2888 = vpop.f32.mrb[0].mxu0
          %v2889 = vadd.f32 %v2696, %v2888
          %2890 = vmatprep.mubr.bf16.mxu0 %v2172
          %2891 = vmatmul.mubr.bf16.gmra.mrb[0].mxu0 %v2171
          %v2892 = vpop.f32.mrb[0].mxu0
          %v2893 = vadd.f32 %v2700, %v2892
          %v2894 = vpop.f32.mrb[0].mxu0
          %v2895 = vadd.f32 %v2702, %v2894
          %v2896 = vpop.f32.mrb[0].mxu0
          %v2897 = vadd.f32 %v2704, %v2896
          %v2898 = vpop.f32.mrb[0].mxu0
          %v2899 = vadd.f32 %v2706, %v2898
          %2900 = vmatprep.mubr.bf16.mxu0 %v2176
          %2901 = vmatmul.mubr.bf16.gmra.mrb[0].mxu0 %v2175
          %v2902 = vpop.f32.mrb[0].mxu0
          %v2903 = vadd.f32 %v2710, %v2902
          %v2904 = vpop.f32.mrb[0].mxu0
          %v2905 = vadd.f32 %v2712, %v2904
          %v2906 = vpop.f32.mrb[0].mxu0
          %v2907 = vadd.f32 %v2714, %v2906
          %v2908 = vpop.f32.mrb[0].mxu0
          %v2909 = vadd.f32 %v2716, %v2908
          %2910 = vmatprep.mubr.bf16.mxu0 %v2180
          %2911 = vmatmul.mubr.bf16.gmra.mrb[0].mxu0 %v2179
          %v2912 = vpop.f32.mrb[0].mxu0
          %v2913 = vadd.f32 %v2720, %v2912
          %v2914 = vpop.f32.mrb[0].mxu0
          %v2915 = vadd.f32 %v2722, %v2914
          %v2916 = vpop.f32.mrb[0].mxu0
          %v2917 = vadd.f32 %v2724, %v2916
          %v2918 = vpop.f32.mrb[0].mxu0
          %v2919 = vadd.f32 %v2726, %v2918
          %2920 = vmatprep.mubr.bf16.mxu0 %v2184
          %2921 = vmatmul.mubr.bf16.gmra.mrb[0].mxu0 %v2183
          %v2922 = vpop.f32.mrb[0].mxu0
          %v2923 = vadd.f32 %v2730, %v2922
          %v2924 = vpop.f32.mrb[0].mxu0
          %v2925 = vadd.f32 %v2732, %v2924
          %v2926 = vpop.f32.mrb[0].mxu0
          %v2927 = vadd.f32 %v2734, %v2926
          %v2928 = vpop.f32.mrb[0].mxu0
          %v2929 = vadd.f32 %v2736, %v2928
          %2930 = vmatprep.mubr.bf16.mxu0 %v2188
          %2931 = vmatmul.mubr.bf16.gmra.mrb[0].mxu0 %v2187
          %v2932 = vpop.f32.mrb[0].mxu0
          %v2933 = vadd.f32 %v2740, %v2932
          %v2934 = vpop.f32.mrb[0].mxu0
          %v2935 = vadd.f32 %v2742, %v2934
          %v2936 = vpop.f32.mrb[0].mxu0
          %v2937 = vadd.f32 %v2744, %v2936
          %v2938 = vpop.f32.mrb[0].mxu0
          %v2939 = vadd.f32 %v2746, %v2938
          %2940 = vmatprep.mubr.bf16.mxu0 %v2192
          %2941 = vmatmul.mubr.bf16.gmra.mrb[0].mxu0 %v2191
          %v2942 = vpop.f32.mrb[0].mxu0
          %v2943 = vadd.f32 %v2750, %v2942
          %v2944 = vpop.f32.mrb[0].mxu0
          %v2945 = vadd.f32 %v2752, %v2944
          %v2946 = vpop.f32.mrb[0].mxu0
          %v2947 = vadd.f32 %v2754, %v2946
          %v2948 = vpop.f32.mrb[0].mxu0
          %v2949 = vadd.f32 %v2756, %v2948
          %2950 = vmatprep.mubr.bf16.mxu0 %v2196
          %2951 = vmatmul.mubr.bf16.gmra.mrb[0].mxu0 %v2195
          %v2952 = vpop.f32.mrb[0].mxu0
          %v2953 = vadd.f32 %v2760, %v2952
          %v2954 = vpop.f32.mrb[0].mxu0
          %v2955 = vadd.f32 %v2762, %v2954
          %v2956 = vpop.f32.mrb[0].mxu0
          %v2957 = vadd.f32 %v2764, %v2956
          %v2958 = vpop.f32.mrb[0].mxu0
          %v2959 = vadd.f32 %v2766, %v2958
          %2960 = vmatprep.mubr.bf16.mxu0 %v2200
          %2961 = vmatmul.mubr.bf16.gmra.mrb[0].mxu0 %v2199
          %v2962 = vpop.f32.mrb[0].mxu0
          %v2963 = vadd.f32 %v2770, %v2962
          %v2964 = vpop.f32.mrb[0].mxu0
          %v2965 = vadd.f32 %v2772, %v2964
          %v2966 = vpop.f32.mrb[0].mxu0
          %v2967 = vadd.f32 %v2774, %v2966
          %v2968 = vpop.f32.mrb[0].mxu0
          %v2969 = vadd.f32 %v2776, %v2968
          %2970 = vmatprep.mubr.bf16.mxu0 %v2204
          %2971 = vmatmul.mubr.bf16.gmra.mrb[0].mxu0 %v2203
          %v2972 = vpop.f32.mrb[0].mxu0
          %v2973 = vadd.f32 %v2780, %v2972
          %v2974 = vpop.f32.mrb[0].mxu0
          %v2975 = vadd.f32 %v2782, %v2974
          %v2976 = vpop.f32.mrb[0].mxu0
          %v2977 = vadd.f32 %v2784, %v2976
          %v2978 = vpop.f32.mrb[0].mxu0
          %v2979 = vadd.f32 %v2786, %v2978
          %2980 = vmatprep.mubr.bf16.mxu0 %v2208
          %2981 = vmatmul.mubr.bf16.gmra.mrb[0].mxu0 %v2207
          %v2982 = vpop.f32.mrb[0].mxu0
          %v2983 = vadd.f32 %v2790, %v2982
          %v2984 = vpop.f32.mrb[0].mxu0
          %v2985 = vadd.f32 %v2792, %v2984
          %v2986 = vpop.f32.mrb[0].mxu0
          %v2987 = vadd.f32 %v2794, %v2986
          %v2988 = vpop.f32.mrb[0].mxu0
          %v2989 = vadd.f32 %v2796, %v2988
          %2990 = vdwg.mxu0
          %v2991 = vmax.f32 %v2833, 0.0
          %v2992 = vmax.f32 %v2835, 0.0
          %v2993 = vmax.f32 %v2837, 0.0
          %v2994 = vmax.f32 %v2839, 0.0
          %v2995 = vmax.f32 %v2843, 0.0
          %v2996 = vmax.f32 %v2845, 0.0
          %v2997 = vmax.f32 %v2847, 0.0
          %v2998 = vmax.f32 %v2849, 0.0
          %v2999 = vmax.f32 %v2853, 0.0
          %v3000 = vmax.f32 %v2855, 0.0
          %v3001 = vmax.f32 %v2857, 0.0
          %v3002 = vmax.f32 %v2859, 0.0
          %v3003 = vmax.f32 %v2863, 0.0
          %v3004 = vmax.f32 %v2865, 0.0
          %v3005 = vmax.f32 %v2867, 0.0
          %v3006 = vmax.f32 %v2869, 0.0
          %v3007 = vmax.f32 %v2873, 0.0
          %v3008 = vmax.f32 %v2875, 0.0
          %v3009 = vmax.f32 %v2877, 0.0
          %v3010 = vmax.f32 %v2879, 0.0
          %v3011 = vmax.f32 %v2883, 0.0
          %v3012 = vmax.f32 %v2885, 0.0
          %v3013 = vmax.f32 %v2887, 0.0
          %v3014 = vmax.f32 %v2889, 0.0
          %v3015 = vmax.f32 %v2893, 0.0
          %v3016 = vmax.f32 %v2895, 0.0
          %v3017 = vmax.f32 %v2897, 0.0
          %v3018 = vmax.f32 %v2899, 0.0
          %v3019 = vmax.f32 %v2903, 0.0
          %v3020 = vmax.f32 %v2905, 0.0
          %v3021 = vmax.f32 %v2907, 0.0
          %v3022 = vmax.f32 %v2909, 0.0
          %v3023 = vmax.f32 %v2913, 0.0
          %v3024 = vmax.f32 %v2915, 0.0
          %v3025 = vmax.f32 %v2917, 0.0
          %v3026 = vmax.f32 %v2919, 0.0
          %v3027 = vmax.f32 %v2923, 0.0
          %v3028 = vmax.f32 %v2925, 0.0
          %v3029 = vmax.f32 %v2927, 0.0
          %v3030 = vmax.f32 %v2929, 0.0
          %v3031 = vmax.f32 %v2933, 0.0
          %v3032 = vmax.f32 %v2935, 0.0
          %v3033 = vmax.f32 %v2937, 0.0
          %v3034 = vmax.f32 %v2939, 0.0
          %v3035 = vmax.f32 %v2943, 0.0
          %v3036 = vmax.f32 %v2945, 0.0
          %v3037 = vmax.f32 %v2947, 0.0
          %v3038 = vmax.f32 %v2949, 0.0
          %v3039 = vmax.f32 %v2953, 0.0
          %v3040 = vmax.f32 %v2955, 0.0
          %v3041 = vmax.f32 %v2957, 0.0
          %v3042 = vmax.f32 %v2959, 0.0
          %v3043 = vmax.f32 %v2963, 0.0
          %v3044 = vmax.f32 %v2965, 0.0
          %v3045 = vmax.f32 %v2967, 0.0
          %v3046 = vmax.f32 %v2969, 0.0
          %v3047 = vmax.f32 %v2973, 0.0
          %v3048 = vmax.f32 %v2975, 0.0
          %v3049 = vmax.f32 %v2977, 0.0
          %v3050 = vmax.f32 %v2979, 0.0
          %v3051 = vmax.f32 %v2983, 0.0
          %v3052 = vmax.f32 %v2985, 0.0
          %v3053 = vmax.f32 %v2987, 0.0
          %v3054 = vmax.f32 %v2989, 0.0
          %v3055 = vpack.c.bf16 %v2993, %v2991
          %v3056 = vpack.c.bf16 %v2994, %v2992
          %v3057 = vpack.c.bf16 %v2997, %v2995
          %v3058 = vpack.c.bf16 %v2998, %v2996
          %v3059 = vpack.c.bf16 %v3001, %v2999
          %v3060 = vpack.c.bf16 %v3002, %v3000
          %v3061 = vpack.c.bf16 %v3005, %v3003
          %v3062 = vpack.c.bf16 %v3006, %v3004
          %v3063 = vpack.c.bf16 %v3009, %v3007
          %v3064 = vpack.c.bf16 %v3010, %v3008
          %v3065 = vpack.c.bf16 %v3013, %v3011
          %v3066 = vpack.c.bf16 %v3014, %v3012
          %v3067 = vpack.c.bf16 %v3017, %v3015
          %v3068 = vpack.c.bf16 %v3018, %v3016
          %v3069 = vpack.c.bf16 %v3021, %v3019
          %v3070 = vpack.c.bf16 %v3022, %v3020
          %v3071 = vpack.c.bf16 %v3025, %v3023
          %v3072 = vpack.c.bf16 %v3026, %v3024
          %v3073 = vpack.c.bf16 %v3029, %v3027
          %v3074 = vpack.c.bf16 %v3030, %v3028
          %v3075 = vpack.c.bf16 %v3033, %v3031
          %v3076 = vpack.c.bf16 %v3034, %v3032
          %v3077 = vpack.c.bf16 %v3037, %v3035
          %v3078 = vpack.c.bf16 %v3038, %v3036
          %v3079 = vpack.c.bf16 %v3041, %v3039
          %v3080 = vpack.c.bf16 %v3042, %v3040
          %v3081 = vpack.c.bf16 %v3045, %v3043
          %v3082 = vpack.c.bf16 %v3046, %v3044
          %v3083 = vpack.c.bf16 %v3049, %v3047
          %v3084 = vpack.c.bf16 %v3050, %v3048
          %v3085 = vpack.c.bf16 %v3053, %v3051
          %v3086 = vpack.c.bf16 %v3054, %v3052
          %v3087 = vld [vmem:[#allocation9] sm:$0xf]
          %v3088 = vld [vmem:[#allocation9 + $0x4] sm:$0xf]
          %v3089 = vld [vmem:[#allocation9 + $0x8] sm:$0xf]
          %v3090 = vld [vmem:[#allocation9 + $0xc] sm:$0xf]
          %v3091 = vld [vmem:[#allocation9 + $0x10] sm:$0xf]
          %v3092 = vld [vmem:[#allocation9 + $0x14] sm:$0xf]
          %v3093 = vld [vmem:[#allocation9 + $0x18] sm:$0xf]
          %v3094 = vld [vmem:[#allocation9 + $0x1c] sm:$0xf]
          %v3095 = vld [vmem:[#allocation9 + $0x20] sm:$0xf]
          %v3096 = vld [vmem:[#allocation9 + $0x24] sm:$0xf]
          %v3097 = vld [vmem:[#allocation9 + $0x28] sm:$0xf]
          %v3098 = vld [vmem:[#allocation9 + $0x2c] sm:$0xf]
          %v3099 = vld [vmem:[#allocation9 + $0x30] sm:$0xf]
          %v3100 = vld [vmem:[#allocation9 + $0x34] sm:$0xf]
          %v3101 = vld [vmem:[#allocation9 + $0x38] sm:$0xf]
          %v3102 = vld [vmem:[#allocation9 + $0x3c] sm:$0xf]
          %v3103 = vld [vmem:[#allocation9 + $0x40] sm:$0xf]
          %v3104 = vld [vmem:[#allocation9 + $0x44] sm:$0xf]
          %v3105 = vld [vmem:[#allocation9 + $0x48] sm:$0xf]
          %v3106 = vld [vmem:[#allocation9 + $0x4c] sm:$0xf]
          %v3107 = vld [vmem:[#allocation9 + $0x50] sm:$0xf]
          %v3108 = vld [vmem:[#allocation9 + $0x54] sm:$0xf]
          %v3109 = vld [vmem:[#allocation9 + $0x58] sm:$0xf]
          %v3110 = vld [vmem:[#allocation9 + $0x5c] sm:$0xf]
          %v3111 = vld [vmem:[#allocation9 + $0x60] sm:$0xf]
          %v3112 = vld [vmem:[#allocation9 + $0x64] sm:$0xf]
          %v3113 = vld [vmem:[#allocation9 + $0x68] sm:$0xf]
          %v3114 = vld [vmem:[#allocation9 + $0x6c] sm:$0xf]
          %v3115 = vld [vmem:[#allocation9 + $0x70] sm:$0xf]
          %v3116 = vld [vmem:[#allocation9 + $0x74] sm:$0xf]
          %v3117 = vld [vmem:[#allocation9 + $0x78] sm:$0xf]
          %v3118 = vld [vmem:[#allocation9 + $0x7c] sm:$0xf]
          %v3119 = vld [vmem:[%s6] sm:$0x1]
          %v3121 = vlaneseq
          %v3122 = vshrl.u32 %v3121, 7
          %v3123 = vsub.s32 0, %v3122
          %v3124 = vrot.slane %v3119, %v3123
          %v3158 = vunpack.c.l.b16 %v3087
          %v3159 = vunpack.c.l.b16 %v3088
          %v3160 = vunpack.c.l.b16 %v3089
          %v3161 = vunpack.c.l.b16 %v3090
          %v3162 = vunpack.c.l.b16 %v3091
          %v3163 = vunpack.c.l.b16 %v3092
          %v3164 = vunpack.c.l.b16 %v3093
          %v3165 = vunpack.c.l.b16 %v3094
          %v3166 = vunpack.c.l.b16 %v3095
          %v3167 = vunpack.c.l.b16 %v3096
          %v3168 = vunpack.c.l.b16 %v3097
          %v3169 = vunpack.c.l.b16 %v3098
          %v3170 = vunpack.c.l.b16 %v3099
          %v3171 = vunpack.c.l.b16 %v3100
          %v3172 = vunpack.c.l.b16 %v3101
          %v3173 = vunpack.c.l.b16 %v3102
          %v3174 = vunpack.c.l.b16 %v3103
          %v3175 = vunpack.c.l.b16 %v3104
          %v3176 = vunpack.c.l.b16 %v3105
          %v3177 = vunpack.c.l.b16 %v3106
          %v3178 = vunpack.c.l.b16 %v3107
          %v3179 = vunpack.c.l.b16 %v3108
          %v3180 = vunpack.c.l.b16 %v3109
          %v3181 = vunpack.c.l.b16 %v3110
          %v3182 = vunpack.c.l.b16 %v3111
          %v3183 = vunpack.c.l.b16 %v3112
          %v3184 = vunpack.c.l.b16 %v3113
          %v3185 = vunpack.c.l.b16 %v3114
          %v3186 = vunpack.c.l.b16 %v3115
          %v3187 = vunpack.c.l.b16 %v3116
          %v3188 = vunpack.c.l.b16 %v3117
          %v3189 = vunpack.c.l.b16 %v3118
          %v3190 = vpack.c.b16 %v3159, %v3158
          %v3191 = vpack.c.b16 %v3161, %v3160
          %v3192 = vpack.c.b16 %v3163, %v3162
          %v3193 = vpack.c.b16 %v3165, %v3164
          %v3194 = vpack.c.b16 %v3167, %v3166
          %v3195 = vpack.c.b16 %v3169, %v3168
          %v3196 = vpack.c.b16 %v3171, %v3170
          %v3197 = vpack.c.b16 %v3173, %v3172
          %v3198 = vpack.c.b16 %v3175, %v3174
          %v3199 = vpack.c.b16 %v3177, %v3176
          %v3200 = vpack.c.b16 %v3179, %v3178
          %v3201 = vpack.c.b16 %v3181, %v3180
          %v3202 = vpack.c.b16 %v3183, %v3182
          %v3203 = vpack.c.b16 %v3185, %v3184
          %v3204 = vpack.c.b16 %v3187, %v3186
          %v3205 = vpack.c.b16 %v3189, %v3188
          %3222 = vmatprep.subr.bf16.mxu0 0
          %3223 = vmatpush1.bf16.msra.mxu0 %v3190
          %3224 = vmatprep.subr.bf16.mxu0 0
          %3225 = vmatpush1.bf16.msra.mxu0 %v3191
          %3226 = vmatprep.subr.bf16.mxu0 0
          %3227 = vmatpush1.bf16.msra.mxu0 %v3192
          %3228 = vmatprep.subr.bf16.mxu0 0
          %3229 = vmatpush1.bf16.msra.mxu0 %v3193
          %3230 = vmatprep.subr.bf16.mxu0 0
          %3231 = vmatpush1.bf16.msra.mxu0 %v3194
          %3232 = vmatprep.subr.bf16.mxu0 0
          %3233 = vmatpush1.bf16.msra.mxu0 %v3195
          %3234 = vmatprep.subr.bf16.mxu0 0
          %3235 = vmatpush1.bf16.msra.mxu0 %v3196
          %3236 = vmatprep.subr.bf16.mxu0 0
          %3237 = vmatpush1.bf16.msra.mxu0 %v3197
          %3238 = vmatprep.subr.bf16.mxu0 0
          %3239 = vmatpush1.bf16.msra.mxu0 %v3198
          %3240 = vmatprep.subr.bf16.mxu0 0
          %3241 = vmatpush1.bf16.msra.mxu0 %v3199
          %3242 = vmatprep.subr.bf16.mxu0 0
          %3243 = vmatpush1.bf16.msra.mxu0 %v3200
          %3244 = vmatprep.subr.bf16.mxu0 0
          %3245 = vmatpush1.bf16.msra.mxu0 %v3201
          %3246 = vmatprep.subr.bf16.mxu0 0
          %3247 = vmatpush1.bf16.msra.mxu0 %v3202
          %3248 = vmatprep.subr.bf16.mxu0 0
          %3249 = vmatpush1.bf16.msra.mxu0 %v3203
          %3250 = vmatprep.subr.bf16.mxu0 0
          %3251 = vmatpush1.bf16.msra.mxu0 %v3204
          %3252 = vmatprep.subr.bf16.mxu0 0
          %3253 = vmatpush1.bf16.msra.mxu0 %v3205
          %3254 = vmatprep.mubr.bf16.mxu0 %v3056
          %3255 = vmatmul.mubr.bf16.gmra.mrb[0].mxu0 %v3055
          %v3256 = vpop.f32.mrb[0].mxu0
          %v3257 = vadd.f32 %v3124, %v3256
          %v3258 = vpop.f32.mrb[0].mxu0
          %v3259 = vpop.f32.mrb[0].mxu0
          %v3260 = vadd.f32 %v3124, %v3259
          %v3261 = vpop.f32.mrb[0].mxu0
          %3262 = vmatprep.mubr.bf16.mxu0 %v3058
          %3263 = vmatmul.mubr.bf16.gmra.mrb[0].mxu0 %v3057
          %v3264 = vpop.f32.mrb[0].mxu0
          %v3265 = vadd.f32 %v3124, %v3264
          %v3266 = vpop.f32.mrb[0].mxu0
          %v3267 = vpop.f32.mrb[0].mxu0
          %v3268 = vadd.f32 %v3124, %v3267
          %v3269 = vpop.f32.mrb[0].mxu0
          %3270 = vmatprep.mubr.bf16.mxu0 %v3060
          %3271 = vmatmul.mubr.bf16.gmra.mrb[0].mxu0 %v3059
          %v3272 = vpop.f32.mrb[0].mxu0
          %v3273 = vadd.f32 %v3124, %v3272
          %v3274 = vpop.f32.mrb[0].mxu0
          %v3275 = vpop.f32.mrb[0].mxu0
          %v3276 = vadd.f32 %v3124, %v3275
          %v3277 = vpop.f32.mrb[0].mxu0
          %3278 = vmatprep.mubr.bf16.mxu0 %v3062
          %3279 = vmatmul.mubr.bf16.gmra.mrb[0].mxu0 %v3061
          %v3280 = vpop.f32.mrb[0].mxu0
          %v3281 = vadd.f32 %v3124, %v3280
          %v3282 = vpop.f32.mrb[0].mxu0
          %v3283 = vpop.f32.mrb[0].mxu0
          %v3284 = vadd.f32 %v3124, %v3283
          %v3285 = vpop.f32.mrb[0].mxu0
          %3286 = vmatprep.mubr.bf16.mxu0 %v3064
          %3287 = vmatmul.mubr.bf16.gmra.mrb[0].mxu0 %v3063
          %v3288 = vpop.f32.mrb[0].mxu0
          %v3289 = vadd.f32 %v3124, %v3288
          %v3290 = vpop.f32.mrb[0].mxu0
          %v3291 = vpop.f32.mrb[0].mxu0
          %v3292 = vadd.f32 %v3124, %v3291
          %v3293 = vpop.f32.mrb[0].mxu0
          %3294 = vmatprep.mubr.bf16.mxu0 %v3066
          %3295 = vmatmul.mubr.bf16.gmra.mrb[0].mxu0 %v3065
          %v3296 = vpop.f32.mrb[0].mxu0
          %v3297 = vadd.f32 %v3124, %v3296
          %v3298 = vpop.f32.mrb[0].mxu0
          %v3299 = vpop.f32.mrb[0].mxu0
          %v3300 = vadd.f32 %v3124, %v3299
          %v3301 = vpop.f32.mrb[0].mxu0
          %3302 = vmatprep.mubr.bf16.mxu0 %v3068
          %3303 = vmatmul.mubr.bf16.gmra.mrb[0].mxu0 %v3067
          %v3304 = vpop.f32.mrb[0].mxu0
          %v3305 = vadd.f32 %v3124, %v3304
          %v3306 = vpop.f32.mrb[0].mxu0
          %v3307 = vpop.f32.mrb[0].mxu0
          %v3308 = vadd.f32 %v3124, %v3307
          %v3309 = vpop.f32.mrb[0].mxu0
          %3310 = vmatprep.mubr.bf16.mxu0 %v3070
          %3311 = vmatmul.mubr.bf16.gmra.mrb[0].mxu0 %v3069
          %v3312 = vpop.f32.mrb[0].mxu0
          %v3313 = vadd.f32 %v3124, %v3312
          %v3314 = vpop.f32.mrb[0].mxu0
          %v3315 = vpop.f32.mrb[0].mxu0
          %v3316 = vadd.f32 %v3124, %v3315
          %v3317 = vpop.f32.mrb[0].mxu0
          %3318 = vmatprep.mubr.bf16.mxu0 %v3072
          %3319 = vmatmul.mubr.bf16.gmra.mrb[0].mxu0 %v3071
          %v3320 = vpop.f32.mrb[0].mxu0
          %v3321 = vadd.f32 %v3124, %v3320
          %v3322 = vpop.f32.mrb[0].mxu0
          %v3323 = vpop.f32.mrb[0].mxu0
          %v3324 = vadd.f32 %v3124, %v3323
          %v3325 = vpop.f32.mrb[0].mxu0
          %3326 = vmatprep.mubr.bf16.mxu0 %v3074
          %3327 = vmatmul.mubr.bf16.gmra.mrb[0].mxu0 %v3073
          %v3328 = vpop.f32.mrb[0].mxu0
          %v3329 = vadd.f32 %v3124, %v3328
          %v3330 = vpop.f32.mrb[0].mxu0
          %v3331 = vpop.f32.mrb[0].mxu0
          %v3332 = vadd.f32 %v3124, %v3331
          %v3333 = vpop.f32.mrb[0].mxu0
          %3334 = vmatprep.mubr.bf16.mxu0 %v3076
          %3335 = vmatmul.mubr.bf16.gmra.mrb[0].mxu0 %v3075
          %v3336 = vpop.f32.mrb[0].mxu0
          %v3337 = vadd.f32 %v3124, %v3336
          %v3338 = vpop.f32.mrb[0].mxu0
          %v3339 = vpop.f32.mrb[0].mxu0
          %v3340 = vadd.f32 %v3124, %v3339
          %v3341 = vpop.f32.mrb[0].mxu0
          %3342 = vmatprep.mubr.bf16.mxu0 %v3078
          %3343 = vmatmul.mubr.bf16.gmra.mrb[0].mxu0 %v3077
          %v3344 = vpop.f32.mrb[0].mxu0
          %v3345 = vadd.f32 %v3124, %v3344
          %v3346 = vpop.f32.mrb[0].mxu0
          %v3347 = vpop.f32.mrb[0].mxu0
          %v3348 = vadd.f32 %v3124, %v3347
          %v3349 = vpop.f32.mrb[0].mxu0
          %3350 = vmatprep.mubr.bf16.mxu0 %v3080
          %3351 = vmatmul.mubr.bf16.gmra.mrb[0].mxu0 %v3079
          %v3352 = vpop.f32.mrb[0].mxu0
          %v3353 = vadd.f32 %v3124, %v3352
          %v3354 = vpop.f32.mrb[0].mxu0
          %v3355 = vpop.f32.mrb[0].mxu0
          %v3356 = vadd.f32 %v3124, %v3355
          %v3357 = vpop.f32.mrb[0].mxu0
          %3358 = vmatprep.mubr.bf16.mxu0 %v3082
          %3359 = vmatmul.mubr.bf16.gmra.mrb[0].mxu0 %v3081
          %v3360 = vpop.f32.mrb[0].mxu0
          %v3361 = vadd.f32 %v3124, %v3360
          %v3362 = vpop.f32.mrb[0].mxu0
          %v3363 = vpop.f32.mrb[0].mxu0
          %v3364 = vadd.f32 %v3124, %v3363
          %v3365 = vpop.f32.mrb[0].mxu0
          %3366 = vmatprep.mubr.bf16.mxu0 %v3084
          %3367 = vmatmul.mubr.bf16.gmra.mrb[0].mxu0 %v3083
          %v3368 = vpop.f32.mrb[0].mxu0
          %v3369 = vadd.f32 %v3124, %v3368
          %v3370 = vpop.f32.mrb[0].mxu0
          %v3371 = vpop.f32.mrb[0].mxu0
          %v3372 = vadd.f32 %v3124, %v3371
          %v3373 = vpop.f32.mrb[0].mxu0
          %3374 = vmatprep.mubr.bf16.mxu0 %v3086
          %3375 = vmatmul.mubr.bf16.gmra.mrb[0].mxu0 %v3085
          %v3376 = vpop.f32.mrb[0].mxu0
          %v3377 = vadd.f32 %v3124, %v3376
          %v3378 = vpop.f32.mrb[0].mxu0
          %v3379 = vpop.f32.mrb[0].mxu0
          %v3380 = vadd.f32 %v3124, %v3379
          %v3381 = vpop.f32.mrb[0].mxu0
          %3382 = vdwg.mxu0
          %v3383 = vmax.f32 %v3257, 0.0
          %v3384 = vmax.f32 %v3260, 0.0
          %v3385 = vmax.f32 %v3265, 0.0
          %v3386 = vmax.f32 %v3268, 0.0
          %v3387 = vmax.f32 %v3273, 0.0
          %v3388 = vmax.f32 %v3276, 0.0
          %v3389 = vmax.f32 %v3281, 0.0
          %v3390 = vmax.f32 %v3284, 0.0
          %v3391 = vmax.f32 %v3289, 0.0
          %v3392 = vmax.f32 %v3292, 0.0
          %v3393 = vmax.f32 %v3297, 0.0
          %v3394 = vmax.f32 %v3300, 0.0
          %v3395 = vmax.f32 %v3305, 0.0
          %v3396 = vmax.f32 %v3308, 0.0
          %v3397 = vmax.f32 %v3313, 0.0
          %v3398 = vmax.f32 %v3316, 0.0
          %v3399 = vmax.f32 %v3321, 0.0
          %v3400 = vmax.f32 %v3324, 0.0
          %v3401 = vmax.f32 %v3329, 0.0
          %v3402 = vmax.f32 %v3332, 0.0
          %v3403 = vmax.f32 %v3337, 0.0
          %v3404 = vmax.f32 %v3340, 0.0
          %v3405 = vmax.f32 %v3345, 0.0
          %v3406 = vmax.f32 %v3348, 0.0
          %v3407 = vmax.f32 %v3353, 0.0
          %v3408 = vmax.f32 %v3356, 0.0
          %v3409 = vmax.f32 %v3361, 0.0
          %v3410 = vmax.f32 %v3364, 0.0
          %v3411 = vmax.f32 %v3369, 0.0
          %v3412 = vmax.f32 %v3372, 0.0
          %v3413 = vmax.f32 %v3377, 0.0
          %v3414 = vmax.f32 %v3380, 0.0
          %v3415 = vpack.c.bf16 %v3384, %v3383
          %v3416 = vpack.c.bf16 %v3386, %v3385
          %v3417 = vpack.c.bf16 %v3388, %v3387
          %v3418 = vpack.c.bf16 %v3390, %v3389
          %v3419 = vpack.c.bf16 %v3392, %v3391
          %v3420 = vpack.c.bf16 %v3394, %v3393
          %v3421 = vpack.c.bf16 %v3396, %v3395
          %v3422 = vpack.c.bf16 %v3398, %v3397
          %v3423 = vpack.c.bf16 %v3400, %v3399
          %v3424 = vpack.c.bf16 %v3402, %v3401
          %v3425 = vpack.c.bf16 %v3404, %v3403
          %v3426 = vpack.c.bf16 %v3406, %v3405
          %v3427 = vpack.c.bf16 %v3408, %v3407
          %v3428 = vpack.c.bf16 %v3410, %v3409
          %v3429 = vpack.c.bf16 %v3412, %v3411
          %v3430 = vpack.c.bf16 %v3414, %v3413
          %v3431 = vld [vmem:[#allocation11] sm:$0xf]
          %v3432 = vld [vmem:[#allocation11 + $0x4] sm:$0xf]
          %v3433 = vld [vmem:[#allocation11 + $0x8] sm:$0xf]
          %v3434 = vld [vmem:[#allocation11 + $0xc] sm:$0xf]
          %v3435 = vld [vmem:[#allocation11 + $0x10] sm:$0xf]
          %v3436 = vld [vmem:[#allocation11 + $0x14] sm:$0xf]
          %v3437 = vld [vmem:[#allocation11 + $0x18] sm:$0xf]
          %v3438 = vld [vmem:[#allocation11 + $0x1c] sm:$0xf]
          %v3439 = vld [vmem:[#allocation11 + $0x20] sm:$0xf]
          %v3440 = vld [vmem:[#allocation11 + $0x24] sm:$0xf]
          %v3441 = vld [vmem:[#allocation11 + $0x28] sm:$0xf]
          %v3442 = vld [vmem:[#allocation11 + $0x2c] sm:$0xf]
          %v3443 = vld [vmem:[#allocation11 + $0x30] sm:$0xf]
          %v3444 = vld [vmem:[#allocation11 + $0x34] sm:$0xf]
          %v3445 = vld [vmem:[#allocation11 + $0x38] sm:$0xf]
          %v3446 = vld [vmem:[#allocation11 + $0x3c] sm:$0xf]
          %v3447 = vld [vmem:[%s8] sm:$0x1]
          %v3449 = vlaneseq
          %v3450 = vshrl.u32 %v3449, 7
          %v3451 = vsub.s32 0, %v3450
          %v3452 = vrot.slane %v3447, %v3451
          %v3470 = vunpack.c.l.b16 %v3431
          %v3471 = vunpack.c.l.b16 %v3432
          %v3472 = vunpack.c.l.b16 %v3433
          %v3473 = vunpack.c.l.b16 %v3434
          %v3474 = vunpack.c.l.b16 %v3435
          %v3475 = vunpack.c.l.b16 %v3436
          %v3476 = vunpack.c.l.b16 %v3437
          %v3477 = vunpack.c.l.b16 %v3438
          %v3478 = vunpack.c.l.b16 %v3439
          %v3479 = vunpack.c.l.b16 %v3440
          %v3480 = vunpack.c.l.b16 %v3441
          %v3481 = vunpack.c.l.b16 %v3442
          %v3482 = vunpack.c.l.b16 %v3443
          %v3483 = vunpack.c.l.b16 %v3444
          %v3484 = vunpack.c.l.b16 %v3445
          %v3485 = vunpack.c.l.b16 %v3446
          %v3486 = vpack.c.b16 %v3471, %v3470
          %v3487 = vpack.c.b16 %v3473, %v3472
          %v3488 = vpack.c.b16 %v3475, %v3474
          %v3489 = vpack.c.b16 %v3477, %v3476
          %v3490 = vpack.c.b16 %v3479, %v3478
          %v3491 = vpack.c.b16 %v3481, %v3480
          %v3492 = vpack.c.b16 %v3483, %v3482
          %v3493 = vpack.c.b16 %v3485, %v3484
          %3502 = vmatprep.subr.bf16.mxu0 0
          %3503 = vmatpush1.bf16.msra.mxu0 %v3486
          %3504 = vmatprep.subr.bf16.mxu0 0
          %3505 = vmatpush1.bf16.msra.mxu0 %v3487
          %3506 = vmatprep.subr.bf16.mxu0 0
          %3507 = vmatpush1.bf16.msra.mxu0 %v3488
          %3508 = vmatprep.subr.bf16.mxu0 0
          %3509 = vmatpush1.bf16.msra.mxu0 %v3489
          %3510 = vmatprep.subr.bf16.mxu0 0
          %3511 = vmatpush1.bf16.msra.mxu0 %v3490
          %3512 = vmatprep.subr.bf16.mxu0 0
          %3513 = vmatpush1.bf16.msra.mxu0 %v3491
          %3514 = vmatprep.subr.bf16.mxu0 0
          %3515 = vmatpush1.bf16.msra.mxu0 %v3492
          %3516 = vmatprep.subr.bf16.mxu0 0
          %3517 = vmatpush1.bf16.msra.mxu0 %v3493
          %3518 = vmatprep.subr.bf16.mxu0 0
          %3519 = vmatpush1.bf16.msra.mxu0 0
          %3520 = vmatprep.subr.bf16.mxu0 0
          %3521 = vmatpush1.bf16.msra.mxu0 0
          %3522 = vmatprep.subr.bf16.mxu0 0
          %3523 = vmatpush1.bf16.msra.mxu0 0
          %3524 = vmatprep.subr.bf16.mxu0 0
          %3525 = vmatpush1.bf16.msra.mxu0 0
          %3526 = vmatprep.subr.bf16.mxu0 0
          %3527 = vmatpush1.bf16.msra.mxu0 0
          %3528 = vmatprep.subr.bf16.mxu0 0
          %3529 = vmatpush1.bf16.msra.mxu0 0
          %3530 = vmatprep.subr.bf16.mxu0 0
          %3531 = vmatpush1.bf16.msra.mxu0 0
          %3532 = vmatprep.subr.bf16.mxu0 0
          %3533 = vmatpush1.bf16.msra.mxu0 0
          %3534 = vmatprep.mubr.bf16.mxu0 0
          %3535 = vmatmul.mubr.bf16.gmra.mrb[0].mxu0 %v3415
          %v3536 = vpop.f32.mrb[0].mxu0
          %v3537 = vadd.f32 %v3452, %v3536
          %v3538 = vpop.f32.mrb[0].mxu0
          %v3539 = vpop.f32.mrb[0].mxu0
          %v3540 = vadd.f32 %v3452, %v3539
          %v3541 = vpop.f32.mrb[0].mxu0
          %3542 = vmatprep.mubr.bf16.mxu0 0
          %3543 = vmatmul.mubr.bf16.gmra.mrb[0].mxu0 %v3416
          %v3544 = vpop.f32.mrb[0].mxu0
          %v3545 = vadd.f32 %v3452, %v3544
          %v3546 = vpop.f32.mrb[0].mxu0
          %v3547 = vpop.f32.mrb[0].mxu0
          %v3548 = vadd.f32 %v3452, %v3547
          %v3549 = vpop.f32.mrb[0].mxu0
          %3550 = vmatprep.mubr.bf16.mxu0 0
          %3551 = vmatmul.mubr.bf16.gmra.mrb[0].mxu0 %v3417
          %v3552 = vpop.f32.mrb[0].mxu0
          %v3553 = vadd.f32 %v3452, %v3552
          %v3554 = vpop.f32.mrb[0].mxu0
          %v3555 = vpop.f32.mrb[0].mxu0
          %v3556 = vadd.f32 %v3452, %v3555
          %v3557 = vpop.f32.mrb[0].mxu0
          %3558 = vmatprep.mubr.bf16.mxu0 0
          %3559 = vmatmul.mubr.bf16.gmra.mrb[0].mxu0 %v3418
          %v3560 = vpop.f32.mrb[0].mxu0
          %v3561 = vadd.f32 %v3452, %v3560
          %v3562 = vpop.f32.mrb[0].mxu0
          %v3563 = vpop.f32.mrb[0].mxu0
          %v3564 = vadd.f32 %v3452, %v3563
          %v3565 = vpop.f32.mrb[0].mxu0
          %3566 = vmatprep.mubr.bf16.mxu0 0
          %3567 = vmatmul.mubr.bf16.gmra.mrb[0].mxu0 %v3419
          %v3568 = vpop.f32.mrb[0].mxu0
          %v3569 = vadd.f32 %v3452, %v3568
          %v3570 = vpop.f32.mrb[0].mxu0
          %v3571 = vpop.f32.mrb[0].mxu0
          %v3572 = vadd.f32 %v3452, %v3571
          %v3573 = vpop.f32.mrb[0].mxu0
          %3574 = vmatprep.mubr.bf16.mxu0 0
          %3575 = vmatmul.mubr.bf16.gmra.mrb[0].mxu0 %v3420
          %v3576 = vpop.f32.mrb[0].mxu0
          %v3577 = vadd.f32 %v3452, %v3576
          %v3578 = vpop.f32.mrb[0].mxu0
          %v3579 = vpop.f32.mrb[0].mxu0
          %v3580 = vadd.f32 %v3452, %v3579
          %v3581 = vpop.f32.mrb[0].mxu0
          %3582 = vmatprep.mubr.bf16.mxu0 0
          %3583 = vmatmul.mubr.bf16.gmra.mrb[0].mxu0 %v3421
          %v3584 = vpop.f32.mrb[0].mxu0
          %v3585 = vadd.f32 %v3452, %v3584
          %v3586 = vpop.f32.mrb[0].mxu0
          %v3587 = vpop.f32.mrb[0].mxu0
          %v3588 = vadd.f32 %v3452, %v3587
          %v3589 = vpop.f32.mrb[0].mxu0
          %3590 = vmatprep.mubr.bf16.mxu0 0
          %3591 = vmatmul.mubr.bf16.gmra.mrb[0].mxu0 %v3422
          %v3592 = vpop.f32.mrb[0].mxu0
          %v3593 = vadd.f32 %v3452, %v3592
          %v3594 = vpop.f32.mrb[0].mxu0
          %v3595 = vpop.f32.mrb[0].mxu0
          %v3596 = vadd.f32 %v3452, %v3595
          %v3597 = vpop.f32.mrb[0].mxu0
          %3598 = vmatprep.mubr.bf16.mxu0 0
          %3599 = vmatmul.mubr.bf16.gmra.mrb[0].mxu0 %v3423
          %v3600 = vpop.f32.mrb[0].mxu0
          %v3601 = vadd.f32 %v3452, %v3600
          %v3602 = vpop.f32.mrb[0].mxu0
          %v3603 = vpop.f32.mrb[0].mxu0
          %v3604 = vadd.f32 %v3452, %v3603
          %v3605 = vpop.f32.mrb[0].mxu0
          %3606 = vmatprep.mubr.bf16.mxu0 0
          %3607 = vmatmul.mubr.bf16.gmra.mrb[0].mxu0 %v3424
          %v3608 = vpop.f32.mrb[0].mxu0
          %v3609 = vadd.f32 %v3452, %v3608
          %v3610 = vpop.f32.mrb[0].mxu0
          %v3611 = vpop.f32.mrb[0].mxu0
          %v3612 = vadd.f32 %v3452, %v3611
          %v3613 = vpop.f32.mrb[0].mxu0
          %3614 = vmatprep.mubr.bf16.mxu0 0
          %3615 = vmatmul.mubr.bf16.gmra.mrb[0].mxu0 %v3425
          %v3616 = vpop.f32.mrb[0].mxu0
          %v3617 = vadd.f32 %v3452, %v3616
          %v3618 = vpop.f32.mrb[0].mxu0
          %v3619 = vpop.f32.mrb[0].mxu0
          %v3620 = vadd.f32 %v3452, %v3619
          %v3621 = vpop.f32.mrb[0].mxu0
          %3622 = vmatprep.mubr.bf16.mxu0 0
          %3623 = vmatmul.mubr.bf16.gmra.mrb[0].mxu0 %v3426
          %v3624 = vpop.f32.mrb[0].mxu0
          %v3625 = vadd.f32 %v3452, %v3624
          %v3626 = vpop.f32.mrb[0].mxu0
          %v3627 = vpop.f32.mrb[0].mxu0
          %v3628 = vadd.f32 %v3452, %v3627
          %v3629 = vpop.f32.mrb[0].mxu0
          %3630 = vmatprep.mubr.bf16.mxu0 0
          %3631 = vmatmul.mubr.bf16.gmra.mrb[0].mxu0 %v3427
          %v3632 = vpop.f32.mrb[0].mxu0
          %v3633 = vadd.f32 %v3452, %v3632
          %v3634 = vpop.f32.mrb[0].mxu0
          %v3635 = vpop.f32.mrb[0].mxu0
          %v3636 = vadd.f32 %v3452, %v3635
          %v3637 = vpop.f32.mrb[0].mxu0
          %3638 = vmatprep.mubr.bf16.mxu0 0
          %3639 = vmatmul.mubr.bf16.gmra.mrb[0].mxu0 %v3428
          %v3640 = vpop.f32.mrb[0].mxu0
          %v3641 = vadd.f32 %v3452, %v3640
          %v3642 = vpop.f32.mrb[0].mxu0
          %v3643 = vpop.f32.mrb[0].mxu0
          %v3644 = vadd.f32 %v3452, %v3643
          %v3645 = vpop.f32.mrb[0].mxu0
          %3646 = vmatprep.mubr.bf16.mxu0 0
          %3647 = vmatmul.mubr.bf16.gmra.mrb[0].mxu0 %v3429
          %v3648 = vpop.f32.mrb[0].mxu0
          %v3649 = vadd.f32 %v3452, %v3648
          %v3650 = vpop.f32.mrb[0].mxu0
          %v3651 = vpop.f32.mrb[0].mxu0
          %v3652 = vadd.f32 %v3452, %v3651
          %v3653 = vpop.f32.mrb[0].mxu0
          %3654 = vmatprep.mubr.bf16.mxu0 0
          %3655 = vmatmul.mubr.bf16.gmra.mrb[0].mxu0 %v3430
          %v3656 = vpop.f32.mrb[0].mxu0
          %v3657 = vadd.f32 %v3452, %v3656
          %v3658 = vpop.f32.mrb[0].mxu0
          %v3659 = vpop.f32.mrb[0].mxu0
          %v3660 = vadd.f32 %v3452, %v3659
          %v3661 = vpop.f32.mrb[0].mxu0
          %3662 = vdwg.mxu0
          %v3663 = vmax.f32 %v3537, 0.0
          %v3664 = vmax.f32 %v3540, 0.0
          %v3665 = vmax.f32 %v3545, 0.0
          %v3666 = vmax.f32 %v3548, 0.0
          %v3667 = vmax.f32 %v3553, 0.0
          %v3668 = vmax.f32 %v3556, 0.0
          %v3669 = vmax.f32 %v3561, 0.0
          %v3670 = vmax.f32 %v3564, 0.0
          %v3671 = vmax.f32 %v3569, 0.0
          %v3672 = vmax.f32 %v3572, 0.0
          %v3673 = vmax.f32 %v3577, 0.0
          %v3674 = vmax.f32 %v3580, 0.0
          %v3675 = vmax.f32 %v3585, 0.0
          %v3676 = vmax.f32 %v3588, 0.0
          %v3677 = vmax.f32 %v3593, 0.0
          %v3678 = vmax.f32 %v3596, 0.0
          %v3679 = vmax.f32 %v3601, 0.0
          %v3680 = vmax.f32 %v3604, 0.0
          %v3681 = vmax.f32 %v3609, 0.0
          %v3682 = vmax.f32 %v3612, 0.0
          %v3683 = vmax.f32 %v3617, 0.0
          %v3684 = vmax.f32 %v3620, 0.0
          %v3685 = vmax.f32 %v3625, 0.0
          %v3686 = vmax.f32 %v3628, 0.0
          %v3687 = vmax.f32 %v3633, 0.0
          %v3688 = vmax.f32 %v3636, 0.0
          %v3689 = vmax.f32 %v3641, 0.0
          %v3690 = vmax.f32 %v3644, 0.0
          %v3691 = vmax.f32 %v3649, 0.0
          %v3692 = vmax.f32 %v3652, 0.0
          %v3693 = vmax.f32 %v3657, 0.0
          %v3694 = vmax.f32 %v3660, 0.0
          %v3695 = vpack.c.bf16 %v3664, %v3663
          %v3696 = vpack.c.bf16 %v3666, %v3665
          %v3697 = vpack.c.bf16 %v3668, %v3667
          %v3698 = vpack.c.bf16 %v3670, %v3669
          %v3699 = vpack.c.bf16 %v3672, %v3671
          %v3700 = vpack.c.bf16 %v3674, %v3673
          %v3701 = vpack.c.bf16 %v3676, %v3675
          %v3702 = vpack.c.bf16 %v3678, %v3677
          %v3703 = vpack.c.bf16 %v3680, %v3679
          %v3704 = vpack.c.bf16 %v3682, %v3681
          %v3705 = vpack.c.bf16 %v3684, %v3683
          %v3706 = vpack.c.bf16 %v3686, %v3685
          %v3707 = vpack.c.bf16 %v3688, %v3687
          %v3708 = vpack.c.bf16 %v3690, %v3689
          %v3709 = vpack.c.bf16 %v3692, %v3691
          %v3710 = vpack.c.bf16 %v3694, %v3693
          %v3711 = vunpack.c.l.bf16 %v3695
          %v3712 = vunpack.c.h.bf16 %v3695
          %v3713 = vunpack.c.l.bf16 %v3696
          %v3714 = vunpack.c.h.bf16 %v3696
          %v3715 = vunpack.c.l.bf16 %v3697
          %v3716 = vunpack.c.h.bf16 %v3697
          %v3717 = vunpack.c.l.bf16 %v3698
          %v3718 = vunpack.c.h.bf16 %v3698
          %v3719 = vunpack.c.l.bf16 %v3699
          %v3720 = vunpack.c.h.bf16 %v3699
          %v3721 = vunpack.c.l.bf16 %v3700
          %v3722 = vunpack.c.h.bf16 %v3700
          %v3723 = vunpack.c.l.bf16 %v3701
          %v3724 = vunpack.c.h.bf16 %v3701
          %v3725 = vunpack.c.l.bf16 %v3702
          %v3726 = vunpack.c.h.bf16 %v3702
          %v3727 = vunpack.c.l.bf16 %v3703
          %v3728 = vunpack.c.h.bf16 %v3703
          %v3729 = vunpack.c.l.bf16 %v3704
          %v3730 = vunpack.c.h.bf16 %v3704
          %v3731 = vunpack.c.l.bf16 %v3705
          %v3732 = vunpack.c.h.bf16 %v3705
          %v3733 = vunpack.c.l.bf16 %v3706
          %v3734 = vunpack.c.h.bf16 %v3706
          %v3735 = vunpack.c.l.bf16 %v3707
          %v3736 = vunpack.c.h.bf16 %v3707
          %v3737 = vunpack.c.l.bf16 %v3708
          %v3738 = vunpack.c.h.bf16 %v3708
          %v3739 = vunpack.c.l.bf16 %v3709
          %v3740 = vunpack.c.h.bf16 %v3709
          %v3741 = vunpack.c.l.bf16 %v3710
          %v3742 = vunpack.c.h.bf16 %v3710
          %v3743 = vld [vmem:[%s9] sm:$0x1]
          %v3744 = vunpack.c.l.bf16 %v3743
          %v3745 = vlaneseq
          %v3746 = vshrl.u32 %v3745, 7
          %v3747 = vsub.s32 0, %v3746
          %v3748 = vrot.slane %v3744, %v3747
          %v3749 = vmul.f32 %v3711, %v3748
          %v3750 = vmul.f32 %v3712, %v3748
          %v3751 = vmul.f32 %v3713, %v3748
          %v3752 = vmul.f32 %v3714, %v3748
          %v3753 = vmul.f32 %v3715, %v3748
          %v3754 = vmul.f32 %v3716, %v3748
          %v3755 = vmul.f32 %v3717, %v3748
          %v3756 = vmul.f32 %v3718, %v3748
          %v3757 = vmul.f32 %v3719, %v3748
          %v3758 = vmul.f32 %v3720, %v3748
          %v3759 = vmul.f32 %v3721, %v3748
          %v3760 = vmul.f32 %v3722, %v3748
          %v3761 = vmul.f32 %v3723, %v3748
          %v3762 = vmul.f32 %v3724, %v3748
          %v3763 = vmul.f32 %v3725, %v3748
          %v3764 = vmul.f32 %v3726, %v3748
          %v3765 = vmul.f32 %v3727, %v3748
          %v3766 = vmul.f32 %v3728, %v3748
          %v3767 = vmul.f32 %v3729, %v3748
          %v3768 = vmul.f32 %v3730, %v3748
          %v3769 = vmul.f32 %v3731, %v3748
          %v3770 = vmul.f32 %v3732, %v3748
          %v3771 = vmul.f32 %v3733, %v3748
          %v3772 = vmul.f32 %v3734, %v3748
          %v3773 = vmul.f32 %v3735, %v3748
          %v3774 = vmul.f32 %v3736, %v3748
          %v3775 = vmul.f32 %v3737, %v3748
          %v3776 = vmul.f32 %v3738, %v3748
          %v3777 = vmul.f32 %v3739, %v3748
          %v3778 = vmul.f32 %v3740, %v3748
          %v3779 = vmul.f32 %v3741, %v3748
          %v3780 = vmul.f32 %v3742, %v3748
          %3781 = vadd.xlane.f32.xlu0 %v3749
          %v3782 = vpop.xlane.xlu0 %3781
          %3783 = vadd.xlane.f32.xlu0 %v3750
          %v3784 = vpop.xlane.xlu0 %3783
          %3785 = vadd.xlane.f32.xlu0 %v3751
          %v3786 = vpop.xlane.xlu0 %3785
          %3787 = vadd.xlane.f32.xlu0 %v3752
          %v3788 = vpop.xlane.xlu0 %3787
          %3789 = vadd.xlane.f32.xlu0 %v3753
          %v3790 = vpop.xlane.xlu0 %3789
          %3791 = vadd.xlane.f32.xlu0 %v3754
          %v3792 = vpop.xlane.xlu0 %3791
          %3793 = vadd.xlane.f32.xlu0 %v3755
          %v3794 = vpop.xlane.xlu0 %3793
          %3795 = vadd.xlane.f32.xlu0 %v3756
          %v3796 = vpop.xlane.xlu0 %3795
          %3797 = vadd.xlane.f32.xlu0 %v3757
          %v3798 = vpop.xlane.xlu0 %3797
          %3799 = vadd.xlane.f32.xlu0 %v3758
          %v3800 = vpop.xlane.xlu0 %3799
          %3801 = vadd.xlane.f32.xlu0 %v3759
          %v3802 = vpop.xlane.xlu0 %3801
          %3803 = vadd.xlane.f32.xlu0 %v3760
          %v3804 = vpop.xlane.xlu0 %3803
          %3805 = vadd.xlane.f32.xlu0 %v3761
          %v3806 = vpop.xlane.xlu0 %3805
          %3807 = vadd.xlane.f32.xlu0 %v3762
          %v3808 = vpop.xlane.xlu0 %3807
          %3809 = vadd.xlane.f32.xlu0 %v3763
          %v3810 = vpop.xlane.xlu0 %3809
          %3811 = vadd.xlane.f32.xlu0 %v3764
          %v3812 = vpop.xlane.xlu0 %3811
          %3813 = vadd.xlane.f32.xlu0 %v3765
          %v3814 = vpop.xlane.xlu0 %3813
          %3815 = vadd.xlane.f32.xlu0 %v3766
          %v3816 = vpop.xlane.xlu0 %3815
          %3817 = vadd.xlane.f32.xlu0 %v3767
          %v3818 = vpop.xlane.xlu0 %3817
          %3819 = vadd.xlane.f32.xlu0 %v3768
          %v3820 = vpop.xlane.xlu0 %3819
          %3821 = vadd.xlane.f32.xlu0 %v3769
          %v3822 = vpop.xlane.xlu0 %3821
          %3823 = vadd.xlane.f32.xlu0 %v3770
          %v3824 = vpop.xlane.xlu0 %3823
          %3825 = vadd.xlane.f32.xlu0 %v3771
          %v3826 = vpop.xlane.xlu0 %3825
          %3827 = vadd.xlane.f32.xlu0 %v3772
          %v3828 = vpop.xlane.xlu0 %3827
          %3829 = vadd.xlane.f32.xlu0 %v3773
          %v3830 = vpop.xlane.xlu0 %3829
          %3831 = vadd.xlane.f32.xlu0 %v3774
          %v3832 = vpop.xlane.xlu0 %3831
          %3833 = vadd.xlane.f32.xlu0 %v3775
          %v3834 = vpop.xlane.xlu0 %3833
          %3835 = vadd.xlane.f32.xlu0 %v3776
          %v3836 = vpop.xlane.xlu0 %3835
          %3837 = vadd.xlane.f32.xlu0 %v3777
          %v3838 = vpop.xlane.xlu0 %3837
          %3839 = vadd.xlane.f32.xlu0 %v3778
          %v3840 = vpop.xlane.xlu0 %3839
          %3841 = vadd.xlane.f32.xlu0 %v3779
          %v3842 = vpop.xlane.xlu0 %3841
          %3843 = vadd.xlane.f32.xlu0 %v3780
          %v3844 = vpop.xlane.xlu0 %3843
          %v3845 = vld [vmem:[#allocation3] sm:$0x1]
          %v3847 = vlaneseq
          %v3848 = vshrl.u32 %v3847, 7
          %v3849 = vsub.s32 0, %v3848
          %v3850 = vrot.slane %v3845, %v3849
          %v3852 = vadd.f32 %v3782, %v3850
          %v3853 = vadd.f32 %v3784, %v3850
          %v3854 = vadd.f32 %v3786, %v3850
          %v3855 = vadd.f32 %v3788, %v3850
          %v3856 = vadd.f32 %v3790, %v3850
          %v3857 = vadd.f32 %v3792, %v3850
          %v3858 = vadd.f32 %v3794, %v3850
          %v3859 = vadd.f32 %v3796, %v3850
          %v3860 = vadd.f32 %v3798, %v3850
          %v3861 = vadd.f32 %v3800, %v3850
          %v3862 = vadd.f32 %v3802, %v3850
          %v3863 = vadd.f32 %v3804, %v3850
          %v3864 = vadd.f32 %v3806, %v3850
          %v3865 = vadd.f32 %v3808, %v3850
          %v3866 = vadd.f32 %v3810, %v3850
          %v3867 = vadd.f32 %v3812, %v3850
          %v3868 = vadd.f32 %v3814, %v3850
          %v3869 = vadd.f32 %v3816, %v3850
          %v3870 = vadd.f32 %v3818, %v3850
          %v3871 = vadd.f32 %v3820, %v3850
          %v3872 = vadd.f32 %v3822, %v3850
          %v3873 = vadd.f32 %v3824, %v3850
          %v3874 = vadd.f32 %v3826, %v3850
          %v3875 = vadd.f32 %v3828, %v3850
          %v3876 = vadd.f32 %v3830, %v3850
          %v3877 = vadd.f32 %v3832, %v3850
          %v3878 = vadd.f32 %v3834, %v3850
          %v3879 = vadd.f32 %v3836, %v3850
          %v3880 = vadd.f32 %v3838, %v3850
          %v3881 = vadd.f32 %v3840, %v3850
          %v3882 = vadd.f32 %v3842, %v3850
          %v3883 = vadd.f32 %v3844, %v3850
          %v3884 = vxor.u32 %v3852, 2147483648
          %v3885 = vxor.u32 %v3853, 2147483648
          %v3886 = vxor.u32 %v3854, 2147483648
          %v3887 = vxor.u32 %v3855, 2147483648
          %v3888 = vxor.u32 %v3856, 2147483648
          %v3889 = vxor.u32 %v3857, 2147483648
          %v3890 = vxor.u32 %v3858, 2147483648
          %v3891 = vxor.u32 %v3859, 2147483648
          %v3892 = vxor.u32 %v3860, 2147483648
          %v3893 = vxor.u32 %v3861, 2147483648
          %v3894 = vxor.u32 %v3862, 2147483648
          %v3895 = vxor.u32 %v3863, 2147483648
          %v3896 = vxor.u32 %v3864, 2147483648
          %v3897 = vxor.u32 %v3865, 2147483648
          %v3898 = vxor.u32 %v3866, 2147483648
          %v3899 = vxor.u32 %v3867, 2147483648
          %v3900 = vxor.u32 %v3868, 2147483648
          %v3901 = vxor.u32 %v3869, 2147483648
          %v3902 = vxor.u32 %v3870, 2147483648
          %v3903 = vxor.u32 %v3871, 2147483648
          %v3904 = vxor.u32 %v3872, 2147483648
          %v3905 = vxor.u32 %v3873, 2147483648
          %v3906 = vxor.u32 %v3874, 2147483648
          %v3907 = vxor.u32 %v3875, 2147483648
          %v3908 = vxor.u32 %v3876, 2147483648
          %v3909 = vxor.u32 %v3877, 2147483648
          %v3910 = vxor.u32 %v3878, 2147483648
          %v3911 = vxor.u32 %v3879, 2147483648
          %v3912 = vxor.u32 %v3880, 2147483648
          %v3913 = vxor.u32 %v3881, 2147483648
          %v3914 = vxor.u32 %v3882, 2147483648
          %v3915 = vxor.u32 %v3883, 2147483648
          %v3916 = vmul.f32 %v3884, 1.442695
          %v3917 = vpow.pop %v3916
          %v3918 = vmul.f32 %v3885, 1.442695
          %v3919 = vpow.pop %v3918
          %v3920 = vmul.f32 %v3886, 1.442695
          %v3921 = vpow.pop %v3920
          %v3922 = vmul.f32 %v3887, 1.442695
          %v3923 = vpow.pop %v3922
          %v3924 = vmul.f32 %v3888, 1.442695
          %v3925 = vpow.pop %v3924
          %v3926 = vmul.f32 %v3889, 1.442695
          %v3927 = vpow.pop %v3926
          %v3928 = vmul.f32 %v3890, 1.442695
          %v3929 = vpow.pop %v3928
          %v3930 = vmul.f32 %v3891, 1.442695
          %v3931 = vpow.pop %v3930
          %v3932 = vmul.f32 %v3892, 1.442695
          %v3933 = vpow.pop %v3932
          %v3934 = vmul.f32 %v3893, 1.442695
          %v3935 = vpow.pop %v3934
          %v3936 = vmul.f32 %v3894, 1.442695
          %v3937 = vpow.pop %v3936
          %v3938 = vmul.f32 %v3895, 1.442695
          %v3939 = vpow.pop %v3938
          %v3940 = vmul.f32 %v3896, 1.442695
          %v3941 = vpow.pop %v3940
          %v3942 = vmul.f32 %v3897, 1.442695
          %v3943 = vpow.pop %v3942
          %v3944 = vmul.f32 %v3898, 1.442695
          %v3945 = vpow.pop %v3944
          %v3946 = vmul.f32 %v3899, 1.442695
          %v3947 = vpow.pop %v3946
          %v3948 = vmul.f32 %v3900, 1.442695
          %v3949 = vpow.pop %v3948
          %v3950 = vmul.f32 %v3901, 1.442695
          %v3951 = vpow.pop %v3950
          %v3952 = vmul.f32 %v3902, 1.442695
          %v3953 = vpow.pop %v3952
          %v3954 = vmul.f32 %v3903, 1.442695
          %v3955 = vpow.pop %v3954
          %v3956 = vmul.f32 %v3904, 1.442695
          %v3957 = vpow.pop %v3956
          %v3958 = vmul.f32 %v3905, 1.442695
          %v3959 = vpow.pop %v3958
          %v3960 = vmul.f32 %v3906, 1.442695
          %v3961 = vpow.pop %v3960
          %v3962 = vmul.f32 %v3907, 1.442695
          %v3963 = vpow.pop %v3962
          %v3964 = vmul.f32 %v3908, 1.442695
          %v3965 = vpow.pop %v3964
          %v3966 = vmul.f32 %v3909, 1.442695
          %v3967 = vpow.pop %v3966
          %v3968 = vmul.f32 %v3910, 1.442695
          %v3969 = vpow.pop %v3968
          %v3970 = vmul.f32 %v3911, 1.442695
          %v3971 = vpow.pop %v3970
          %v3972 = vmul.f32 %v3912, 1.442695
          %v3973 = vpow.pop %v3972
          %v3974 = vmul.f32 %v3913, 1.442695
          %v3975 = vpow.pop %v3974
          %v3976 = vmul.f32 %v3914, 1.442695
          %v3977 = vpow.pop %v3976
          %v3978 = vmul.f32 %v3915, 1.442695
          %v3979 = vpow.pop %v3978
          %v3980 = vadd.f32 %v3917, 1.0
          %v3981 = vadd.f32 %v3919, 1.0
          %v3982 = vadd.f32 %v3921, 1.0
          %v3983 = vadd.f32 %v3923, 1.0
          %v3984 = vadd.f32 %v3925, 1.0
          %v3985 = vadd.f32 %v3927, 1.0
          %v3986 = vadd.f32 %v3929, 1.0
          %v3987 = vadd.f32 %v3931, 1.0
          %v3988 = vadd.f32 %v3933, 1.0
          %v3989 = vadd.f32 %v3935, 1.0
          %v3990 = vadd.f32 %v3937, 1.0
          %v3991 = vadd.f32 %v3939, 1.0
          %v3992 = vadd.f32 %v3941, 1.0
          %v3993 = vadd.f32 %v3943, 1.0
          %v3994 = vadd.f32 %v3945, 1.0
          %v3995 = vadd.f32 %v3947, 1.0
          %v3996 = vadd.f32 %v3949, 1.0
          %v3997 = vadd.f32 %v3951, 1.0
          %v3998 = vadd.f32 %v3953, 1.0
          %v3999 = vadd.f32 %v3955, 1.0
          %v4000 = vadd.f32 %v3957, 1.0
          %v4001 = vadd.f32 %v3959, 1.0
          %v4002 = vadd.f32 %v3961, 1.0
          %v4003 = vadd.f32 %v3963, 1.0
          %v4004 = vadd.f32 %v3965, 1.0
          %v4005 = vadd.f32 %v3967, 1.0
          %v4006 = vadd.f32 %v3969, 1.0
          %v4007 = vadd.f32 %v3971, 1.0
          %v4008 = vadd.f32 %v3973, 1.0
          %v4009 = vadd.f32 %v3975, 1.0
          %v4010 = vadd.f32 %v3977, 1.0
          %v4011 = vadd.f32 %v3979, 1.0
          %v4012 = vrcp.pop %v3980
          %v4013 = vmul.f32 1.0, %v4012
          %v4014 = vrcp.pop %v3981
          %v4015 = vmul.f32 1.0, %v4014
          %v4016 = vrcp.pop %v3982
          %v4017 = vmul.f32 1.0, %v4016
          %v4018 = vrcp.pop %v3983
          %v4019 = vmul.f32 1.0, %v4018
          %v4020 = vrcp.pop %v3984
          %v4021 = vmul.f32 1.0, %v4020
          %v4022 = vrcp.pop %v3985
          %v4023 = vmul.f32 1.0, %v4022
          %v4024 = vrcp.pop %v3986
          %v4025 = vmul.f32 1.0, %v4024
          %v4026 = vrcp.pop %v3987
          %v4027 = vmul.f32 1.0, %v4026
          %v4028 = vrcp.pop %v3988
          %v4029 = vmul.f32 1.0, %v4028
          %v4030 = vrcp.pop %v3989
          %v4031 = vmul.f32 1.0, %v4030
          %v4032 = vrcp.pop %v3990
          %v4033 = vmul.f32 1.0, %v4032
          %v4034 = vrcp.pop %v3991
          %v4035 = vmul.f32 1.0, %v4034
          %v4036 = vrcp.pop %v3992
          %v4037 = vmul.f32 1.0, %v4036
          %v4038 = vrcp.pop %v3993
          %v4039 = vmul.f32 1.0, %v4038
          %v4040 = vrcp.pop %v3994
          %v4041 = vmul.f32 1.0, %v4040
          %v4042 = vrcp.pop %v3995
          %v4043 = vmul.f32 1.0, %v4042
          %v4044 = vrcp.pop %v3996
          %v4045 = vmul.f32 1.0, %v4044
          %v4046 = vrcp.pop %v3997
          %v4047 = vmul.f32 1.0, %v4046
          %v4048 = vrcp.pop %v3998
          %v4049 = vmul.f32 1.0, %v4048
          %v4050 = vrcp.pop %v3999
          %v4051 = vmul.f32 1.0, %v4050
          %v4052 = vrcp.pop %v4000
          %v4053 = vmul.f32 1.0, %v4052
          %v4054 = vrcp.pop %v4001
          %v4055 = vmul.f32 1.0, %v4054
          %v4056 = vrcp.pop %v4002
          %v4057 = vmul.f32 1.0, %v4056
          %v4058 = vrcp.pop %v4003
          %v4059 = vmul.f32 1.0, %v4058
          %v4060 = vrcp.pop %v4004
          %v4061 = vmul.f32 1.0, %v4060
          %v4062 = vrcp.pop %v4005
          %v4063 = vmul.f32 1.0, %v4062
          %v4064 = vrcp.pop %v4006
          %v4065 = vmul.f32 1.0, %v4064
          %v4066 = vrcp.pop %v4007
          %v4067 = vmul.f32 1.0, %v4066
          %v4068 = vrcp.pop %v4008
          %v4069 = vmul.f32 1.0, %v4068
          %v4070 = vrcp.pop %v4009
          %v4071 = vmul.f32 1.0, %v4070
          %v4072 = vrcp.pop %v4010
          %v4073 = vmul.f32 1.0, %v4072
          %v4074 = vrcp.pop %v4011
          %v4075 = vmul.f32 1.0, %v4074
          %vm4076 = vcmask 7168
          %4077 = vst.msk [vmem:[%s510] sm:$0xff] %vm4076, %v4013
          %4078 = vst.msk [vmem:[%s510 + $0x8] sm:$0xff] %vm4076, %v4015
          %4079 = vst.msk [vmem:[%s510 + $0x10] sm:$0xff] %vm4076, %v4017
          %4080 = vst.msk [vmem:[%s510 + $0x18] sm:$0xff] %vm4076, %v4019
          %4081 = vst.msk [vmem:[%s510 + $0x20] sm:$0xff] %vm4076, %v4021
          %4082 = vst.msk [vmem:[%s510 + $0x28] sm:$0xff] %vm4076, %v4023
          %4083 = vst.msk [vmem:[%s510 + $0x30] sm:$0xff] %vm4076, %v4025
          %4084 = vst.msk [vmem:[%s510 + $0x38] sm:$0xff] %vm4076, %v4027
          %4085 = vst.msk [vmem:[%s510 + $0x40] sm:$0xff] %vm4076, %v4029
          %4086 = vst.msk [vmem:[%s510 + $0x48] sm:$0xff] %vm4076, %v4031
          %4087 = vst.msk [vmem:[%s510 + $0x50] sm:$0xff] %vm4076, %v4033
          %4088 = vst.msk [vmem:[%s510 + $0x58] sm:$0xff] %vm4076, %v4035
          %4089 = vst.msk [vmem:[%s510 + $0x60] sm:$0xff] %vm4076, %v4037
          %4090 = vst.msk [vmem:[%s510 + $0x68] sm:$0xff] %vm4076, %v4039
          %4091 = vst.msk [vmem:[%s510 + $0x70] sm:$0xff] %vm4076, %v4041
          %4092 = vst.msk [vmem:[%s510 + $0x78] sm:$0xff] %vm4076, %v4043
          %4093 = vst.msk [vmem:[%s510 + $0x80] sm:$0xff] %vm4076, %v4045
          %4094 = vst.msk [vmem:[%s510 + $0x88] sm:$0xff] %vm4076, %v4047
          %4095 = vst.msk [vmem:[%s510 + $0x90] sm:$0xff] %vm4076, %v4049
          %4096 = vst.msk [vmem:[%s510 + $0x98] sm:$0xff] %vm4076, %v4051
          %4097 = vst.msk [vmem:[%s510 + $0xa0] sm:$0xff] %vm4076, %v4053
          %4098 = vst.msk [vmem:[%s510 + $0xa8] sm:$0xff] %vm4076, %v4055
          %4099 = vst.msk [vmem:[%s510 + $0xb0] sm:$0xff] %vm4076, %v4057
          %4100 = vst.msk [vmem:[%s510 + $0xb8] sm:$0xff] %vm4076, %v4059
          %4101 = vst.msk [vmem:[%s510 + $0xc0] sm:$0xff] %vm4076, %v4061
          %4102 = vst.msk [vmem:[%s510 + $0xc8] sm:$0xff] %vm4076, %v4063
          %4103 = vst.msk [vmem:[%s510 + $0xd0] sm:$0xff] %vm4076, %v4065
          %4104 = vst.msk [vmem:[%s510 + $0xd8] sm:$0xff] %vm4076, %v4067
          %4105 = vst.msk [vmem:[%s510 + $0xe0] sm:$0xff] %vm4076, %v4069
          %4106 = vst.msk [vmem:[%s510 + $0xe8] sm:$0xff] %vm4076, %v4071
          %4107 = vst.msk [vmem:[%s510 + $0xf0] sm:$0xff] %vm4076, %v4073
          %4108 = vst.msk [vmem:[%s510 + $0xf8] sm:$0xff] %vm4076, %v4075
        $region92: #{tpu_custom_call.1} parent=63 // pred_fallthru
          _
        %s4109 = smul.u32 32, %s35
        %p4110 = scmp.lt.s32.totalorder %s4109, 63
        %s4111 = scalar_select %p4110, %s4109, 63
        %s4112 = smul.addr %s4111, 8
        %s4113 = scalar_lea.vmem %s11, %s4112
        // Predicated region
        $region93: #{tpu_custom_call.1} parent=63 // pred_check
          %p4114 = pneg %p304
        $region94: #{tpu_custom_call.1} parent=63 // pred_check_branch
          %4116 = sbr.rel (%p4114) target = $region96
        $region95: #{tpu_custom_call.1} parent=63 // pred_region
          %s4117 = smul.u32 32, %s35
        $region96: #{tpu_custom_call.1} parent=63 // pred_fallthru
          _
      $region64: #{tpu_custom_call.1} parent=5 // pred_fallthru
        _
      %p4118 = scmp.le.s32.totalorder 2, %s26
      // Predicated region
      $region97: #{tpu_custom_call.1} parent=5 // pred_check
        %p4119 = pneg %p4118
      $region98: #{tpu_custom_call.1} parent=5 // pred_check_branch
        %4121 = sbr.rel (%p4119) target = $region100
      $region99: #{tpu_custom_call.1} parent=5 // pred_region
        %s4122 = ssub.s32 %s26, 2
        // Predicated region
        $region101: #{tpu_custom_call.1} parent=99 // pred_check
          %p4123 = pneg %p310
        $region102: #{tpu_custom_call.1} parent=99 // pred_check_branch
          %4125 = sbr.rel (%p4123) target = $region104
        $region103: #{tpu_custom_call.1} parent=99 // pred_region
          %s4126 = smul.u32 32, %s37
          %p4127 = scmp.lt.s32.totalorder %s4126, 63
          %s4128 = scalar_select %p4127, %s4126, 63
          %s4129 = smul.addr %s4128, 8
          %s4130 = scalar_lea.vmem %s11, %s4129
        $region104: #{tpu_custom_call.1} parent=99 // pred_fallthru
          _
      $region100: #{tpu_custom_call.1} parent=5 // pred_fallthru
        _
    $region6: #{tpu_custom_call.1} parent=1 // loop_footer
      %s30 = sadd.s32 1, %s26
    $region7: #{tpu_custom_call.1} parent=1 // loop_footer_branch
      %25 = sbr.rel target = $region3
    $region8: #{tpu_custom_call.1} parent=1 // loop_exit
      _
    %4131 = vsyncpa [#allocation5], 1
    %s4132 = scalar_lea.sflag [#allocation5], 1
    %4133 = vsyncpa %s4132, 1
    %4134 = vsyncpa [#allocation7], 1
    %s4135 = scalar_lea.sflag [#allocation7], 1
    %4136 = vsyncpa %s4135, 1
    %4137 = vsyncpa [#allocation10], 1

</llo_original>
